<compile_context>
chip_gen: v7x
topology: tpu7x:2x2x1
jax: 0.10.0
libtpu: 0.0.40
codegen_flags: <defaults>
</compile_context>

<pallas_src>
import jax
import jax.numpy as jnp
from jax import lax
from jax.experimental import pallas as pl
from jax.experimental.pallas import tpu as pltpu

LN_EPS = 1e-12


def bert_embeddings(input_ids, input_length, input_imgs,
                    word_table, pos_table, type_table, gamma, beta,
                    *, token_tile=16):
    """Fused embeddings + image splice + LayerNorm.

    input_ids: (B, L_TEXT) int.  input_imgs: (B, L_IMG, H).
    word_table/pos_table/type_table: (V,H)/(P,H)/(T,H).  gamma/beta: (H,).
    input_length: Python int (see TODO on the original `input_lengths` tensor).
    Returns (B, S, H) with S = L_TEXT + L_IMG + 1.
    """
    B, L_TEXT = input_ids.shape
    L_IMG = input_imgs.shape[1]
    V, H = word_table.shape
    P = pos_table.shape[0]
    Tt = type_table.shape[0]
    S = L_TEXT + L_IMG + 1

    TQ = token_tile
    assert TQ % 8 == 0, "token tile must be a multiple of 8 (sublane granularity)"
    assert H % 128 == 0, "hidden size must be lane-dense (multiple of 128)"
    assert Tt >= 2, "type_vocab_size must be >= 2"
    assert S <= P, "extended sequence exceeds max_position_embeddings"
    S_pad = ((S + TQ - 1) // TQ) * TQ
    n_tiles = S_pad // TQ

    dtype = word_table.dtype
    input_imgs = input_imgs.astype(dtype)

    # ------------------- plain-JAX index bookkeeping (cheap glue) -------------------
    # TODO(synk): original `input_extended[:, input_ids.size(1)] = input_ids` is a shape bug;
    # implementing the evident intent `[:, :L_TEXT] = input_ids`.
    # TODO(synk): original `position_ids.expand_as(input_ids)` is also shape-inconsistent;
    # implementing the evident intent: positions 0..S-1 over the extended sequence.
    ids = jnp.zeros((B, S_pad), jnp.int32).at[:, :L_TEXT].set(input_ids.astype(jnp.int32))
    ids = ids.at[:, input_length + L_IMG].set(102)                      # [SEP]
    ids = jnp.clip(ids, 0, V - 1)
    ids_f = ids.reshape(B * S_pad)                                      # word row per token

    seq = jnp.arange(S_pad, dtype=jnp.int32)
    in_img = (seq >= input_length) & (seq < input_length + L_IMG) & (seq < S)
    isimg_f = jnp.tile(in_img.astype(jnp.int32), B)                     # 1 -> take image row
    rel = jnp.clip(seq - input_length, 0, L_IMG - 1)
    imgrow_f = (jnp.arange(B, dtype=jnp.int32)[:, None] * L_IMG
                + rel[None, :]).reshape(B * S_pad)                      # image row per token

    # position table padded so every (padded) position has a row
    pos_pad = pos_table if P >= S_pad else jnp.zeros((S_pad, H), dtype).at[:P].set(pos_table)
    imgs_flat = input_imgs.reshape(B * L_IMG, H)
    gamma2 = gamma.reshape(1, H).astype(dtype)
    beta2 = beta.reshape(1, H).astype(dtype)

    # ------------------- Pallas kernel: one (TQ, H) token tile per grid step -------------------
    def kernel(ids_sm, imgrow_sm, isimg_sm,               # SMEM scalar-prefetch
               pos_ref, type_ref, gamma_ref, beta_ref,    # VMEM tiles (auto-pipelined)
               word_hbm, imgs_hbm,                        # HBM (pl.ANY) tables
               out_ref,                                    # (TQ, H) output tile
               rows, sems):                                # scratch: gather buffer + DMA sems
        b = pl.program_id(0)
        j = pl.program_id(1)
        base = b * S_pad + j * TQ                          # flattened token offset of this tile

        # 1) issue one row DMA per token: image-feature row inside the image span,
        #    word-embedding row otherwise.  Tables never become VMEM-resident.
        for t in range(TQ):
            flag = isimg_sm[base + t]
            tok = ids_sm[base + t]
            imr = imgrow_sm[base + t]

            @pl.when(flag != 0)
            def _():
                pltpu.make_async_copy(imgs_hbm.at[pl.ds(imr, 1), :],
                                      rows.at[pl.ds(t, 1), :], sems.at[t]).start()

            @pl.when(flag == 0)
            def _():
                pltpu.make_async_copy(word_hbm.at[pl.ds(tok, 1), :],
                                      rows.at[pl.ds(t, 1), :], sems.at[t]).start()

        # 2) while the gather is in flight: position + token-type contribution.
        #    token_type == 1 exactly for positions >= input_length (module semantics),
        #    so it is a select between two resident rows of the tiny type table.
        s_idx = j * TQ + lax.broadcasted_iota(jnp.int32, (TQ, 1), 0)
        sel1 = (s_idx >= input_length).astype(dtype)
        tt = type_ref[0:1, :] + sel1 * (type_ref[1:2, :] - type_ref[0:1, :])
        rest = pos_ref[...] + tt                                        # (TQ, H)

        # 3) wait for all gathered rows (descriptor only needs the matching byte count)
        for t in range(TQ):
            pltpu.make_async_copy(word_hbm.at[pl.ds(0, 1), :],
                                  rows.at[pl.ds(t, 1), :], sems.at[t]).wait()

        x = rows[...] + rest                                            # (TQ, H)

        # 4) LayerNorm over H, single fused pass: var = E[x^2] - E[x]^2.
        inv_h = jnp.float32(1.0 / H)
        s1 = jnp.sum(x, axis=-1, keepdims=True)
        s2 = jnp.sum(x * x, axis=-1, keepdims=True)
        mu = s1 * inv_h
        var = jnp.maximum(s2 * inv_h - mu * mu, 0.0)
        y = (x - mu) * lax.rsqrt(var + LN_EPS)
        out_ref[...] = (y * gamma_ref[...] + beta_ref[...]).astype(out_ref.dtype)
        # Dropout is identity in eval mode (deterministic forward) -> no-op.

    grid_spec = pltpu.PrefetchScalarGridSpec(
        num_scalar_prefetch=3,
        grid=(B, n_tiles),
        in_specs=[
            pl.BlockSpec((TQ, H), lambda b, j, ids, im, fl: (j, 0)),    # position rows (consecutive)
            pl.BlockSpec((Tt, H), lambda b, j, ids, im, fl: (0, 0)),    # full (tiny) type table
            pl.BlockSpec((1, H), lambda b, j, ids, im, fl: (0, 0)),     # gamma
            pl.BlockSpec((1, H), lambda b, j, ids, im, fl: (0, 0)),     # beta
            pl.BlockSpec(memory_space=pl.ANY),                          # word table stays in HBM
            pl.BlockSpec(memory_space=pl.ANY),                          # image features stay in HBM
        ],
        out_specs=pl.BlockSpec((None, TQ, H), lambda b, j, ids, im, fl: (b, j, 0)),
        scratch_shapes=[pltpu.VMEM((TQ, H), dtype),
                        pltpu.SemaphoreType.DMA((TQ,))],
    )

    out = pl.pallas_call(
        kernel,
        out_shape=jax.ShapeDtypeStruct((B, S_pad, H), dtype),
        grid_spec=grid_spec,
        compiler_params=pltpu.CompilerParams(
            dimension_semantics=("parallel", "parallel")),
    )(ids_f, imgrow_f, isimg_f,
      pos_pad, type_table.astype(dtype), gamma2, beta2, word_table, imgs_flat)

    return out[:, :S, :]


if __name__ == "__main__":
    # -------- config (small, consistent with the module; H chosen lane-dense) --------
    B, L_TEXT, L_IMG = 2, 8, 4
    S = L_TEXT + L_IMG + 1          # seq_length = text + images + 1 (SEP slot)
    H = 128                         # hidden_size (multiple of 128 -> lane-dense output)
    V = 128                         # vocab_size  (> 102 so the SEP id is valid)
    P = 64                          # max_position_embeddings
    T = 2                           # type_vocab_size
    INPUT_LENGTH = 5                # TODO(synk): original takes a per-example tensor
                                    # `input_lengths` but uses it as a Python slice bound,
                                    # which is only well-defined for a scalar; treated as scalar.

    key = jax.random.PRNGKey(0)
    k_w, k_p, k_t, k_ids, k_img = jax.random.split(key, 5)

    # deterministic parameter init (nn.Embedding / BertLayerNorm shapes)
    word_table = 0.02 * jax.random.normal(k_w, (V, H), jnp.float32)
    pos_table = 0.02 * jax.random.normal(k_p, (P, H), jnp.float32)
    type_table = 0.02 * jax.random.normal(k_t, (T, H), jnp.float32)
    gamma = jnp.ones((H,), jnp.float32)
    beta = jnp.zeros((H,), jnp.float32)

    # example inputs
    input_ids = jax.random.randint(k_ids, (B, L_TEXT), 1, 100, jnp.int32)
    input_imgs = jax.random.normal(k_img, (B, L_IMG, H), jnp.float32)

    # -------- run the Pallas kernel --------
    out = bert_embeddings(input_ids, INPUT_LENGTH, input_imgs,
                          word_table, pos_table, type_table, gamma, beta)
    out = jax.block_until_ready(out)

    # -------- pure-JAX reference check --------
    ids_ref = jnp.zeros((B, S), jnp.int32).at[:, :L_TEXT].set(input_ids)
    ids_ref = ids_ref.at[:, INPUT_LENGTH + L_IMG].set(102)
    ttype = jnp.zeros((B, S), jnp.int32).at[:, INPUT_LENGTH:].set(1)
    img_mask = jnp.zeros((B, S), jnp.float32).at[:, INPUT_LENGTH:INPUT_LENGTH + L_IMG].set(1.0)
    imgs_padded = jnp.zeros((B, S, H), jnp.float32).at[:, INPUT_LENGTH:INPUT_LENGTH + L_IMG, :].set(input_imgs)

    words_ref = jnp.where(img_mask[..., None] > 0, imgs_padded, word_table[ids_ref])
    x_ref = words_ref + pos_table[:S][None] + type_table[ttype]
    mu = x_ref.mean(-1, keepdims=True)
    var = ((x_ref - mu) ** 2).mean(-1, keepdims=True)
    ref = (x_ref - mu) / jnp.sqrt(var + LN_EPS) * gamma + beta

    assert out.shape == (B, S, H)
    assert jnp.allclose(out, ref, atol=1e-4, rtol=1e-4), "kernel mismatch vs reference"
    print("KERNEL_OK")
</pallas_src>

<mosaic_0001>
module attributes {stable_mosaic.version = 11 : i64} {
  func.func @kernel(%arg0: i32, %arg1: i32, %arg2: memref<32xi32, #tpu.memory_space<smem>>, %arg3: memref<32xi32, #tpu.memory_space<smem>>, %arg4: memref<32xi32, #tpu.memory_space<smem>>, %arg5: memref<16x128xf32, #tpu.memory_space<vmem>>, %arg6: memref<2x128xf32, #tpu.memory_space<vmem>>, %arg7: memref<1x128xf32, #tpu.memory_space<vmem>>, %arg8: memref<1x128xf32, #tpu.memory_space<vmem>>, %arg9: memref<128x128xf32, #tpu.memory_space<any>>, %arg10: memref<8x128xf32, #tpu.memory_space<any>>, %arg11: memref<1x16x128xf32, #tpu.memory_space<vmem>>, %arg12: memref<16x128xf32, #tpu.memory_space<vmem>>, %arg13: memref<16x!tpu.dma_semaphore, #tpu.memory_space<semaphore_mem>>) attributes {dimension_semantics = [#tpu.dimension_semantics<parallel>, #tpu.dimension_semantics<parallel>], iteration_bounds = array<i64: 2, 1>, scalar_prefetch = 3 : i64, scratch_operands = 2 : i64, tpu.core_type = #tpu.core_type<tc>, window_params = [{transform_indices = @transform_0, window_bounds = array<i64: 16, 128>}, {pipeline_mode = #tpu.pipeline_mode<synchronous>, transform_indices = @transform_1, window_bounds = array<i64: 2, 128>}, {pipeline_mode = #tpu.pipeline_mode<synchronous>, transform_indices = @transform_2, window_bounds = array<i64: 1, 128>}, {pipeline_mode = #tpu.pipeline_mode<synchronous>, transform_indices = @transform_3, window_bounds = array<i64: 1, 128>}, {}, {}, {transform_indices = @transform_6, window_bounds = array<i64: 1, 16, 128>}]} {
    %c16_i32 = arith.constant 16 : i32
    %0 = arith.muli %arg0, %c16_i32 : i32
    %c16_i32_0 = arith.constant 16 : i32
    %1 = arith.muli %arg1, %c16_i32_0 : i32
    %2 = arith.addi %0, %1 : i32
    %c0_i32 = arith.constant 0 : i32
    %3 = arith.addi %2, %c0_i32 : i32
    %4 = arith.index_cast %3 : i32 to index
    %5 = memref.load %arg4[%4] : memref<32xi32, #tpu.memory_space<smem>>
    %c0_i32_1 = arith.constant 0 : i32
    %6 = arith.addi %2, %c0_i32_1 : i32
    %7 = arith.index_cast %6 : i32 to index
    %8 = memref.load %arg2[%7] : memref<32xi32, #tpu.memory_space<smem>>
    %c0_i32_2 = arith.constant 0 : i32
    %9 = arith.addi %2, %c0_i32_2 : i32
    %10 = arith.index_cast %9 : i32 to index
    %11 = memref.load %arg3[%10] : memref<32xi32, #tpu.memory_space<smem>>
    %c0_i32_3 = arith.constant 0 : i32
    %12 = arith.cmpi ne, %5, %c0_i32_3 : i32
    %13 = arith.extui %12 : i1 to i32
    %c0_i32_4 = arith.constant 0 : i32
    %14 = arith.cmpi ne, %13, %c0_i32_4 : i32
    scf.if %14 {
      %c0_i32_199 = arith.constant 0 : i32
      %c0_i32_200 = arith.constant 0 : i32
      %357 = tpu.memref_slice %arg10[%11, %c0_i32_200] : memref<8x128xf32, #tpu.memory_space<any>> -> memref<1x128xf32, #tpu.memory_space<any>>
      %c0_i32_201 = arith.constant 0 : i32
      %c0_i32_202 = arith.constant 0 : i32
      %358 = tpu.memref_slice %arg12[%c0_i32_201, %c0_i32_202] : memref<16x128xf32, #tpu.memory_space<vmem>> -> memref<1x128xf32, #tpu.memory_space<vmem>>
      %359 = tpu.memref_slice %arg13[%c0_i32_199] : memref<16x!tpu.dma_semaphore, #tpu.memory_space<semaphore_mem>> -> memref<1x!tpu.dma_semaphore, #tpu.memory_space<semaphore_mem>>
      %360 = tpu.memref_squeeze %359 : memref<1x!tpu.dma_semaphore, #tpu.memory_space<semaphore_mem>> -> memref<!tpu.dma_semaphore, #tpu.memory_space<semaphore_mem>>
      tpu.enqueue_dma source(%357 : memref<1x128xf32, #tpu.memory_space<any>>) target(%358 : memref<1x128xf32, #tpu.memory_space<vmem>>) target_semaphore(%360 : memref<!tpu.dma_semaphore, #tpu.memory_space<semaphore_mem>>)
    } else {
    }
    %c0_i32_5 = arith.constant 0 : i32
    %15 = arith.cmpi eq, %5, %c0_i32_5 : i32
    %16 = arith.extui %15 : i1 to i32
    %c0_i32_6 = arith.constant 0 : i32
    %17 = arith.cmpi ne, %16, %c0_i32_6 : i32
    scf.if %17 {
      %c0_i32_199 = arith.constant 0 : i32
      %c0_i32_200 = arith.constant 0 : i32
      %357 = tpu.memref_slice %arg9[%8, %c0_i32_200] : memref<128x128xf32, #tpu.memory_space<any>> -> memref<1x128xf32, #tpu.memory_space<any>>
      %c0_i32_201 = arith.constant 0 : i32
      %c0_i32_202 = arith.constant 0 : i32
      %358 = tpu.memref_slice %arg12[%c0_i32_201, %c0_i32_202] : memref<16x128xf32, #tpu.memory_space<vmem>> -> memref<1x128xf32, #tpu.memory_space<vmem>>
      %359 = tpu.memref_slice %arg13[%c0_i32_199] : memref<16x!tpu.dma_semaphore, #tpu.memory_space<semaphore_mem>> -> memref<1x!tpu.dma_semaphore, #tpu.memory_space<semaphore_mem>>
      %360 = tpu.memref_squeeze %359 : memref<1x!tpu.dma_semaphore, #tpu.memory_space<semaphore_mem>> -> memref<!tpu.dma_semaphore, #tpu.memory_space<semaphore_mem>>
      tpu.enqueue_dma source(%357 : memref<1x128xf32, #tpu.memory_space<any>>) target(%358 : memref<1x128xf32, #tpu.memory_space<vmem>>) target_semaphore(%360 : memref<!tpu.dma_semaphore, #tpu.memory_space<semaphore_mem>>)
    } else {
    }
    %c1_i32 = arith.constant 1 : i32
    %18 = arith.addi %2, %c1_i32 : i32
    %19 = arith.index_cast %18 : i32 to index
    %20 = memref.load %arg4[%19] : memref<32xi32, #tpu.memory_space<smem>>
    %c1_i32_7 = arith.constant 1 : i32
    %21 = arith.addi %2, %c1_i32_7 : i32
    %22 = arith.index_cast %21 : i32 to index
    %23 = memref.load %arg2[%22] : memref<32xi32, #tpu.memory_space<smem>>
    %c1_i32_8 = arith.constant 1 : i32
    %24 = arith.addi %2, %c1_i32_8 : i32
    %25 = arith.index_cast %24 : i32 to index
    %26 = memref.load %arg3[%25] : memref<32xi32, #tpu.memory_space<smem>>
    %c0_i32_9 = arith.constant 0 : i32
    %27 = arith.cmpi ne, %20, %c0_i32_9 : i32
    %28 = arith.extui %27 : i1 to i32
    %c0_i32_10 = arith.constant 0 : i32
    %29 = arith.cmpi ne, %28, %c0_i32_10 : i32
    scf.if %29 {
      %c1_i32_199 = arith.constant 1 : i32
      %c0_i32_200 = arith.constant 0 : i32
      %357 = tpu.memref_slice %arg10[%26, %c0_i32_200] : memref<8x128xf32, #tpu.memory_space<any>> -> memref<1x128xf32, #tpu.memory_space<any>>
      %c1_i32_201 = arith.constant 1 : i32
      %c0_i32_202 = arith.constant 0 : i32
      %358 = tpu.memref_slice %arg12[%c1_i32_201, %c0_i32_202] : memref<16x128xf32, #tpu.memory_space<vmem>> -> memref<1x128xf32, #tpu.memory_space<vmem>>
      %359 = tpu.memref_slice %arg13[%c1_i32_199] : memref<16x!tpu.dma_semaphore, #tpu.memory_space<semaphore_mem>> -> memref<1x!tpu.dma_semaphore, #tpu.memory_space<semaphore_mem>>
      %360 = tpu.memref_squeeze %359 : memref<1x!tpu.dma_semaphore, #tpu.memory_space<semaphore_mem>> -> memref<!tpu.dma_semaphore, #tpu.memory_space<semaphore_mem>>
      tpu.enqueue_dma source(%357 : memref<1x128xf32, #tpu.memory_space<any>>) target(%358 : memref<1x128xf32, #tpu.memory_space<vmem>>) target_semaphore(%360 : memref<!tpu.dma_semaphore, #tpu.memory_space<semaphore_mem>>)
    } else {
    }
    %c0_i32_11 = arith.constant 0 : i32
    %30 = arith.cmpi eq, %20, %c0_i32_11 : i32
    %31 = arith.extui %30 : i1 to i32
    %c0_i32_12 = arith.constant 0 : i32
    %32 = arith.cmpi ne, %31, %c0_i32_12 : i32
    scf.if %32 {
      %c1_i32_199 = arith.constant 1 : i32
      %c0_i32_200 = arith.constant 0 : i32
      %357 = tpu.memref_slice %arg9[%23, %c0_i32_200] : memref<128x128xf32, #tpu.memory_space<any>> -> memref<1x128xf32, #tpu.memory_space<any>>
      %c1_i32_201 = arith.constant 1 : i32
      %c0_i32_202 = arith.constant 0 : i32
      %358 = tpu.memref_slice %arg12[%c1_i32_201, %c0_i32_202] : memref<16x128xf32, #tpu.memory_space<vmem>> -> memref<1x128xf32, #tpu.memory_space<vmem>>
      %359 = tpu.memref_slice %arg13[%c1_i32_199] : memref<16x!tpu.dma_semaphore, #tpu.memory_space<semaphore_mem>> -> memref<1x!tpu.dma_semaphore, #tpu.memory_space<semaphore_mem>>
      %360 = tpu.memref_squeeze %359 : memref<1x!tpu.dma_semaphore, #tpu.memory_space<semaphore_mem>> -> memref<!tpu.dma_semaphore, #tpu.memory_space<semaphore_mem>>
      tpu.enqueue_dma source(%357 : memref<1x128xf32, #tpu.memory_space<any>>) target(%358 : memref<1x128xf32, #tpu.memory_space<vmem>>) target_semaphore(%360 : memref<!tpu.dma_semaphore, #tpu.memory_space<semaphore_mem>>)
    } else {
    }
    %c2_i32 = arith.constant 2 : i32
    %33 = arith.addi %2, %c2_i32 : i32
    %34 = arith.index_cast %33 : i32 to index
    %35 = memref.load %arg4[%34] : memref<32xi32, #tpu.memory_space<smem>>
    %c2_i32_13 = arith.constant 2 : i32
    %36 = arith.addi %2, %c2_i32_13 : i32
    %37 = arith.index_cast %36 : i32 to index
    %38 = memref.load %arg2[%37] : memref<32xi32, #tpu.memory_space<smem>>
    %c2_i32_14 = arith.constant 2 : i32
    %39 = arith.addi %2, %c2_i32_14 : i32
    %40 = arith.index_cast %39 : i32 to index
    %41 = memref.load %arg3[%40] : memref<32xi32, #tpu.memory_space<smem>>
    %c0_i32_15 = arith.constant 0 : i32
    %42 = arith.cmpi ne, %35, %c0_i32_15 : i32
    %43 = arith.extui %42 : i1 to i32
    %c0_i32_16 = arith.constant 0 : i32
    %44 = arith.cmpi ne, %43, %c0_i32_16 : i32
    scf.if %44 {
      %c2_i32_199 = arith.constant 2 : i32
      %c0_i32_200 = arith.constant 0 : i32
      %357 = tpu.memref_slice %arg10[%41, %c0_i32_200] : memref<8x128xf32, #tpu.memory_space<any>> -> memref<1x128xf32, #tpu.memory_space<any>>
      %c2_i32_201 = arith.constant 2 : i32
      %c0_i32_202 = arith.constant 0 : i32
      %358 = tpu.memref_slice %arg12[%c2_i32_201, %c0_i32_202] : memref<16x128xf32, #tpu.memory_space<vmem>> -> memref<1x128xf32, #tpu.memory_space<vmem>>
      %359 = tpu.memref_slice %arg13[%c2_i32_199] : memref<16x!tpu.dma_semaphore, #tpu.memory_space<semaphore_mem>> -> memref<1x!tpu.dma_semaphore, #tpu.memory_space<semaphore_mem>>
      %360 = tpu.memref_squeeze %359 : memref<1x!tpu.dma_semaphore, #tpu.memory_space<semaphore_mem>> -> memref<!tpu.dma_semaphore, #tpu.memory_space<semaphore_mem>>
      tpu.enqueue_dma source(%357 : memref<1x128xf32, #tpu.memory_space<any>>) target(%358 : memref<1x128xf32, #tpu.memory_space<vmem>>) target_semaphore(%360 : memref<!tpu.dma_semaphore, #tpu.memory_space<semaphore_mem>>)
    } else {
    }
    %c0_i32_17 = arith.constant 0 : i32
    %45 = arith.cmpi eq, %35, %c0_i32_17 : i32
    %46 = arith.extui %45 : i1 to i32
    %c0_i32_18 = arith.constant 0 : i32
    %47 = arith.cmpi ne, %46, %c0_i32_18 : i32
    scf.if %47 {
      %c2_i32_199 = arith.constant 2 : i32
      %c0_i32_200 = arith.constant 0 : i32
      %357 = tpu.memref_slice %arg9[%38, %c0_i32_200] : memref<128x128xf32, #tpu.memory_space<any>> -> memref<1x128xf32, #tpu.memory_space<any>>
      %c2_i32_201 = arith.constant 2 : i32
      %c0_i32_202 = arith.constant 0 : i32
      %358 = tpu.memref_slice %arg12[%c2_i32_201, %c0_i32_202] : memref<16x128xf32, #tpu.memory_space<vmem>> -> memref<1x128xf32, #tpu.memory_space<vmem>>
      %359 = tpu.memref_slice %arg13[%c2_i32_199] : memref<16x!tpu.dma_semaphore, #tpu.memory_space<semaphore_mem>> -> memref<1x!tpu.dma_semaphore, #tpu.memory_space<semaphore_mem>>
      %360 = tpu.memref_squeeze %359 : memref<1x!tpu.dma_semaphore, #tpu.memory_space<semaphore_mem>> -> memref<!tpu.dma_semaphore, #tpu.memory_space<semaphore_mem>>
      tpu.enqueue_dma source(%357 : memref<1x128xf32, #tpu.memory_space<any>>) target(%358 : memref<1x128xf32, #tpu.memory_space<vmem>>) target_semaphore(%360 : memref<!tpu.dma_semaphore, #tpu.memory_space<semaphore_mem>>)
    } else {
    }
    %c3_i32 = arith.constant 3 : i32
    %48 = arith.addi %2, %c3_i32 : i32
    %49 = arith.index_cast %48 : i32 to index
    %50 = memref.load %arg4[%49] : memref<32xi32, #tpu.memory_space<smem>>
    %c3_i32_19 = arith.constant 3 : i32
    %51 = arith.addi %2, %c3_i32_19 : i32
    %52 = arith.index_cast %51 : i32 to index
    %53 = memref.load %arg2[%52] : memref<32xi32, #tpu.memory_space<smem>>
    %c3_i32_20 = arith.constant 3 : i32
    %54 = arith.addi %2, %c3_i32_20 : i32
    %55 = arith.index_cast %54 : i32 to index
    %56 = memref.load %arg3[%55] : memref<32xi32, #tpu.memory_space<smem>>
    %c0_i32_21 = arith.constant 0 : i32
    %57 = arith.cmpi ne, %50, %c0_i32_21 : i32
    %58 = arith.extui %57 : i1 to i32
    %c0_i32_22 = arith.constant 0 : i32
    %59 = arith.cmpi ne, %58, %c0_i32_22 : i32
    scf.if %59 {
      %c3_i32_199 = arith.constant 3 : i32
      %c0_i32_200 = arith.constant 0 : i32
      %357 = tpu.memref_slice %arg10[%56, %c0_i32_200] : memref<8x128xf32, #tpu.memory_space<any>> -> memref<1x128xf32, #tpu.memory_space<any>>
      %c3_i32_201 = arith.constant 3 : i32
      %c0_i32_202 = arith.constant 0 : i32
      %358 = tpu.memref_slice %arg12[%c3_i32_201, %c0_i32_202] : memref<16x128xf32, #tpu.memory_space<vmem>> -> memref<1x128xf32, #tpu.memory_space<vmem>>
      %359 = tpu.memref_slice %arg13[%c3_i32_199] : memref<16x!tpu.dma_semaphore, #tpu.memory_space<semaphore_mem>> -> memref<1x!tpu.dma_semaphore, #tpu.memory_space<semaphore_mem>>
      %360 = tpu.memref_squeeze %359 : memref<1x!tpu.dma_semaphore, #tpu.memory_space<semaphore_mem>> -> memref<!tpu.dma_semaphore, #tpu.memory_space<semaphore_mem>>
      tpu.enqueue_dma source(%357 : memref<1x128xf32, #tpu.memory_space<any>>) target(%358 : memref<1x128xf32, #tpu.memory_space<vmem>>) target_semaphore(%360 : memref<!tpu.dma_semaphore, #tpu.memory_space<semaphore_mem>>)
    } else {
    }
    %c0_i32_23 = arith.constant 0 : i32
    %60 = arith.cmpi eq, %50, %c0_i32_23 : i32
    %61 = arith.extui %60 : i1 to i32
    %c0_i32_24 = arith.constant 0 : i32
    %62 = arith.cmpi ne, %61, %c0_i32_24 : i32
    scf.if %62 {
      %c3_i32_199 = arith.constant 3 : i32
      %c0_i32_200 = arith.constant 0 : i32
      %357 = tpu.memref_slice %arg9[%53, %c0_i32_200] : memref<128x128xf32, #tpu.memory_space<any>> -> memref<1x128xf32, #tpu.memory_space<any>>
      %c3_i32_201 = arith.constant 3 : i32
      %c0_i32_202 = arith.constant 0 : i32
      %358 = tpu.memref_slice %arg12[%c3_i32_201, %c0_i32_202] : memref<16x128xf32, #tpu.memory_space<vmem>> -> memref<1x128xf32, #tpu.memory_space<vmem>>
      %359 = tpu.memref_slice %arg13[%c3_i32_199] : memref<16x!tpu.dma_semaphore, #tpu.memory_space<semaphore_mem>> -> memref<1x!tpu.dma_semaphore, #tpu.memory_space<semaphore_mem>>
      %360 = tpu.memref_squeeze %359 : memref<1x!tpu.dma_semaphore, #tpu.memory_space<semaphore_mem>> -> memref<!tpu.dma_semaphore, #tpu.memory_space<semaphore_mem>>
      tpu.enqueue_dma source(%357 : memref<1x128xf32, #tpu.memory_space<any>>) target(%358 : memref<1x128xf32, #tpu.memory_space<vmem>>) target_semaphore(%360 : memref<!tpu.dma_semaphore, #tpu.memory_space<semaphore_mem>>)
    } else {
    }
    %c4_i32 = arith.constant 4 : i32
    %63 = arith.addi %2, %c4_i32 : i32
    %64 = arith.index_cast %63 : i32 to index
    %65 = memref.load %arg4[%64] : memref<32xi32, #tpu.memory_space<smem>>
    %c4_i32_25 = arith.constant 4 : i32
    %66 = arith.addi %2, %c4_i32_25 : i32
    %67 = arith.index_cast %66 : i32 to index
    %68 = memref.load %arg2[%67] : memref<32xi32, #tpu.memory_space<smem>>
    %c4_i32_26 = arith.constant 4 : i32
    %69 = arith.addi %2, %c4_i32_26 : i32
    %70 = arith.index_cast %69 : i32 to index
    %71 = memref.load %arg3[%70] : memref<32xi32, #tpu.memory_space<smem>>
    %c0_i32_27 = arith.constant 0 : i32
    %72 = arith.cmpi ne, %65, %c0_i32_27 : i32
    %73 = arith.extui %72 : i1 to i32
    %c0_i32_28 = arith.constant 0 : i32
    %74 = arith.cmpi ne, %73, %c0_i32_28 : i32
    scf.if %74 {
      %c4_i32_199 = arith.constant 4 : i32
      %c0_i32_200 = arith.constant 0 : i32
      %357 = tpu.memref_slice %arg10[%71, %c0_i32_200] : memref<8x128xf32, #tpu.memory_space<any>> -> memref<1x128xf32, #tpu.memory_space<any>>
      %c4_i32_201 = arith.constant 4 : i32
      %c0_i32_202 = arith.constant 0 : i32
      %358 = tpu.memref_slice %arg12[%c4_i32_201, %c0_i32_202] : memref<16x128xf32, #tpu.memory_space<vmem>> -> memref<1x128xf32, #tpu.memory_space<vmem>>
      %359 = tpu.memref_slice %arg13[%c4_i32_199] : memref<16x!tpu.dma_semaphore, #tpu.memory_space<semaphore_mem>> -> memref<1x!tpu.dma_semaphore, #tpu.memory_space<semaphore_mem>>
      %360 = tpu.memref_squeeze %359 : memref<1x!tpu.dma_semaphore, #tpu.memory_space<semaphore_mem>> -> memref<!tpu.dma_semaphore, #tpu.memory_space<semaphore_mem>>
      tpu.enqueue_dma source(%357 : memref<1x128xf32, #tpu.memory_space<any>>) target(%358 : memref<1x128xf32, #tpu.memory_space<vmem>>) target_semaphore(%360 : memref<!tpu.dma_semaphore, #tpu.memory_space<semaphore_mem>>)
    } else {
    }
    %c0_i32_29 = arith.constant 0 : i32
    %75 = arith.cmpi eq, %65, %c0_i32_29 : i32
    %76 = arith.extui %75 : i1 to i32
    %c0_i32_30 = arith.constant 0 : i32
    %77 = arith.cmpi ne, %76, %c0_i32_30 : i32
    scf.if %77 {
      %c4_i32_199 = arith.constant 4 : i32
      %c0_i32_200 = arith.constant 0 : i32
      %357 = tpu.memref_slice %arg9[%68, %c0_i32_200] : memref<128x128xf32, #tpu.memory_space<any>> -> memref<1x128xf32, #tpu.memory_space<any>>
      %c4_i32_201 = arith.constant 4 : i32
      %c0_i32_202 = arith.constant 0 : i32
      %358 = tpu.memref_slice %arg12[%c4_i32_201, %c0_i32_202] : memref<16x128xf32, #tpu.memory_space<vmem>> -> memref<1x128xf32, #tpu.memory_space<vmem>>
      %359 = tpu.memref_slice %arg13[%c4_i32_199] : memref<16x!tpu.dma_semaphore, #tpu.memory_space<semaphore_mem>> -> memref<1x!tpu.dma_semaphore, #tpu.memory_space<semaphore_mem>>
      %360 = tpu.memref_squeeze %359 : memref<1x!tpu.dma_semaphore, #tpu.memory_space<semaphore_mem>> -> memref<!tpu.dma_semaphore, #tpu.memory_space<semaphore_mem>>
      tpu.enqueue_dma source(%357 : memref<1x128xf32, #tpu.memory_space<any>>) target(%358 : memref<1x128xf32, #tpu.memory_space<vmem>>) target_semaphore(%360 : memref<!tpu.dma_semaphore, #tpu.memory_space<semaphore_mem>>)
    } else {
    }
    %c5_i32 = arith.constant 5 : i32
    %78 = arith.addi %2, %c5_i32 : i32
    %79 = arith.index_cast %78 : i32 to index
    %80 = memref.load %arg4[%79] : memref<32xi32, #tpu.memory_space<smem>>
    %c5_i32_31 = arith.constant 5 : i32
    %81 = arith.addi %2, %c5_i32_31 : i32
    %82 = arith.index_cast %81 : i32 to index
    %83 = memref.load %arg2[%82] : memref<32xi32, #tpu.memory_space<smem>>
    %c5_i32_32 = arith.constant 5 : i32
    %84 = arith.addi %2, %c5_i32_32 : i32
    %85 = arith.index_cast %84 : i32 to index
    %86 = memref.load %arg3[%85] : memref<32xi32, #tpu.memory_space<smem>>
    %c0_i32_33 = arith.constant 0 : i32
    %87 = arith.cmpi ne, %80, %c0_i32_33 : i32
    %88 = arith.extui %87 : i1 to i32
    %c0_i32_34 = arith.constant 0 : i32
    %89 = arith.cmpi ne, %88, %c0_i32_34 : i32
    scf.if %89 {
      %c5_i32_199 = arith.constant 5 : i32
      %c0_i32_200 = arith.constant 0 : i32
      %357 = tpu.memref_slice %arg10[%86, %c0_i32_200] : memref<8x128xf32, #tpu.memory_space<any>> -> memref<1x128xf32, #tpu.memory_space<any>>
      %c5_i32_201 = arith.constant 5 : i32
      %c0_i32_202 = arith.constant 0 : i32
      %358 = tpu.memref_slice %arg12[%c5_i32_201, %c0_i32_202] : memref<16x128xf32, #tpu.memory_space<vmem>> -> memref<1x128xf32, #tpu.memory_space<vmem>>
      %359 = tpu.memref_slice %arg13[%c5_i32_199] : memref<16x!tpu.dma_semaphore, #tpu.memory_space<semaphore_mem>> -> memref<1x!tpu.dma_semaphore, #tpu.memory_space<semaphore_mem>>
      %360 = tpu.memref_squeeze %359 : memref<1x!tpu.dma_semaphore, #tpu.memory_space<semaphore_mem>> -> memref<!tpu.dma_semaphore, #tpu.memory_space<semaphore_mem>>
      tpu.enqueue_dma source(%357 : memref<1x128xf32, #tpu.memory_space<any>>) target(%358 : memref<1x128xf32, #tpu.memory_space<vmem>>) target_semaphore(%360 : memref<!tpu.dma_semaphore, #tpu.memory_space<semaphore_mem>>)
    } else {
    }
    %c0_i32_35 = arith.constant 0 : i32
    %90 = arith.cmpi eq, %80, %c0_i32_35 : i32
    %91 = arith.extui %90 : i1 to i32
    %c0_i32_36 = arith.constant 0 : i32
    %92 = arith.cmpi ne, %91, %c0_i32_36 : i32
    scf.if %92 {
      %c5_i32_199 = arith.constant 5 : i32
      %c0_i32_200 = arith.constant 0 : i32
      %357 = tpu.memref_slice %arg9[%83, %c0_i32_200] : memref<128x128xf32, #tpu.memory_space<any>> -> memref<1x128xf32, #tpu.memory_space<any>>
      %c5_i32_201 = arith.constant 5 : i32
      %c0_i32_202 = arith.constant 0 : i32
      %358 = tpu.memref_slice %arg12[%c5_i32_201, %c0_i32_202] : memref<16x128xf32, #tpu.memory_space<vmem>> -> memref<1x128xf32, #tpu.memory_space<vmem>>
      %359 = tpu.memref_slice %arg13[%c5_i32_199] : memref<16x!tpu.dma_semaphore, #tpu.memory_space<semaphore_mem>> -> memref<1x!tpu.dma_semaphore, #tpu.memory_space<semaphore_mem>>
      %360 = tpu.memref_squeeze %359 : memref<1x!tpu.dma_semaphore, #tpu.memory_space<semaphore_mem>> -> memref<!tpu.dma_semaphore, #tpu.memory_space<semaphore_mem>>
      tpu.enqueue_dma source(%357 : memref<1x128xf32, #tpu.memory_space<any>>) target(%358 : memref<1x128xf32, #tpu.memory_space<vmem>>) target_semaphore(%360 : memref<!tpu.dma_semaphore, #tpu.memory_space<semaphore_mem>>)
    } else {
    }
    %c6_i32 = arith.constant 6 : i32
    %93 = arith.addi %2, %c6_i32 : i32
    %94 = arith.index_cast %93 : i32 to index
    %95 = memref.load %arg4[%94] : memref<32xi32, #tpu.memory_space<smem>>
    %c6_i32_37 = arith.constant 6 : i32
    %96 = arith.addi %2, %c6_i32_37 : i32
    %97 = arith.index_cast %96 : i32 to index
    %98 = memref.load %arg2[%97] : memref<32xi32, #tpu.memory_space<smem>>
    %c6_i32_38 = arith.constant 6 : i32
    %99 = arith.addi %2, %c6_i32_38 : i32
    %100 = arith.index_cast %99 : i32 to index
    %101 = memref.load %arg3[%100] : memref<32xi32, #tpu.memory_space<smem>>
    %c0_i32_39 = arith.constant 0 : i32
    %102 = arith.cmpi ne, %95, %c0_i32_39 : i32
    %103 = arith.extui %102 : i1 to i32
    %c0_i32_40 = arith.constant 0 : i32
    %104 = arith.cmpi ne, %103, %c0_i32_40 : i32
    scf.if %104 {
      %c6_i32_199 = arith.constant 6 : i32
      %c0_i32_200 = arith.constant 0 : i32
      %357 = tpu.memref_slice %arg10[%101, %c0_i32_200] : memref<8x128xf32, #tpu.memory_space<any>> -> memref<1x128xf32, #tpu.memory_space<any>>
      %c6_i32_201 = arith.constant 6 : i32
      %c0_i32_202 = arith.constant 0 : i32
      %358 = tpu.memref_slice %arg12[%c6_i32_201, %c0_i32_202] : memref<16x128xf32, #tpu.memory_space<vmem>> -> memref<1x128xf32, #tpu.memory_space<vmem>>
      %359 = tpu.memref_slice %arg13[%c6_i32_199] : memref<16x!tpu.dma_semaphore, #tpu.memory_space<semaphore_mem>> -> memref<1x!tpu.dma_semaphore, #tpu.memory_space<semaphore_mem>>
      %360 = tpu.memref_squeeze %359 : memref<1x!tpu.dma_semaphore, #tpu.memory_space<semaphore_mem>> -> memref<!tpu.dma_semaphore, #tpu.memory_space<semaphore_mem>>
      tpu.enqueue_dma source(%357 : memref<1x128xf32, #tpu.memory_space<any>>) target(%358 : memref<1x128xf32, #tpu.memory_space<vmem>>) target_semaphore(%360 : memref<!tpu.dma_semaphore, #tpu.memory_space<semaphore_mem>>)
    } else {
    }
    %c0_i32_41 = arith.constant 0 : i32
    %105 = arith.cmpi eq, %95, %c0_i32_41 : i32
    %106 = arith.extui %105 : i1 to i32
    %c0_i32_42 = arith.constant 0 : i32
    %107 = arith.cmpi ne, %106, %c0_i32_42 : i32
    scf.if %107 {
      %c6_i32_199 = arith.constant 6 : i32
      %c0_i32_200 = arith.constant 0 : i32
      %357 = tpu.memref_slice %arg9[%98, %c0_i32_200] : memref<128x128xf32, #tpu.memory_space<any>> -> memref<1x128xf32, #tpu.memory_space<any>>
      %c6_i32_201 = arith.constant 6 : i32
      %c0_i32_202 = arith.constant 0 : i32
      %358 = tpu.memref_slice %arg12[%c6_i32_201, %c0_i32_202] : memref<16x128xf32, #tpu.memory_space<vmem>> -> memref<1x128xf32, #tpu.memory_space<vmem>>
      %359 = tpu.memref_slice %arg13[%c6_i32_199] : memref<16x!tpu.dma_semaphore, #tpu.memory_space<semaphore_mem>> -> memref<1x!tpu.dma_semaphore, #tpu.memory_space<semaphore_mem>>
      %360 = tpu.memref_squeeze %359 : memref<1x!tpu.dma_semaphore, #tpu.memory_space<semaphore_mem>> -> memref<!tpu.dma_semaphore, #tpu.memory_space<semaphore_mem>>
      tpu.enqueue_dma source(%357 : memref<1x128xf32, #tpu.memory_space<any>>) target(%358 : memref<1x128xf32, #tpu.memory_space<vmem>>) target_semaphore(%360 : memref<!tpu.dma_semaphore, #tpu.memory_space<semaphore_mem>>)
    } else {
    }
    %c7_i32 = arith.constant 7 : i32
    %108 = arith.addi %2, %c7_i32 : i32
    %109 = arith.index_cast %108 : i32 to index
    %110 = memref.load %arg4[%109] : memref<32xi32, #tpu.memory_space<smem>>
    %c7_i32_43 = arith.constant 7 : i32
    %111 = arith.addi %2, %c7_i32_43 : i32
    %112 = arith.index_cast %111 : i32 to index
    %113 = memref.load %arg2[%112] : memref<32xi32, #tpu.memory_space<smem>>
    %c7_i32_44 = arith.constant 7 : i32
    %114 = arith.addi %2, %c7_i32_44 : i32
    %115 = arith.index_cast %114 : i32 to index
    %116 = memref.load %arg3[%115] : memref<32xi32, #tpu.memory_space<smem>>
    %c0_i32_45 = arith.constant 0 : i32
    %117 = arith.cmpi ne, %110, %c0_i32_45 : i32
    %118 = arith.extui %117 : i1 to i32
    %c0_i32_46 = arith.constant 0 : i32
    %119 = arith.cmpi ne, %118, %c0_i32_46 : i32
    scf.if %119 {
      %c7_i32_199 = arith.constant 7 : i32
      %c0_i32_200 = arith.constant 0 : i32
      %357 = tpu.memref_slice %arg10[%116, %c0_i32_200] : memref<8x128xf32, #tpu.memory_space<any>> -> memref<1x128xf32, #tpu.memory_space<any>>
      %c7_i32_201 = arith.constant 7 : i32
      %c0_i32_202 = arith.constant 0 : i32
      %358 = tpu.memref_slice %arg12[%c7_i32_201, %c0_i32_202] : memref<16x128xf32, #tpu.memory_space<vmem>> -> memref<1x128xf32, #tpu.memory_space<vmem>>
      %359 = tpu.memref_slice %arg13[%c7_i32_199] : memref<16x!tpu.dma_semaphore, #tpu.memory_space<semaphore_mem>> -> memref<1x!tpu.dma_semaphore, #tpu.memory_space<semaphore_mem>>
      %360 = tpu.memref_squeeze %359 : memref<1x!tpu.dma_semaphore, #tpu.memory_space<semaphore_mem>> -> memref<!tpu.dma_semaphore, #tpu.memory_space<semaphore_mem>>
      tpu.enqueue_dma source(%357 : memref<1x128xf32, #tpu.memory_space<any>>) target(%358 : memref<1x128xf32, #tpu.memory_space<vmem>>) target_semaphore(%360 : memref<!tpu.dma_semaphore, #tpu.memory_space<semaphore_mem>>)
    } else {
    }
    %c0_i32_47 = arith.constant 0 : i32
    %120 = arith.cmpi eq, %110, %c0_i32_47 : i32
    %121 = arith.extui %120 : i1 to i32
    %c0_i32_48 = arith.constant 0 : i32
    %122 = arith.cmpi ne, %121, %c0_i32_48 : i32
    scf.if %122 {
      %c7_i32_199 = arith.constant 7 : i32
      %c0_i32_200 = arith.constant 0 : i32
      %357 = tpu.memref_slice %arg9[%113, %c0_i32_200] : memref<128x128xf32, #tpu.memory_space<any>> -> memref<1x128xf32, #tpu.memory_space<any>>
      %c7_i32_201 = arith.constant 7 : i32
      %c0_i32_202 = arith.constant 0 : i32
      %358 = tpu.memref_slice %arg12[%c7_i32_201, %c0_i32_202] : memref<16x128xf32, #tpu.memory_space<vmem>> -> memref<1x128xf32, #tpu.memory_space<vmem>>
      %359 = tpu.memref_slice %arg13[%c7_i32_199] : memref<16x!tpu.dma_semaphore, #tpu.memory_space<semaphore_mem>> -> memref<1x!tpu.dma_semaphore, #tpu.memory_space<semaphore_mem>>
      %360 = tpu.memref_squeeze %359 : memref<1x!tpu.dma_semaphore, #tpu.memory_space<semaphore_mem>> -> memref<!tpu.dma_semaphore, #tpu.memory_space<semaphore_mem>>
      tpu.enqueue_dma source(%357 : memref<1x128xf32, #tpu.memory_space<any>>) target(%358 : memref<1x128xf32, #tpu.memory_space<vmem>>) target_semaphore(%360 : memref<!tpu.dma_semaphore, #tpu.memory_space<semaphore_mem>>)
    } else {
    }
    %c8_i32 = arith.constant 8 : i32
    %123 = arith.addi %2, %c8_i32 : i32
    %124 = arith.index_cast %123 : i32 to index
    %125 = memref.load %arg4[%124] : memref<32xi32, #tpu.memory_space<smem>>
    %c8_i32_49 = arith.constant 8 : i32
    %126 = arith.addi %2, %c8_i32_49 : i32
    %127 = arith.index_cast %126 : i32 to index
    %128 = memref.load %arg2[%127] : memref<32xi32, #tpu.memory_space<smem>>
    %c8_i32_50 = arith.constant 8 : i32
    %129 = arith.addi %2, %c8_i32_50 : i32
    %130 = arith.index_cast %129 : i32 to index
    %131 = memref.load %arg3[%130] : memref<32xi32, #tpu.memory_space<smem>>
    %c0_i32_51 = arith.constant 0 : i32
    %132 = arith.cmpi ne, %125, %c0_i32_51 : i32
    %133 = arith.extui %132 : i1 to i32
    %c0_i32_52 = arith.constant 0 : i32
    %134 = arith.cmpi ne, %133, %c0_i32_52 : i32
    scf.if %134 {
      %c8_i32_199 = arith.constant 8 : i32
      %c0_i32_200 = arith.constant 0 : i32
      %357 = tpu.memref_slice %arg10[%131, %c0_i32_200] : memref<8x128xf32, #tpu.memory_space<any>> -> memref<1x128xf32, #tpu.memory_space<any>>
      %c8_i32_201 = arith.constant 8 : i32
      %c0_i32_202 = arith.constant 0 : i32
      %358 = tpu.memref_slice %arg12[%c8_i32_201, %c0_i32_202] : memref<16x128xf32, #tpu.memory_space<vmem>> -> memref<1x128xf32, #tpu.memory_space<vmem>>
      %359 = tpu.memref_slice %arg13[%c8_i32_199] : memref<16x!tpu.dma_semaphore, #tpu.memory_space<semaphore_mem>> -> memref<1x!tpu.dma_semaphore, #tpu.memory_space<semaphore_mem>>
      %360 = tpu.memref_squeeze %359 : memref<1x!tpu.dma_semaphore, #tpu.memory_space<semaphore_mem>> -> memref<!tpu.dma_semaphore, #tpu.memory_space<semaphore_mem>>
      tpu.enqueue_dma source(%357 : memref<1x128xf32, #tpu.memory_space<any>>) target(%358 : memref<1x128xf32, #tpu.memory_space<vmem>>) target_semaphore(%360 : memref<!tpu.dma_semaphore, #tpu.memory_space<semaphore_mem>>)
    } else {
    }
    %c0_i32_53 = arith.constant 0 : i32
    %135 = arith.cmpi eq, %125, %c0_i32_53 : i32
    %136 = arith.extui %135 : i1 to i32
    %c0_i32_54 = arith.constant 0 : i32
    %137 = arith.cmpi ne, %136, %c0_i32_54 : i32
    scf.if %137 {
      %c8_i32_199 = arith.constant 8 : i32
      %c0_i32_200 = arith.constant 0 : i32
      %357 = tpu.memref_slice %arg9[%128, %c0_i32_200] : memref<128x128xf32, #tpu.memory_space<any>> -> memref<1x128xf32, #tpu.memory_space<any>>
      %c8_i32_201 = arith.constant 8 : i32
      %c0_i32_202 = arith.constant 0 : i32
      %358 = tpu.memref_slice %arg12[%c8_i32_201, %c0_i32_202] : memref<16x128xf32, #tpu.memory_space<vmem>> -> memref<1x128xf32, #tpu.memory_space<vmem>>
      %359 = tpu.memref_slice %arg13[%c8_i32_199] : memref<16x!tpu.dma_semaphore, #tpu.memory_space<semaphore_mem>> -> memref<1x!tpu.dma_semaphore, #tpu.memory_space<semaphore_mem>>
      %360 = tpu.memref_squeeze %359 : memref<1x!tpu.dma_semaphore, #tpu.memory_space<semaphore_mem>> -> memref<!tpu.dma_semaphore, #tpu.memory_space<semaphore_mem>>
      tpu.enqueue_dma source(%357 : memref<1x128xf32, #tpu.memory_space<any>>) target(%358 : memref<1x128xf32, #tpu.memory_space<vmem>>) target_semaphore(%360 : memref<!tpu.dma_semaphore, #tpu.memory_space<semaphore_mem>>)
    } else {
    }
    %c9_i32 = arith.constant 9 : i32
    %138 = arith.addi %2, %c9_i32 : i32
    %139 = arith.index_cast %138 : i32 to index
    %140 = memref.load %arg4[%139] : memref<32xi32, #tpu.memory_space<smem>>
    %c9_i32_55 = arith.constant 9 : i32
    %141 = arith.addi %2, %c9_i32_55 : i32
    %142 = arith.index_cast %141 : i32 to index
    %143 = memref.load %arg2[%142] : memref<32xi32, #tpu.memory_space<smem>>
    %c9_i32_56 = arith.constant 9 : i32
    %144 = arith.addi %2, %c9_i32_56 : i32
    %145 = arith.index_cast %144 : i32 to index
    %146 = memref.load %arg3[%145] : memref<32xi32, #tpu.memory_space<smem>>
    %c0_i32_57 = arith.constant 0 : i32
    %147 = arith.cmpi ne, %140, %c0_i32_57 : i32
    %148 = arith.extui %147 : i1 to i32
    %c0_i32_58 = arith.constant 0 : i32
    %149 = arith.cmpi ne, %148, %c0_i32_58 : i32
    scf.if %149 {
      %c9_i32_199 = arith.constant 9 : i32
      %c0_i32_200 = arith.constant 0 : i32
      %357 = tpu.memref_slice %arg10[%146, %c0_i32_200] : memref<8x128xf32, #tpu.memory_space<any>> -> memref<1x128xf32, #tpu.memory_space<any>>
      %c9_i32_201 = arith.constant 9 : i32
      %c0_i32_202 = arith.constant 0 : i32
      %358 = tpu.memref_slice %arg12[%c9_i32_201, %c0_i32_202] : memref<16x128xf32, #tpu.memory_space<vmem>> -> memref<1x128xf32, #tpu.memory_space<vmem>>
      %359 = tpu.memref_slice %arg13[%c9_i32_199] : memref<16x!tpu.dma_semaphore, #tpu.memory_space<semaphore_mem>> -> memref<1x!tpu.dma_semaphore, #tpu.memory_space<semaphore_mem>>
      %360 = tpu.memref_squeeze %359 : memref<1x!tpu.dma_semaphore, #tpu.memory_space<semaphore_mem>> -> memref<!tpu.dma_semaphore, #tpu.memory_space<semaphore_mem>>
      tpu.enqueue_dma source(%357 : memref<1x128xf32, #tpu.memory_space<any>>) target(%358 : memref<1x128xf32, #tpu.memory_space<vmem>>) target_semaphore(%360 : memref<!tpu.dma_semaphore, #tpu.memory_space<semaphore_mem>>)
    } else {
    }
    %c0_i32_59 = arith.constant 0 : i32
    %150 = arith.cmpi eq, %140, %c0_i32_59 : i32
    %151 = arith.extui %150 : i1 to i32
    %c0_i32_60 = arith.constant 0 : i32
    %152 = arith.cmpi ne, %151, %c0_i32_60 : i32
    scf.if %152 {
      %c9_i32_199 = arith.constant 9 : i32
      %c0_i32_200 = arith.constant 0 : i32
      %357 = tpu.memref_slice %arg9[%143, %c0_i32_200] : memref<128x128xf32, #tpu.memory_space<any>> -> memref<1x128xf32, #tpu.memory_space<any>>
      %c9_i32_201 = arith.constant 9 : i32
      %c0_i32_202 = arith.constant 0 : i32
      %358 = tpu.memref_slice %arg12[%c9_i32_201, %c0_i32_202] : memref<16x128xf32, #tpu.memory_space<vmem>> -> memref<1x128xf32, #tpu.memory_space<vmem>>
      %359 = tpu.memref_slice %arg13[%c9_i32_199] : memref<16x!tpu.dma_semaphore, #tpu.memory_space<semaphore_mem>> -> memref<1x!tpu.dma_semaphore, #tpu.memory_space<semaphore_mem>>
      %360 = tpu.memref_squeeze %359 : memref<1x!tpu.dma_semaphore, #tpu.memory_space<semaphore_mem>> -> memref<!tpu.dma_semaphore, #tpu.memory_space<semaphore_mem>>
      tpu.enqueue_dma source(%357 : memref<1x128xf32, #tpu.memory_space<any>>) target(%358 : memref<1x128xf32, #tpu.memory_space<vmem>>) target_semaphore(%360 : memref<!tpu.dma_semaphore, #tpu.memory_space<semaphore_mem>>)
    } else {
    }
    %c10_i32 = arith.constant 10 : i32
    %153 = arith.addi %2, %c10_i32 : i32
    %154 = arith.index_cast %153 : i32 to index
    %155 = memref.load %arg4[%154] : memref<32xi32, #tpu.memory_space<smem>>
    %c10_i32_61 = arith.constant 10 : i32
    %156 = arith.addi %2, %c10_i32_61 : i32
    %157 = arith.index_cast %156 : i32 to index
    %158 = memref.load %arg2[%157] : memref<32xi32, #tpu.memory_space<smem>>
    %c10_i32_62 = arith.constant 10 : i32
    %159 = arith.addi %2, %c10_i32_62 : i32
    %160 = arith.index_cast %159 : i32 to index
    %161 = memref.load %arg3[%160] : memref<32xi32, #tpu.memory_space<smem>>
    %c0_i32_63 = arith.constant 0 : i32
    %162 = arith.cmpi ne, %155, %c0_i32_63 : i32
    %163 = arith.extui %162 : i1 to i32
    %c0_i32_64 = arith.constant 0 : i32
    %164 = arith.cmpi ne, %163, %c0_i32_64 : i32
    scf.if %164 {
      %c10_i32_199 = arith.constant 10 : i32
      %c0_i32_200 = arith.constant 0 : i32
      %357 = tpu.memref_slice %arg10[%161, %c0_i32_200] : memref<8x128xf32, #tpu.memory_space<any>> -> memref<1x128xf32, #tpu.memory_space<any>>
      %c10_i32_201 = arith.constant 10 : i32
      %c0_i32_202 = arith.constant 0 : i32
      %358 = tpu.memref_slice %arg12[%c10_i32_201, %c0_i32_202] : memref<16x128xf32, #tpu.memory_space<vmem>> -> memref<1x128xf32, #tpu.memory_space<vmem>>
      %359 = tpu.memref_slice %arg13[%c10_i32_199] : memref<16x!tpu.dma_semaphore, #tpu.memory_space<semaphore_mem>> -> memref<1x!tpu.dma_semaphore, #tpu.memory_space<semaphore_mem>>
      %360 = tpu.memref_squeeze %359 : memref<1x!tpu.dma_semaphore, #tpu.memory_space<semaphore_mem>> -> memref<!tpu.dma_semaphore, #tpu.memory_space<semaphore_mem>>
      tpu.enqueue_dma source(%357 : memref<1x128xf32, #tpu.memory_space<any>>) target(%358 : memref<1x128xf32, #tpu.memory_space<vmem>>) target_semaphore(%360 : memref<!tpu.dma_semaphore, #tpu.memory_space<semaphore_mem>>)
    } else {
    }
    %c0_i32_65 = arith.constant 0 : i32
    %165 = arith.cmpi eq, %155, %c0_i32_65 : i32
    %166 = arith.extui %165 : i1 to i32
    %c0_i32_66 = arith.constant 0 : i32
    %167 = arith.cmpi ne, %166, %c0_i32_66 : i32
    scf.if %167 {
      %c10_i32_199 = arith.constant 10 : i32
      %c0_i32_200 = arith.constant 0 : i32
      %357 = tpu.memref_slice %arg9[%158, %c0_i32_200] : memref<128x128xf32, #tpu.memory_space<any>> -> memref<1x128xf32, #tpu.memory_space<any>>
      %c10_i32_201 = arith.constant 10 : i32
      %c0_i32_202 = arith.constant 0 : i32
      %358 = tpu.memref_slice %arg12[%c10_i32_201, %c0_i32_202] : memref<16x128xf32, #tpu.memory_space<vmem>> -> memref<1x128xf32, #tpu.memory_space<vmem>>
      %359 = tpu.memref_slice %arg13[%c10_i32_199] : memref<16x!tpu.dma_semaphore, #tpu.memory_space<semaphore_mem>> -> memref<1x!tpu.dma_semaphore, #tpu.memory_space<semaphore_mem>>
      %360 = tpu.memref_squeeze %359 : memref<1x!tpu.dma_semaphore, #tpu.memory_space<semaphore_mem>> -> memref<!tpu.dma_semaphore, #tpu.memory_space<semaphore_mem>>
      tpu.enqueue_dma source(%357 : memref<1x128xf32, #tpu.memory_space<any>>) target(%358 : memref<1x128xf32, #tpu.memory_space<vmem>>) target_semaphore(%360 : memref<!tpu.dma_semaphore, #tpu.memory_space<semaphore_mem>>)
    } else {
    }
    %c11_i32 = arith.constant 11 : i32
    %168 = arith.addi %2, %c11_i32 : i32
    %169 = arith.index_cast %168 : i32 to index
    %170 = memref.load %arg4[%169] : memref<32xi32, #tpu.memory_space<smem>>
    %c11_i32_67 = arith.constant 11 : i32
    %171 = arith.addi %2, %c11_i32_67 : i32
    %172 = arith.index_cast %171 : i32 to index
    %173 = memref.load %arg2[%172] : memref<32xi32, #tpu.memory_space<smem>>
    %c11_i32_68 = arith.constant 11 : i32
    %174 = arith.addi %2, %c11_i32_68 : i32
    %175 = arith.index_cast %174 : i32 to index
    %176 = memref.load %arg3[%175] : memref<32xi32, #tpu.memory_space<smem>>
    %c0_i32_69 = arith.constant 0 : i32
    %177 = arith.cmpi ne, %170, %c0_i32_69 : i32
    %178 = arith.extui %177 : i1 to i32
    %c0_i32_70 = arith.constant 0 : i32
    %179 = arith.cmpi ne, %178, %c0_i32_70 : i32
    scf.if %179 {
      %c11_i32_199 = arith.constant 11 : i32
      %c0_i32_200 = arith.constant 0 : i32
      %357 = tpu.memref_slice %arg10[%176, %c0_i32_200] : memref<8x128xf32, #tpu.memory_space<any>> -> memref<1x128xf32, #tpu.memory_space<any>>
      %c11_i32_201 = arith.constant 11 : i32
      %c0_i32_202 = arith.constant 0 : i32
      %358 = tpu.memref_slice %arg12[%c11_i32_201, %c0_i32_202] : memref<16x128xf32, #tpu.memory_space<vmem>> -> memref<1x128xf32, #tpu.memory_space<vmem>>
      %359 = tpu.memref_slice %arg13[%c11_i32_199] : memref<16x!tpu.dma_semaphore, #tpu.memory_space<semaphore_mem>> -> memref<1x!tpu.dma_semaphore, #tpu.memory_space<semaphore_mem>>
      %360 = tpu.memref_squeeze %359 : memref<1x!tpu.dma_semaphore, #tpu.memory_space<semaphore_mem>> -> memref<!tpu.dma_semaphore, #tpu.memory_space<semaphore_mem>>
      tpu.enqueue_dma source(%357 : memref<1x128xf32, #tpu.memory_space<any>>) target(%358 : memref<1x128xf32, #tpu.memory_space<vmem>>) target_semaphore(%360 : memref<!tpu.dma_semaphore, #tpu.memory_space<semaphore_mem>>)
    } else {
    }
    %c0_i32_71 = arith.constant 0 : i32
    %180 = arith.cmpi eq, %170, %c0_i32_71 : i32
    %181 = arith.extui %180 : i1 to i32
    %c0_i32_72 = arith.constant 0 : i32
    %182 = arith.cmpi ne, %181, %c0_i32_72 : i32
    scf.if %182 {
      %c11_i32_199 = arith.constant 11 : i32
      %c0_i32_200 = arith.constant 0 : i32
      %357 = tpu.memref_slice %arg9[%173, %c0_i32_200] : memref<128x128xf32, #tpu.memory_space<any>> -> memref<1x128xf32, #tpu.memory_space<any>>
      %c11_i32_201 = arith.constant 11 : i32
      %c0_i32_202 = arith.constant 0 : i32
      %358 = tpu.memref_slice %arg12[%c11_i32_201, %c0_i32_202] : memref<16x128xf32, #tpu.memory_space<vmem>> -> memref<1x128xf32, #tpu.memory_space<vmem>>
      %359 = tpu.memref_slice %arg13[%c11_i32_199] : memref<16x!tpu.dma_semaphore, #tpu.memory_space<semaphore_mem>> -> memref<1x!tpu.dma_semaphore, #tpu.memory_space<semaphore_mem>>
      %360 = tpu.memref_squeeze %359 : memref<1x!tpu.dma_semaphore, #tpu.memory_space<semaphore_mem>> -> memref<!tpu.dma_semaphore, #tpu.memory_space<semaphore_mem>>
      tpu.enqueue_dma source(%357 : memref<1x128xf32, #tpu.memory_space<any>>) target(%358 : memref<1x128xf32, #tpu.memory_space<vmem>>) target_semaphore(%360 : memref<!tpu.dma_semaphore, #tpu.memory_space<semaphore_mem>>)
    } else {
    }
    %c12_i32 = arith.constant 12 : i32
    %183 = arith.addi %2, %c12_i32 : i32
    %184 = arith.index_cast %183 : i32 to index
    %185 = memref.load %arg4[%184] : memref<32xi32, #tpu.memory_space<smem>>
    %c12_i32_73 = arith.constant 12 : i32
    %186 = arith.addi %2, %c12_i32_73 : i32
    %187 = arith.index_cast %186 : i32 to index
    %188 = memref.load %arg2[%187] : memref<32xi32, #tpu.memory_space<smem>>
    %c12_i32_74 = arith.constant 12 : i32
    %189 = arith.addi %2, %c12_i32_74 : i32
    %190 = arith.index_cast %189 : i32 to index
    %191 = memref.load %arg3[%190] : memref<32xi32, #tpu.memory_space<smem>>
    %c0_i32_75 = arith.constant 0 : i32
    %192 = arith.cmpi ne, %185, %c0_i32_75 : i32
    %193 = arith.extui %192 : i1 to i32
    %c0_i32_76 = arith.constant 0 : i32
    %194 = arith.cmpi ne, %193, %c0_i32_76 : i32
    scf.if %194 {
      %c12_i32_199 = arith.constant 12 : i32
      %c0_i32_200 = arith.constant 0 : i32
      %357 = tpu.memref_slice %arg10[%191, %c0_i32_200] : memref<8x128xf32, #tpu.memory_space<any>> -> memref<1x128xf32, #tpu.memory_space<any>>
      %c12_i32_201 = arith.constant 12 : i32
      %c0_i32_202 = arith.constant 0 : i32
      %358 = tpu.memref_slice %arg12[%c12_i32_201, %c0_i32_202] : memref<16x128xf32, #tpu.memory_space<vmem>> -> memref<1x128xf32, #tpu.memory_space<vmem>>
      %359 = tpu.memref_slice %arg13[%c12_i32_199] : memref<16x!tpu.dma_semaphore, #tpu.memory_space<semaphore_mem>> -> memref<1x!tpu.dma_semaphore, #tpu.memory_space<semaphore_mem>>
      %360 = tpu.memref_squeeze %359 : memref<1x!tpu.dma_semaphore, #tpu.memory_space<semaphore_mem>> -> memref<!tpu.dma_semaphore, #tpu.memory_space<semaphore_mem>>
      tpu.enqueue_dma source(%357 : memref<1x128xf32, #tpu.memory_space<any>>) target(%358 : memref<1x128xf32, #tpu.memory_space<vmem>>) target_semaphore(%360 : memref<!tpu.dma_semaphore, #tpu.memory_space<semaphore_mem>>)
    } else {
    }
    %c0_i32_77 = arith.constant 0 : i32
    %195 = arith.cmpi eq, %185, %c0_i32_77 : i32
    %196 = arith.extui %195 : i1 to i32
    %c0_i32_78 = arith.constant 0 : i32
    %197 = arith.cmpi ne, %196, %c0_i32_78 : i32
    scf.if %197 {
      %c12_i32_199 = arith.constant 12 : i32
      %c0_i32_200 = arith.constant 0 : i32
      %357 = tpu.memref_slice %arg9[%188, %c0_i32_200] : memref<128x128xf32, #tpu.memory_space<any>> -> memref<1x128xf32, #tpu.memory_space<any>>
      %c12_i32_201 = arith.constant 12 : i32
      %c0_i32_202 = arith.constant 0 : i32
      %358 = tpu.memref_slice %arg12[%c12_i32_201, %c0_i32_202] : memref<16x128xf32, #tpu.memory_space<vmem>> -> memref<1x128xf32, #tpu.memory_space<vmem>>
      %359 = tpu.memref_slice %arg13[%c12_i32_199] : memref<16x!tpu.dma_semaphore, #tpu.memory_space<semaphore_mem>> -> memref<1x!tpu.dma_semaphore, #tpu.memory_space<semaphore_mem>>
      %360 = tpu.memref_squeeze %359 : memref<1x!tpu.dma_semaphore, #tpu.memory_space<semaphore_mem>> -> memref<!tpu.dma_semaphore, #tpu.memory_space<semaphore_mem>>
      tpu.enqueue_dma source(%357 : memref<1x128xf32, #tpu.memory_space<any>>) target(%358 : memref<1x128xf32, #tpu.memory_space<vmem>>) target_semaphore(%360 : memref<!tpu.dma_semaphore, #tpu.memory_space<semaphore_mem>>)
    } else {
    }
    %c13_i32 = arith.constant 13 : i32
    %198 = arith.addi %2, %c13_i32 : i32
    %199 = arith.index_cast %198 : i32 to index
    %200 = memref.load %arg4[%199] : memref<32xi32, #tpu.memory_space<smem>>
    %c13_i32_79 = arith.constant 13 : i32
    %201 = arith.addi %2, %c13_i32_79 : i32
    %202 = arith.index_cast %201 : i32 to index
    %203 = memref.load %arg2[%202] : memref<32xi32, #tpu.memory_space<smem>>
    %c13_i32_80 = arith.constant 13 : i32
    %204 = arith.addi %2, %c13_i32_80 : i32
    %205 = arith.index_cast %204 : i32 to index
    %206 = memref.load %arg3[%205] : memref<32xi32, #tpu.memory_space<smem>>
    %c0_i32_81 = arith.constant 0 : i32
    %207 = arith.cmpi ne, %200, %c0_i32_81 : i32
    %208 = arith.extui %207 : i1 to i32
    %c0_i32_82 = arith.constant 0 : i32
    %209 = arith.cmpi ne, %208, %c0_i32_82 : i32
    scf.if %209 {
      %c13_i32_199 = arith.constant 13 : i32
      %c0_i32_200 = arith.constant 0 : i32
      %357 = tpu.memref_slice %arg10[%206, %c0_i32_200] : memref<8x128xf32, #tpu.memory_space<any>> -> memref<1x128xf32, #tpu.memory_space<any>>
      %c13_i32_201 = arith.constant 13 : i32
      %c0_i32_202 = arith.constant 0 : i32
      %358 = tpu.memref_slice %arg12[%c13_i32_201, %c0_i32_202] : memref<16x128xf32, #tpu.memory_space<vmem>> -> memref<1x128xf32, #tpu.memory_space<vmem>>
      %359 = tpu.memref_slice %arg13[%c13_i32_199] : memref<16x!tpu.dma_semaphore, #tpu.memory_space<semaphore_mem>> -> memref<1x!tpu.dma_semaphore, #tpu.memory_space<semaphore_mem>>
      %360 = tpu.memref_squeeze %359 : memref<1x!tpu.dma_semaphore, #tpu.memory_space<semaphore_mem>> -> memref<!tpu.dma_semaphore, #tpu.memory_space<semaphore_mem>>
      tpu.enqueue_dma source(%357 : memref<1x128xf32, #tpu.memory_space<any>>) target(%358 : memref<1x128xf32, #tpu.memory_space<vmem>>) target_semaphore(%360 : memref<!tpu.dma_semaphore, #tpu.memory_space<semaphore_mem>>)
    } else {
    }
    %c0_i32_83 = arith.constant 0 : i32
    %210 = arith.cmpi eq, %200, %c0_i32_83 : i32
    %211 = arith.extui %210 : i1 to i32
    %c0_i32_84 = arith.constant 0 : i32
    %212 = arith.cmpi ne, %211, %c0_i32_84 : i32
    scf.if %212 {
      %c13_i32_199 = arith.constant 13 : i32
      %c0_i32_200 = arith.constant 0 : i32
      %357 = tpu.memref_slice %arg9[%203, %c0_i32_200] : memref<128x128xf32, #tpu.memory_space<any>> -> memref<1x128xf32, #tpu.memory_space<any>>
      %c13_i32_201 = arith.constant 13 : i32
      %c0_i32_202 = arith.constant 0 : i32
      %358 = tpu.memref_slice %arg12[%c13_i32_201, %c0_i32_202] : memref<16x128xf32, #tpu.memory_space<vmem>> -> memref<1x128xf32, #tpu.memory_space<vmem>>
      %359 = tpu.memref_slice %arg13[%c13_i32_199] : memref<16x!tpu.dma_semaphore, #tpu.memory_space<semaphore_mem>> -> memref<1x!tpu.dma_semaphore, #tpu.memory_space<semaphore_mem>>
      %360 = tpu.memref_squeeze %359 : memref<1x!tpu.dma_semaphore, #tpu.memory_space<semaphore_mem>> -> memref<!tpu.dma_semaphore, #tpu.memory_space<semaphore_mem>>
      tpu.enqueue_dma source(%357 : memref<1x128xf32, #tpu.memory_space<any>>) target(%358 : memref<1x128xf32, #tpu.memory_space<vmem>>) target_semaphore(%360 : memref<!tpu.dma_semaphore, #tpu.memory_space<semaphore_mem>>)
    } else {
    }
    %c14_i32 = arith.constant 14 : i32
    %213 = arith.addi %2, %c14_i32 : i32
    %214 = arith.index_cast %213 : i32 to index
    %215 = memref.load %arg4[%214] : memref<32xi32, #tpu.memory_space<smem>>
    %c14_i32_85 = arith.constant 14 : i32
    %216 = arith.addi %2, %c14_i32_85 : i32
    %217 = arith.index_cast %216 : i32 to index
    %218 = memref.load %arg2[%217] : memref<32xi32, #tpu.memory_space<smem>>
    %c14_i32_86 = arith.constant 14 : i32
    %219 = arith.addi %2, %c14_i32_86 : i32
    %220 = arith.index_cast %219 : i32 to index
    %221 = memref.load %arg3[%220] : memref<32xi32, #tpu.memory_space<smem>>
    %c0_i32_87 = arith.constant 0 : i32
    %222 = arith.cmpi ne, %215, %c0_i32_87 : i32
    %223 = arith.extui %222 : i1 to i32
    %c0_i32_88 = arith.constant 0 : i32
    %224 = arith.cmpi ne, %223, %c0_i32_88 : i32
    scf.if %224 {
      %c14_i32_199 = arith.constant 14 : i32
      %c0_i32_200 = arith.constant 0 : i32
      %357 = tpu.memref_slice %arg10[%221, %c0_i32_200] : memref<8x128xf32, #tpu.memory_space<any>> -> memref<1x128xf32, #tpu.memory_space<any>>
      %c14_i32_201 = arith.constant 14 : i32
      %c0_i32_202 = arith.constant 0 : i32
      %358 = tpu.memref_slice %arg12[%c14_i32_201, %c0_i32_202] : memref<16x128xf32, #tpu.memory_space<vmem>> -> memref<1x128xf32, #tpu.memory_space<vmem>>
      %359 = tpu.memref_slice %arg13[%c14_i32_199] : memref<16x!tpu.dma_semaphore, #tpu.memory_space<semaphore_mem>> -> memref<1x!tpu.dma_semaphore, #tpu.memory_space<semaphore_mem>>
      %360 = tpu.memref_squeeze %359 : memref<1x!tpu.dma_semaphore, #tpu.memory_space<semaphore_mem>> -> memref<!tpu.dma_semaphore, #tpu.memory_space<semaphore_mem>>
      tpu.enqueue_dma source(%357 : memref<1x128xf32, #tpu.memory_space<any>>) target(%358 : memref<1x128xf32, #tpu.memory_space<vmem>>) target_semaphore(%360 : memref<!tpu.dma_semaphore, #tpu.memory_space<semaphore_mem>>)
    } else {
    }
    %c0_i32_89 = arith.constant 0 : i32
    %225 = arith.cmpi eq, %215, %c0_i32_89 : i32
    %226 = arith.extui %225 : i1 to i32
    %c0_i32_90 = arith.constant 0 : i32
    %227 = arith.cmpi ne, %226, %c0_i32_90 : i32
    scf.if %227 {
      %c14_i32_199 = arith.constant 14 : i32
      %c0_i32_200 = arith.constant 0 : i32
      %357 = tpu.memref_slice %arg9[%218, %c0_i32_200] : memref<128x128xf32, #tpu.memory_space<any>> -> memref<1x128xf32, #tpu.memory_space<any>>
      %c14_i32_201 = arith.constant 14 : i32
      %c0_i32_202 = arith.constant 0 : i32
      %358 = tpu.memref_slice %arg12[%c14_i32_201, %c0_i32_202] : memref<16x128xf32, #tpu.memory_space<vmem>> -> memref<1x128xf32, #tpu.memory_space<vmem>>
      %359 = tpu.memref_slice %arg13[%c14_i32_199] : memref<16x!tpu.dma_semaphore, #tpu.memory_space<semaphore_mem>> -> memref<1x!tpu.dma_semaphore, #tpu.memory_space<semaphore_mem>>
      %360 = tpu.memref_squeeze %359 : memref<1x!tpu.dma_semaphore, #tpu.memory_space<semaphore_mem>> -> memref<!tpu.dma_semaphore, #tpu.memory_space<semaphore_mem>>
      tpu.enqueue_dma source(%357 : memref<1x128xf32, #tpu.memory_space<any>>) target(%358 : memref<1x128xf32, #tpu.memory_space<vmem>>) target_semaphore(%360 : memref<!tpu.dma_semaphore, #tpu.memory_space<semaphore_mem>>)
    } else {
    }
    %c15_i32 = arith.constant 15 : i32
    %228 = arith.addi %2, %c15_i32 : i32
    %229 = arith.index_cast %228 : i32 to index
    %230 = memref.load %arg4[%229] : memref<32xi32, #tpu.memory_space<smem>>
    %c15_i32_91 = arith.constant 15 : i32
    %231 = arith.addi %2, %c15_i32_91 : i32
    %232 = arith.index_cast %231 : i32 to index
    %233 = memref.load %arg2[%232] : memref<32xi32, #tpu.memory_space<smem>>
    %c15_i32_92 = arith.constant 15 : i32
    %234 = arith.addi %2, %c15_i32_92 : i32
    %235 = arith.index_cast %234 : i32 to index
    %236 = memref.load %arg3[%235] : memref<32xi32, #tpu.memory_space<smem>>
    %c0_i32_93 = arith.constant 0 : i32
    %237 = arith.cmpi ne, %230, %c0_i32_93 : i32
    %238 = arith.extui %237 : i1 to i32
    %c0_i32_94 = arith.constant 0 : i32
    %239 = arith.cmpi ne, %238, %c0_i32_94 : i32
    scf.if %239 {
      %c15_i32_199 = arith.constant 15 : i32
      %c0_i32_200 = arith.constant 0 : i32
      %357 = tpu.memref_slice %arg10[%236, %c0_i32_200] : memref<8x128xf32, #tpu.memory_space<any>> -> memref<1x128xf32, #tpu.memory_space<any>>
      %c15_i32_201 = arith.constant 15 : i32
      %c0_i32_202 = arith.constant 0 : i32
      %358 = tpu.memref_slice %arg12[%c15_i32_201, %c0_i32_202] : memref<16x128xf32, #tpu.memory_space<vmem>> -> memref<1x128xf32, #tpu.memory_space<vmem>>
      %359 = tpu.memref_slice %arg13[%c15_i32_199] : memref<16x!tpu.dma_semaphore, #tpu.memory_space<semaphore_mem>> -> memref<1x!tpu.dma_semaphore, #tpu.memory_space<semaphore_mem>>
      %360 = tpu.memref_squeeze %359 : memref<1x!tpu.dma_semaphore, #tpu.memory_space<semaphore_mem>> -> memref<!tpu.dma_semaphore, #tpu.memory_space<semaphore_mem>>
      tpu.enqueue_dma source(%357 : memref<1x128xf32, #tpu.memory_space<any>>) target(%358 : memref<1x128xf32, #tpu.memory_space<vmem>>) target_semaphore(%360 : memref<!tpu.dma_semaphore, #tpu.memory_space<semaphore_mem>>)
    } else {
    }
    %c0_i32_95 = arith.constant 0 : i32
    %240 = arith.cmpi eq, %230, %c0_i32_95 : i32
    %241 = arith.extui %240 : i1 to i32
    %c0_i32_96 = arith.constant 0 : i32
    %242 = arith.cmpi ne, %241, %c0_i32_96 : i32
    scf.if %242 {
      %c15_i32_199 = arith.constant 15 : i32
      %c0_i32_200 = arith.constant 0 : i32
      %357 = tpu.memref_slice %arg9[%233, %c0_i32_200] : memref<128x128xf32, #tpu.memory_space<any>> -> memref<1x128xf32, #tpu.memory_space<any>>
      %c15_i32_201 = arith.constant 15 : i32
      %c0_i32_202 = arith.constant 0 : i32
      %358 = tpu.memref_slice %arg12[%c15_i32_201, %c0_i32_202] : memref<16x128xf32, #tpu.memory_space<vmem>> -> memref<1x128xf32, #tpu.memory_space<vmem>>
      %359 = tpu.memref_slice %arg13[%c15_i32_199] : memref<16x!tpu.dma_semaphore, #tpu.memory_space<semaphore_mem>> -> memref<1x!tpu.dma_semaphore, #tpu.memory_space<semaphore_mem>>
      %360 = tpu.memref_squeeze %359 : memref<1x!tpu.dma_semaphore, #tpu.memory_space<semaphore_mem>> -> memref<!tpu.dma_semaphore, #tpu.memory_space<semaphore_mem>>
      tpu.enqueue_dma source(%357 : memref<1x128xf32, #tpu.memory_space<any>>) target(%358 : memref<1x128xf32, #tpu.memory_space<vmem>>) target_semaphore(%360 : memref<!tpu.dma_semaphore, #tpu.memory_space<semaphore_mem>>)
    } else {
    }
    %c16_i32_97 = arith.constant 16 : i32
    %243 = arith.muli %arg1, %c16_i32_97 : i32
    %244 = tpu.iota {dimensions = array<i32: 0>} : vector<16x1xi32>
    %245 = vector.broadcast %243 : i32 to vector<16x1xi32>
    %246 = arith.addi %245, %244 : vector<16x1xi32>
    %c5_i32_98 = arith.constant 5 : i32
    %247 = vector.broadcast %c5_i32_98 : i32 to vector<16x1xi32>
    %248 = arith.cmpi sge, %246, %247 : vector<16x1xi32>
    %249 = arith.extui %248 : vector<16x1xi1> to vector<16x1xi32>
    %250 = arith.sitofp %249 : vector<16x1xi32> to vector<16x1xf32>
    %c0 = arith.constant 0 : index
    %c0_99 = arith.constant 0 : index
    %251 = vector.load %arg6[%c0, %c0_99] : memref<2x128xf32, #tpu.memory_space<vmem>>, vector<1x128xf32>
    %c1 = arith.constant 1 : index
    %c0_100 = arith.constant 0 : index
    %252 = vector.load %arg6[%c1, %c0_100] : memref<2x128xf32, #tpu.memory_space<vmem>>, vector<1x128xf32>
    %c0_101 = arith.constant 0 : index
    %c0_102 = arith.constant 0 : index
    %253 = vector.load %arg6[%c0_101, %c0_102] : memref<2x128xf32, #tpu.memory_space<vmem>>, vector<1x128xf32>
    %254 = arith.subf %252, %253 : vector<1x128xf32>
    %255 = vector.broadcast %250 : vector<16x1xf32> to vector<16x128xf32>
    %256 = vector.broadcast %254 : vector<1x128xf32> to vector<16x128xf32>
    %257 = arith.mulf %255, %256 : vector<16x128xf32>
    %258 = vector.broadcast %251 : vector<1x128xf32> to vector<16x128xf32>
    %259 = arith.addf %258, %257 : vector<16x128xf32>
    %c0_103 = arith.constant 0 : index
    %c0_104 = arith.constant 0 : index
    %260 = vector.load %arg5[%c0_103, %c0_104] : memref<16x128xf32, #tpu.memory_space<vmem>>, vector<16x128xf32>
    %261 = arith.addf %260, %259 : vector<16x128xf32>
    %c0_i32_105 = arith.constant 0 : i32
    %c0_i32_106 = arith.constant 0 : i32
    %c0_i32_107 = arith.constant 0 : i32
    %262 = tpu.memref_slice %arg9[%c0_i32_106, %c0_i32_107] : memref<128x128xf32, #tpu.memory_space<any>> -> memref<1x128xf32, #tpu.memory_space<any>>
    %c0_i32_108 = arith.constant 0 : i32
    %c0_i32_109 = arith.constant 0 : i32
    %263 = tpu.memref_slice %arg12[%c0_i32_108, %c0_i32_109] : memref<16x128xf32, #tpu.memory_space<vmem>> -> memref<1x128xf32, #tpu.memory_space<vmem>>
    %264 = tpu.memref_slice %arg13[%c0_i32_105] : memref<16x!tpu.dma_semaphore, #tpu.memory_space<semaphore_mem>> -> memref<1x!tpu.dma_semaphore, #tpu.memory_space<semaphore_mem>>
    %265 = tpu.memref_squeeze %264 : memref<1x!tpu.dma_semaphore, #tpu.memory_space<semaphore_mem>> -> memref<!tpu.dma_semaphore, #tpu.memory_space<semaphore_mem>>
    tpu.wait_dma2 semaphore(%265 : memref<!tpu.dma_semaphore, #tpu.memory_space<semaphore_mem>>) src(%262 : memref<1x128xf32, #tpu.memory_space<any>>) dst(%263 : memref<1x128xf32, #tpu.memory_space<vmem>>)
    %c1_i32_110 = arith.constant 1 : i32
    %c0_i32_111 = arith.constant 0 : i32
    %c0_i32_112 = arith.constant 0 : i32
    %266 = tpu.memref_slice %arg9[%c0_i32_111, %c0_i32_112] : memref<128x128xf32, #tpu.memory_space<any>> -> memref<1x128xf32, #tpu.memory_space<any>>
    %c1_i32_113 = arith.constant 1 : i32
    %c0_i32_114 = arith.constant 0 : i32
    %267 = tpu.memref_slice %arg12[%c1_i32_113, %c0_i32_114] : memref<16x128xf32, #tpu.memory_space<vmem>> -> memref<1x128xf32, #tpu.memory_space<vmem>>
    %268 = tpu.memref_slice %arg13[%c1_i32_110] : memref<16x!tpu.dma_semaphore, #tpu.memory_space<semaphore_mem>> -> memref<1x!tpu.dma_semaphore, #tpu.memory_space<semaphore_mem>>
    %269 = tpu.memref_squeeze %268 : memref<1x!tpu.dma_semaphore, #tpu.memory_space<semaphore_mem>> -> memref<!tpu.dma_semaphore, #tpu.memory_space<semaphore_mem>>
    tpu.wait_dma2 semaphore(%269 : memref<!tpu.dma_semaphore, #tpu.memory_space<semaphore_mem>>) src(%266 : memref<1x128xf32, #tpu.memory_space<any>>) dst(%267 : memref<1x128xf32, #tpu.memory_space<vmem>>)
    %c2_i32_115 = arith.constant 2 : i32
    %c0_i32_116 = arith.constant 0 : i32
    %c0_i32_117 = arith.constant 0 : i32
    %270 = tpu.memref_slice %arg9[%c0_i32_116, %c0_i32_117] : memref<128x128xf32, #tpu.memory_space<any>> -> memref<1x128xf32, #tpu.memory_space<any>>
    %c2_i32_118 = arith.constant 2 : i32
    %c0_i32_119 = arith.constant 0 : i32
    %271 = tpu.memref_slice %arg12[%c2_i32_118, %c0_i32_119] : memref<16x128xf32, #tpu.memory_space<vmem>> -> memref<1x128xf32, #tpu.memory_space<vmem>>
    %272 = tpu.memref_slice %arg13[%c2_i32_115] : memref<16x!tpu.dma_semaphore, #tpu.memory_space<semaphore_mem>> -> memref<1x!tpu.dma_semaphore, #tpu.memory_space<semaphore_mem>>
    %273 = tpu.memref_squeeze %272 : memref<1x!tpu.dma_semaphore, #tpu.memory_space<semaphore_mem>> -> memref<!tpu.dma_semaphore, #tpu.memory_space<semaphore_mem>>
    tpu.wait_dma2 semaphore(%273 : memref<!tpu.dma_semaphore, #tpu.memory_space<semaphore_mem>>) src(%270 : memref<1x128xf32, #tpu.memory_space<any>>) dst(%271 : memref<1x128xf32, #tpu.memory_space<vmem>>)
    %c3_i32_120 = arith.constant 3 : i32
    %c0_i32_121 = arith.constant 0 : i32
    %c0_i32_122 = arith.constant 0 : i32
    %274 = tpu.memref_slice %arg9[%c0_i32_121, %c0_i32_122] : memref<128x128xf32, #tpu.memory_space<any>> -> memref<1x128xf32, #tpu.memory_space<any>>
    %c3_i32_123 = arith.constant 3 : i32
    %c0_i32_124 = arith.constant 0 : i32
    %275 = tpu.memref_slice %arg12[%c3_i32_123, %c0_i32_124] : memref<16x128xf32, #tpu.memory_space<vmem>> -> memref<1x128xf32, #tpu.memory_space<vmem>>
    %276 = tpu.memref_slice %arg13[%c3_i32_120] : memref<16x!tpu.dma_semaphore, #tpu.memory_space<semaphore_mem>> -> memref<1x!tpu.dma_semaphore, #tpu.memory_space<semaphore_mem>>
    %277 = tpu.memref_squeeze %276 : memref<1x!tpu.dma_semaphore, #tpu.memory_space<semaphore_mem>> -> memref<!tpu.dma_semaphore, #tpu.memory_space<semaphore_mem>>
    tpu.wait_dma2 semaphore(%277 : memref<!tpu.dma_semaphore, #tpu.memory_space<semaphore_mem>>) src(%274 : memref<1x128xf32, #tpu.memory_space<any>>) dst(%275 : memref<1x128xf32, #tpu.memory_space<vmem>>)
    %c4_i32_125 = arith.constant 4 : i32
    %c0_i32_126 = arith.constant 0 : i32
    %c0_i32_127 = arith.constant 0 : i32
    %278 = tpu.memref_slice %arg9[%c0_i32_126, %c0_i32_127] : memref<128x128xf32, #tpu.memory_space<any>> -> memref<1x128xf32, #tpu.memory_space<any>>
    %c4_i32_128 = arith.constant 4 : i32
    %c0_i32_129 = arith.constant 0 : i32
    %279 = tpu.memref_slice %arg12[%c4_i32_128, %c0_i32_129] : memref<16x128xf32, #tpu.memory_space<vmem>> -> memref<1x128xf32, #tpu.memory_space<vmem>>
    %280 = tpu.memref_slice %arg13[%c4_i32_125] : memref<16x!tpu.dma_semaphore, #tpu.memory_space<semaphore_mem>> -> memref<1x!tpu.dma_semaphore, #tpu.memory_space<semaphore_mem>>
    %281 = tpu.memref_squeeze %280 : memref<1x!tpu.dma_semaphore, #tpu.memory_space<semaphore_mem>> -> memref<!tpu.dma_semaphore, #tpu.memory_space<semaphore_mem>>
    tpu.wait_dma2 semaphore(%281 : memref<!tpu.dma_semaphore, #tpu.memory_space<semaphore_mem>>) src(%278 : memref<1x128xf32, #tpu.memory_space<any>>) dst(%279 : memref<1x128xf32, #tpu.memory_space<vmem>>)
    %c5_i32_130 = arith.constant 5 : i32
    %c0_i32_131 = arith.constant 0 : i32
    %c0_i32_132 = arith.constant 0 : i32
    %282 = tpu.memref_slice %arg9[%c0_i32_131, %c0_i32_132] : memref<128x128xf32, #tpu.memory_space<any>> -> memref<1x128xf32, #tpu.memory_space<any>>
    %c5_i32_133 = arith.constant 5 : i32
    %c0_i32_134 = arith.constant 0 : i32
    %283 = tpu.memref_slice %arg12[%c5_i32_133, %c0_i32_134] : memref<16x128xf32, #tpu.memory_space<vmem>> -> memref<1x128xf32, #tpu.memory_space<vmem>>
    %284 = tpu.memref_slice %arg13[%c5_i32_130] : memref<16x!tpu.dma_semaphore, #tpu.memory_space<semaphore_mem>> -> memref<1x!tpu.dma_semaphore, #tpu.memory_space<semaphore_mem>>
    %285 = tpu.memref_squeeze %284 : memref<1x!tpu.dma_semaphore, #tpu.memory_space<semaphore_mem>> -> memref<!tpu.dma_semaphore, #tpu.memory_space<semaphore_mem>>
    tpu.wait_dma2 semaphore(%285 : memref<!tpu.dma_semaphore, #tpu.memory_space<semaphore_mem>>) src(%282 : memref<1x128xf32, #tpu.memory_space<any>>) dst(%283 : memref<1x128xf32, #tpu.memory_space<vmem>>)
    %c6_i32_135 = arith.constant 6 : i32
    %c0_i32_136 = arith.constant 0 : i32
    %c0_i32_137 = arith.constant 0 : i32
    %286 = tpu.memref_slice %arg9[%c0_i32_136, %c0_i32_137] : memref<128x128xf32, #tpu.memory_space<any>> -> memref<1x128xf32, #tpu.memory_space<any>>
    %c6_i32_138 = arith.constant 6 : i32
    %c0_i32_139 = arith.constant 0 : i32
    %287 = tpu.memref_slice %arg12[%c6_i32_138, %c0_i32_139] : memref<16x128xf32, #tpu.memory_space<vmem>> -> memref<1x128xf32, #tpu.memory_space<vmem>>
    %288 = tpu.memref_slice %arg13[%c6_i32_135] : memref<16x!tpu.dma_semaphore, #tpu.memory_space<semaphore_mem>> -> memref<1x!tpu.dma_semaphore, #tpu.memory_space<semaphore_mem>>
    %289 = tpu.memref_squeeze %288 : memref<1x!tpu.dma_semaphore, #tpu.memory_space<semaphore_mem>> -> memref<!tpu.dma_semaphore, #tpu.memory_space<semaphore_mem>>
    tpu.wait_dma2 semaphore(%289 : memref<!tpu.dma_semaphore, #tpu.memory_space<semaphore_mem>>) src(%286 : memref<1x128xf32, #tpu.memory_space<any>>) dst(%287 : memref<1x128xf32, #tpu.memory_space<vmem>>)
    %c7_i32_140 = arith.constant 7 : i32
    %c0_i32_141 = arith.constant 0 : i32
    %c0_i32_142 = arith.constant 0 : i32
    %290 = tpu.memref_slice %arg9[%c0_i32_141, %c0_i32_142] : memref<128x128xf32, #tpu.memory_space<any>> -> memref<1x128xf32, #tpu.memory_space<any>>
    %c7_i32_143 = arith.constant 7 : i32
    %c0_i32_144 = arith.constant 0 : i32
    %291 = tpu.memref_slice %arg12[%c7_i32_143, %c0_i32_144] : memref<16x128xf32, #tpu.memory_space<vmem>> -> memref<1x128xf32, #tpu.memory_space<vmem>>
    %292 = tpu.memref_slice %arg13[%c7_i32_140] : memref<16x!tpu.dma_semaphore, #tpu.memory_space<semaphore_mem>> -> memref<1x!tpu.dma_semaphore, #tpu.memory_space<semaphore_mem>>
    %293 = tpu.memref_squeeze %292 : memref<1x!tpu.dma_semaphore, #tpu.memory_space<semaphore_mem>> -> memref<!tpu.dma_semaphore, #tpu.memory_space<semaphore_mem>>
    tpu.wait_dma2 semaphore(%293 : memref<!tpu.dma_semaphore, #tpu.memory_space<semaphore_mem>>) src(%290 : memref<1x128xf32, #tpu.memory_space<any>>) dst(%291 : memref<1x128xf32, #tpu.memory_space<vmem>>)
    %c8_i32_145 = arith.constant 8 : i32
    %c0_i32_146 = arith.constant 0 : i32
    %c0_i32_147 = arith.constant 0 : i32
    %294 = tpu.memref_slice %arg9[%c0_i32_146, %c0_i32_147] : memref<128x128xf32, #tpu.memory_space<any>> -> memref<1x128xf32, #tpu.memory_space<any>>
    %c8_i32_148 = arith.constant 8 : i32
    %c0_i32_149 = arith.constant 0 : i32
    %295 = tpu.memref_slice %arg12[%c8_i32_148, %c0_i32_149] : memref<16x128xf32, #tpu.memory_space<vmem>> -> memref<1x128xf32, #tpu.memory_space<vmem>>
    %296 = tpu.memref_slice %arg13[%c8_i32_145] : memref<16x!tpu.dma_semaphore, #tpu.memory_space<semaphore_mem>> -> memref<1x!tpu.dma_semaphore, #tpu.memory_space<semaphore_mem>>
    %297 = tpu.memref_squeeze %296 : memref<1x!tpu.dma_semaphore, #tpu.memory_space<semaphore_mem>> -> memref<!tpu.dma_semaphore, #tpu.memory_space<semaphore_mem>>
    tpu.wait_dma2 semaphore(%297 : memref<!tpu.dma_semaphore, #tpu.memory_space<semaphore_mem>>) src(%294 : memref<1x128xf32, #tpu.memory_space<any>>) dst(%295 : memref<1x128xf32, #tpu.memory_space<vmem>>)
    %c9_i32_150 = arith.constant 9 : i32
    %c0_i32_151 = arith.constant 0 : i32
    %c0_i32_152 = arith.constant 0 : i32
    %298 = tpu.memref_slice %arg9[%c0_i32_151, %c0_i32_152] : memref<128x128xf32, #tpu.memory_space<any>> -> memref<1x128xf32, #tpu.memory_space<any>>
    %c9_i32_153 = arith.constant 9 : i32
    %c0_i32_154 = arith.constant 0 : i32
    %299 = tpu.memref_slice %arg12[%c9_i32_153, %c0_i32_154] : memref<16x128xf32, #tpu.memory_space<vmem>> -> memref<1x128xf32, #tpu.memory_space<vmem>>
    %300 = tpu.memref_slice %arg13[%c9_i32_150] : memref<16x!tpu.dma_semaphore, #tpu.memory_space<semaphore_mem>> -> memref<1x!tpu.dma_semaphore, #tpu.memory_space<semaphore_mem>>
    %301 = tpu.memref_squeeze %300 : memref<1x!tpu.dma_semaphore, #tpu.memory_space<semaphore_mem>> -> memref<!tpu.dma_semaphore, #tpu.memory_space<semaphore_mem>>
    tpu.wait_dma2 semaphore(%301 : memref<!tpu.dma_semaphore, #tpu.memory_space<semaphore_mem>>) src(%298 : memref<1x128xf32, #tpu.memory_space<any>>) dst(%299 : memref<1x128xf32, #tpu.memory_space<vmem>>)
    %c10_i32_155 = arith.constant 10 : i32
    %c0_i32_156 = arith.constant 0 : i32
    %c0_i32_157 = arith.constant 0 : i32
    %302 = tpu.memref_slice %arg9[%c0_i32_156, %c0_i32_157] : memref<128x128xf32, #tpu.memory_space<any>> -> memref<1x128xf32, #tpu.memory_space<any>>
    %c10_i32_158 = arith.constant 10 : i32
    %c0_i32_159 = arith.constant 0 : i32
    %303 = tpu.memref_slice %arg12[%c10_i32_158, %c0_i32_159] : memref<16x128xf32, #tpu.memory_space<vmem>> -> memref<1x128xf32, #tpu.memory_space<vmem>>
    %304 = tpu.memref_slice %arg13[%c10_i32_155] : memref<16x!tpu.dma_semaphore, #tpu.memory_space<semaphore_mem>> -> memref<1x!tpu.dma_semaphore, #tpu.memory_space<semaphore_mem>>
    %305 = tpu.memref_squeeze %304 : memref<1x!tpu.dma_semaphore, #tpu.memory_space<semaphore_mem>> -> memref<!tpu.dma_semaphore, #tpu.memory_space<semaphore_mem>>
    tpu.wait_dma2 semaphore(%305 : memref<!tpu.dma_semaphore, #tpu.memory_space<semaphore_mem>>) src(%302 : memref<1x128xf32, #tpu.memory_space<any>>) dst(%303 : memref<1x128xf32, #tpu.memory_space<vmem>>)
    %c11_i32_160 = arith.constant 11 : i32
    %c0_i32_161 = arith.constant 0 : i32
    %c0_i32_162 = arith.constant 0 : i32
    %306 = tpu.memref_slice %arg9[%c0_i32_161, %c0_i32_162] : memref<128x128xf32, #tpu.memory_space<any>> -> memref<1x128xf32, #tpu.memory_space<any>>
    %c11_i32_163 = arith.constant 11 : i32
    %c0_i32_164 = arith.constant 0 : i32
    %307 = tpu.memref_slice %arg12[%c11_i32_163, %c0_i32_164] : memref<16x128xf32, #tpu.memory_space<vmem>> -> memref<1x128xf32, #tpu.memory_space<vmem>>
    %308 = tpu.memref_slice %arg13[%c11_i32_160] : memref<16x!tpu.dma_semaphore, #tpu.memory_space<semaphore_mem>> -> memref<1x!tpu.dma_semaphore, #tpu.memory_space<semaphore_mem>>
    %309 = tpu.memref_squeeze %308 : memref<1x!tpu.dma_semaphore, #tpu.memory_space<semaphore_mem>> -> memref<!tpu.dma_semaphore, #tpu.memory_space<semaphore_mem>>
    tpu.wait_dma2 semaphore(%309 : memref<!tpu.dma_semaphore, #tpu.memory_space<semaphore_mem>>) src(%306 : memref<1x128xf32, #tpu.memory_space<any>>) dst(%307 : memref<1x128xf32, #tpu.memory_space<vmem>>)
    %c12_i32_165 = arith.constant 12 : i32
    %c0_i32_166 = arith.constant 0 : i32
    %c0_i32_167 = arith.constant 0 : i32
    %310 = tpu.memref_slice %arg9[%c0_i32_166, %c0_i32_167] : memref<128x128xf32, #tpu.memory_space<any>> -> memref<1x128xf32, #tpu.memory_space<any>>
    %c12_i32_168 = arith.constant 12 : i32
    %c0_i32_169 = arith.constant 0 : i32
    %311 = tpu.memref_slice %arg12[%c12_i32_168, %c0_i32_169] : memref<16x128xf32, #tpu.memory_space<vmem>> -> memref<1x128xf32, #tpu.memory_space<vmem>>
    %312 = tpu.memref_slice %arg13[%c12_i32_165] : memref<16x!tpu.dma_semaphore, #tpu.memory_space<semaphore_mem>> -> memref<1x!tpu.dma_semaphore, #tpu.memory_space<semaphore_mem>>
    %313 = tpu.memref_squeeze %312 : memref<1x!tpu.dma_semaphore, #tpu.memory_space<semaphore_mem>> -> memref<!tpu.dma_semaphore, #tpu.memory_space<semaphore_mem>>
    tpu.wait_dma2 semaphore(%313 : memref<!tpu.dma_semaphore, #tpu.memory_space<semaphore_mem>>) src(%310 : memref<1x128xf32, #tpu.memory_space<any>>) dst(%311 : memref<1x128xf32, #tpu.memory_space<vmem>>)
    %c13_i32_170 = arith.constant 13 : i32
    %c0_i32_171 = arith.constant 0 : i32
    %c0_i32_172 = arith.constant 0 : i32
    %314 = tpu.memref_slice %arg9[%c0_i32_171, %c0_i32_172] : memref<128x128xf32, #tpu.memory_space<any>> -> memref<1x128xf32, #tpu.memory_space<any>>
    %c13_i32_173 = arith.constant 13 : i32
    %c0_i32_174 = arith.constant 0 : i32
    %315 = tpu.memref_slice %arg12[%c13_i32_173, %c0_i32_174] : memref<16x128xf32, #tpu.memory_space<vmem>> -> memref<1x128xf32, #tpu.memory_space<vmem>>
    %316 = tpu.memref_slice %arg13[%c13_i32_170] : memref<16x!tpu.dma_semaphore, #tpu.memory_space<semaphore_mem>> -> memref<1x!tpu.dma_semaphore, #tpu.memory_space<semaphore_mem>>
    %317 = tpu.memref_squeeze %316 : memref<1x!tpu.dma_semaphore, #tpu.memory_space<semaphore_mem>> -> memref<!tpu.dma_semaphore, #tpu.memory_space<semaphore_mem>>
    tpu.wait_dma2 semaphore(%317 : memref<!tpu.dma_semaphore, #tpu.memory_space<semaphore_mem>>) src(%314 : memref<1x128xf32, #tpu.memory_space<any>>) dst(%315 : memref<1x128xf32, #tpu.memory_space<vmem>>)
    %c14_i32_175 = arith.constant 14 : i32
    %c0_i32_176 = arith.constant 0 : i32
    %c0_i32_177 = arith.constant 0 : i32
    %318 = tpu.memref_slice %arg9[%c0_i32_176, %c0_i32_177] : memref<128x128xf32, #tpu.memory_space<any>> -> memref<1x128xf32, #tpu.memory_space<any>>
    %c14_i32_178 = arith.constant 14 : i32
    %c0_i32_179 = arith.constant 0 : i32
    %319 = tpu.memref_slice %arg12[%c14_i32_178, %c0_i32_179] : memref<16x128xf32, #tpu.memory_space<vmem>> -> memref<1x128xf32, #tpu.memory_space<vmem>>
    %320 = tpu.memref_slice %arg13[%c14_i32_175] : memref<16x!tpu.dma_semaphore, #tpu.memory_space<semaphore_mem>> -> memref<1x!tpu.dma_semaphore, #tpu.memory_space<semaphore_mem>>
    %321 = tpu.memref_squeeze %320 : memref<1x!tpu.dma_semaphore, #tpu.memory_space<semaphore_mem>> -> memref<!tpu.dma_semaphore, #tpu.memory_space<semaphore_mem>>
    tpu.wait_dma2 semaphore(%321 : memref<!tpu.dma_semaphore, #tpu.memory_space<semaphore_mem>>) src(%318 : memref<1x128xf32, #tpu.memory_space<any>>) dst(%319 : memref<1x128xf32, #tpu.memory_space<vmem>>)
    %c15_i32_180 = arith.constant 15 : i32
    %c0_i32_181 = arith.constant 0 : i32
    %c0_i32_182 = arith.constant 0 : i32
    %322 = tpu.memref_slice %arg9[%c0_i32_181, %c0_i32_182] : memref<128x128xf32, #tpu.memory_space<any>> -> memref<1x128xf32, #tpu.memory_space<any>>
    %c15_i32_183 = arith.constant 15 : i32
    %c0_i32_184 = arith.constant 0 : i32
    %323 = tpu.memref_slice %arg12[%c15_i32_183, %c0_i32_184] : memref<16x128xf32, #tpu.memory_space<vmem>> -> memref<1x128xf32, #tpu.memory_space<vmem>>
    %324 = tpu.memref_slice %arg13[%c15_i32_180] : memref<16x!tpu.dma_semaphore, #tpu.memory_space<semaphore_mem>> -> memref<1x!tpu.dma_semaphore, #tpu.memory_space<semaphore_mem>>
    %325 = tpu.memref_squeeze %324 : memref<1x!tpu.dma_semaphore, #tpu.memory_space<semaphore_mem>> -> memref<!tpu.dma_semaphore, #tpu.memory_space<semaphore_mem>>
    tpu.wait_dma2 semaphore(%325 : memref<!tpu.dma_semaphore, #tpu.memory_space<semaphore_mem>>) src(%322 : memref<1x128xf32, #tpu.memory_space<any>>) dst(%323 : memref<1x128xf32, #tpu.memory_space<vmem>>)
    %c0_185 = arith.constant 0 : index
    %c0_186 = arith.constant 0 : index
    %326 = vector.load %arg12[%c0_185, %c0_186] : memref<16x128xf32, #tpu.memory_space<vmem>>, vector<16x128xf32>
    %327 = arith.addf %326, %261 : vector<16x128xf32>
    %cst = arith.constant dense<0.000000e+00> : vector<16xf32>
    %328 = vector.multi_reduction <add>, %327, %cst [1] : vector<16x128xf32> to vector<16xf32>
    %329 = vector.shape_cast %328 : vector<16xf32> to vector<16x1xf32>
    %330 = arith.mulf %327, %327 : vector<16x128xf32>
    %cst_187 = arith.constant dense<0.000000e+00> : vector<16xf32>
    %331 = vector.multi_reduction <add>, %330, %cst_187 [1] : vector<16x128xf32> to vector<16xf32>
    %332 = vector.shape_cast %331 : vector<16xf32> to vector<16x1xf32>
    %cst_188 = arith.constant 7.812500e-03 : f32
    %333 = vector.broadcast %cst_188 : f32 to vector<16x1xf32>
    %334 = arith.mulf %329, %333 : vector<16x1xf32>
    %cst_189 = arith.constant 7.812500e-03 : f32
    %335 = vector.broadcast %cst_189 : f32 to vector<16x1xf32>
    %336 = arith.mulf %332, %335 : vector<16x1xf32>
    %337 = arith.mulf %334, %334 : vector<16x1xf32>
    %338 = arith.subf %336, %337 : vector<16x1xf32>
    %cst_190 = arith.constant 0.000000e+00 : f32
    %339 = vector.broadcast %cst_190 : f32 to vector<16x1xf32>
    %340 = arith.maximumf %338, %339 : vector<16x1xf32>
    %341 = vector.broadcast %334 : vector<16x1xf32> to vector<16x128xf32>
    %342 = arith.subf %327, %341 : vector<16x128xf32>
    %cst_191 = arith.constant 9.99999996E-13 : f32
    %343 = vector.broadcast %cst_191 : f32 to vector<16x1xf32>
    %344 = arith.addf %340, %343 : vector<16x1xf32>
    %345 = math.rsqrt %344 : vector<16x1xf32>
    %346 = vector.broadcast %345 : vector<16x1xf32> to vector<16x128xf32>
    %347 = arith.mulf %342, %346 : vector<16x128xf32>
    %c0_192 = arith.constant 0 : index
    %c0_193 = arith.constant 0 : index
    %348 = vector.load %arg7[%c0_192, %c0_193] : memref<1x128xf32, #tpu.memory_space<vmem>>, vector<1x128xf32>
    %349 = vector.broadcast %348 : vector<1x128xf32> to vector<16x128xf32>
    %350 = arith.mulf %347, %349 : vector<16x128xf32>
    %c0_194 = arith.constant 0 : index
    %c0_195 = arith.constant 0 : index
    %351 = vector.load %arg8[%c0_194, %c0_195] : memref<1x128xf32, #tpu.memory_space<vmem>>, vector<1x128xf32>
    %352 = vector.broadcast %351 : vector<1x128xf32> to vector<16x128xf32>
    %353 = arith.addf %350, %352 : vector<16x128xf32>
    %c0_196 = arith.constant 0 : index
    %c0_197 = arith.constant 0 : index
    %c0_198 = arith.constant 0 : index
    %354 = vector.load %arg11[%c0_196, %c0_197, %c0_198] : memref<1x16x128xf32, #tpu.memory_space<vmem>>, vector<1x16x128xf32>
    %355 = vector.shape_cast %354 : vector<1x16x128xf32> to vector<16x128xf32>
    %356 = vector.shape_cast %353 : vector<16x128xf32> to vector<1x16x128xf32>
    tpu.vector_store %arg11[%c0_196, %c0_197, %c0_198], %356 {strides = array<i32>} : memref<1x16x128xf32, #tpu.memory_space<vmem>>, vector<1x16x128xf32>,
    return
  }
  func.func @transform_0(%arg0: i32, %arg1: i32, %arg2: memref<32xi32, #tpu.memory_space<smem>>, %arg3: memref<32xi32, #tpu.memory_space<smem>>, %arg4: memref<32xi32, #tpu.memory_space<smem>>) -> (i32, i32) {
    %c0_i32 = arith.constant 0 : i32
    %c0_i32_0 = arith.constant 0 : i32
    return %arg1, %c0_i32 : i32, i32
  }
  func.func @transform_1(%arg0: i32, %arg1: i32, %arg2: memref<32xi32, #tpu.memory_space<smem>>, %arg3: memref<32xi32, #tpu.memory_space<smem>>, %arg4: memref<32xi32, #tpu.memory_space<smem>>) -> (i32, i32) {
    %c0_i32 = arith.constant 0 : i32
    %c0_i32_0 = arith.constant 0 : i32
    %c0_i32_1 = arith.constant 0 : i32
    return %c0_i32, %c0_i32_0 : i32, i32
  }
  func.func @transform_2(%arg0: i32, %arg1: i32, %arg2: memref<32xi32, #tpu.memory_space<smem>>, %arg3: memref<32xi32, #tpu.memory_space<smem>>, %arg4: memref<32xi32, #tpu.memory_space<smem>>) -> (i32, i32) {
    %c0_i32 = arith.constant 0 : i32
    %c0_i32_0 = arith.constant 0 : i32
    %c0_i32_1 = arith.constant 0 : i32
    return %c0_i32, %c0_i32_0 : i32, i32
  }
  func.func @transform_3(%arg0: i32, %arg1: i32, %arg2: memref<32xi32, #tpu.memory_space<smem>>, %arg3: memref<32xi32, #tpu.memory_space<smem>>, %arg4: memref<32xi32, #tpu.memory_space<smem>>) -> (i32, i32) {
    %c0_i32 = arith.constant 0 : i32
    %c0_i32_0 = arith.constant 0 : i32
    %c0_i32_1 = arith.constant 0 : i32
    return %c0_i32, %c0_i32_0 : i32, i32
  }
  func.func @transform_6(%arg0: i32, %arg1: i32, %arg2: memref<32xi32, #tpu.memory_space<smem>>, %arg3: memref<32xi32, #tpu.memory_space<smem>>, %arg4: memref<32xi32, #tpu.memory_space<smem>>) -> (i32, i32, i32) {
    %c0_i32 = arith.constant 0 : i32
    %c0_i32_0 = arith.constant 0 : i32
    return %arg0, %arg1, %c0_i32 : i32, i32, i32
  }
}

</mosaic_0001>

<llo_original>
// kernel: tpu_custom_call.1
$region0: #{tpu_custom_call.1}
  #allocation0 [shape = 'u32[]', space=smem, size = 0x4, offset = 0x4, fixed_abs, tag = 'smem constant byte address 0x4 - core index']
  #allocation1 [shape = 'u32[144,128]{1,0:T(1,128)}', space=vmem, size = 0x12000, scoped, tag = 'internal scratch']
  #allocation2 [shape = 'f32[16,128]{1,0:T(8,128)}', space=vmem, size = 0x2000, scoped, tag = 'scratch operand']
  #allocation3 [shape = 's32[16]{0}', space=sflag, size = 0x40, scoped, tag = 'scratch operand']
  #allocation4 [shape = 's32[1]{0}', space=sflag, size = 0x4, scoped, tag = 'scoped memory for tpu_custom_call.1']
  #allocation5 [shape = 'u8[512]{0}', space=smem, size = 0x200, scoped, tag = 'prefetched SMEM operand 0']
  #allocation6 [shape = 'u8[512]{0}', space=smem, size = 0x200, scoped, tag = 'prefetched SMEM operand 1']
  #allocation7 [shape = 'u8[512]{0}', space=smem, size = 0x200, scoped, tag = 'prefetched SMEM operand 2']
  #allocation12 [shape = 's32[]', space=sflag, size = 0x4, offset = 0, fixed_abs, tag = 'sflag constant byte address 0x0 - dummy sync flag']
  #allocation13 [shape = 's32[]', space=sflag, size = 0x4, offset = 0, fixed_abs, tag = 'sflag constant byte address 0x0 - dummy sync flag']
  #allocation14 [shape = 's32[]', space=sflag, size = 0x4, offset = 0, fixed_abs, tag = 'sflag constant byte address 0x0 - dummy sync flag']
  #allocation15 [shape = 'u32[]', space=smem, size = 0x4, offset = 0x44, fixed_abs, tag = 'smem constant byte address 0x44 - assertion arg 0']
  #allocation16 [shape = 'u32[]', space=smem, size = 0x4, offset = 0x48, fixed_abs, tag = 'smem constant byte address 0x48 - assertion arg 1']
  #allocation17 [shape = 's32[]', space=sflag, size = 0x4, offset = 0, fixed_abs, tag = 'sflag constant byte address 0x0 - dummy sync flag']
  #allocation18 [shape = 's32[]', space=sflag, size = 0x4, offset = 0, fixed_abs, tag = 'sflag constant byte address 0x0 - dummy sync flag']
  #allocation19 [shape = 's32[]', space=sflag, size = 0x4, offset = 0, fixed_abs, tag = 'sflag constant byte address 0x0 - dummy sync flag']
  #allocation20 [shape = 's32[]', space=sflag, size = 0x4, offset = 0, fixed_abs, tag = 'sflag constant byte address 0x0 - dummy sync flag']
  #allocation21 [shape = 's32[]', space=sflag, size = 0x4, offset = 0, fixed_abs, tag = 'sflag constant byte address 0x0 - dummy sync flag']
  #allocation22 [shape = 's32[]', space=sflag, size = 0x4, offset = 0, fixed_abs, tag = 'sflag constant byte address 0x0 - dummy sync flag']
  #allocation23 [shape = 's32[]', space=sflag, size = 0x4, offset = 0, fixed_abs, tag = 'sflag constant byte address 0x0 - dummy sync flag']
  #allocation24 [shape = 's32[]', space=sflag, size = 0x4, offset = 0, fixed_abs, tag = 'sflag constant byte address 0x0 - dummy sync flag']
  #allocation25 [shape = 's32[]', space=sflag, size = 0x4, offset = 0, fixed_abs, tag = 'sflag constant byte address 0x0 - dummy sync flag']
  #allocation26 [shape = 's32[]', space=sflag, size = 0x4, offset = 0, fixed_abs, tag = 'sflag constant byte address 0x0 - dummy sync flag']
  #allocation27 [shape = 's32[]', space=sflag, size = 0x4, offset = 0, fixed_abs, tag = 'sflag constant byte address 0x0 - dummy sync flag']
  #allocation28 [shape = 's32[]', space=sflag, size = 0x4, offset = 0, fixed_abs, tag = 'sflag constant byte address 0x0 - dummy sync flag']
  #allocation29 [shape = 's32[]', space=sflag, size = 0x4, offset = 0, fixed_abs, tag = 'sflag constant byte address 0x0 - dummy sync flag']
  #allocation30 [shape = 's32[]', space=sflag, size = 0x4, offset = 0, fixed_abs, tag = 'sflag constant byte address 0x0 - dummy sync flag']
  #allocation31 [shape = 's32[]', space=sflag, size = 0x4, offset = 0, fixed_abs, tag = 'sflag constant byte address 0x0 - dummy sync flag']
  #allocation32 [shape = 's32[]', space=sflag, size = 0x4, offset = 0, fixed_abs, tag = 'sflag constant byte address 0x0 - dummy sync flag']
  #allocation33 [shape = 's32[]', space=sflag, size = 0x4, offset = 0, fixed_abs, tag = 'sflag constant byte address 0x0 - dummy sync flag']
  #allocation34 [shape = 's32[]', space=sflag, size = 0x4, offset = 0, fixed_abs, tag = 'sflag constant byte address 0x0 - dummy sync flag']
  #allocation35 [shape = 's32[]', space=sflag, size = 0x4, offset = 0, fixed_abs, tag = 'sflag constant byte address 0x0 - dummy sync flag']
  #allocation36 [shape = 's32[]', space=sflag, size = 0x4, offset = 0, fixed_abs, tag = 'sflag constant byte address 0x0 - dummy sync flag']
  #allocation37 [shape = 's32[]', space=sflag, size = 0x4, offset = 0, fixed_abs, tag = 'sflag constant byte address 0x0 - dummy sync flag']
  #allocation38 [shape = 's32[]', space=sflag, size = 0x4, offset = 0, fixed_abs, tag = 'sflag constant byte address 0x0 - dummy sync flag']
  #allocation39 [shape = 's32[]', space=sflag, size = 0x4, offset = 0, fixed_abs, tag = 'sflag constant byte address 0x0 - dummy sync flag']
  #allocation40 [shape = 's32[]', space=sflag, size = 0x4, offset = 0, fixed_abs, tag = 'sflag constant byte address 0x0 - dummy sync flag']
  #allocation41 [shape = 's32[]', space=sflag, size = 0x4, offset = 0, fixed_abs, tag = 'sflag constant byte address 0x0 - dummy sync flag']
  #allocation42 [shape = 's32[]', space=sflag, size = 0x4, offset = 0, fixed_abs, tag = 'sflag constant byte address 0x0 - dummy sync flag']
  #allocation43 [shape = 's32[]', space=sflag, size = 0x4, offset = 0, fixed_abs, tag = 'sflag constant byte address 0x0 - dummy sync flag']
  #allocation44 [shape = 's32[]', space=sflag, size = 0x4, offset = 0, fixed_abs, tag = 'sflag constant byte address 0x0 - dummy sync flag']
  #allocation45 [shape = 's32[]', space=sflag, size = 0x4, offset = 0, fixed_abs, tag = 'sflag constant byte address 0x0 - dummy sync flag']
  #allocation46 [shape = 's32[]', space=sflag, size = 0x4, offset = 0, fixed_abs, tag = 'sflag constant byte address 0x0 - dummy sync flag']
  #allocation47 [shape = 's32[]', space=sflag, size = 0x4, offset = 0, fixed_abs, tag = 'sflag constant byte address 0x0 - dummy sync flag']
  #allocation48 [shape = 's32[]', space=sflag, size = 0x4, offset = 0, fixed_abs, tag = 'sflag constant byte address 0x0 - dummy sync flag']
  #allocation49 [shape = 's32[]', space=sflag, size = 0x4, offset = 0, fixed_abs, tag = 'sflag constant byte address 0x0 - dummy sync flag']
  #allocation50 [shape = 's32[]', space=sflag, size = 0x4, offset = 0, fixed_abs, tag = 'sflag constant byte address 0x0 - dummy sync flag']
  #allocation51 [shape = 's32[]', space=sflag, size = 0x4, offset = 0, fixed_abs, tag = 'sflag constant byte address 0x0 - dummy sync flag']
  #allocation52 [shape = 's32[]', space=sflag, size = 0x4, offset = 0, fixed_abs, tag = 'sflag constant byte address 0x0 - dummy sync flag']
  #allocation53 [shape = 's32[]', space=sflag, size = 0x4, offset = 0, fixed_abs, tag = 'sflag constant byte address 0x0 - dummy sync flag']
  #allocation54 [shape = 's32[]', space=sflag, size = 0x4, offset = 0, fixed_abs, tag = 'sflag constant byte address 0x0 - dummy sync flag']
  #allocation55 [shape = 's32[]', space=sflag, size = 0x4, offset = 0, fixed_abs, tag = 'sflag constant byte address 0x0 - dummy sync flag']
  #allocation56 [shape = 's32[]', space=sflag, size = 0x4, offset = 0, fixed_abs, tag = 'sflag constant byte address 0x0 - dummy sync flag']
  #allocation57 [shape = 's32[]', space=sflag, size = 0x4, offset = 0, fixed_abs, tag = 'sflag constant byte address 0x0 - dummy sync flag']
  #allocation58 [shape = 's32[]', space=sflag, size = 0x4, offset = 0, fixed_abs, tag = 'sflag constant byte address 0x0 - dummy sync flag']
  #allocation59 [shape = 's32[]', space=sflag, size = 0x4, offset = 0, fixed_abs, tag = 'sflag constant byte address 0x0 - dummy sync flag']
  #allocation60 [shape = 's32[]', space=sflag, size = 0x4, offset = 0, fixed_abs, tag = 'sflag constant byte address 0x0 - dummy sync flag']
  #allocation61 [shape = 's32[]', space=sflag, size = 0x4, offset = 0, fixed_abs, tag = 'sflag constant byte address 0x0 - dummy sync flag']
  %s0 = inlined_call_operand.hbm [shape: s32[32], index: 0, kind: input, shape index: {}]
  %s1 = inlined_call_operand.vmem [shape: s32[32], index: 1, kind: input, shape index: {}]
  %s2 = inlined_call_operand.vmem [shape: s32[32], index: 2, kind: input, shape index: {}]
  %s3 = inlined_call_operand.hbm [shape: f32[64,128], index: 3, kind: input, shape index: {}]
  %s4 = inlined_call_operand.vmem [shape: f32[2,128], index: 4, kind: input, shape index: {}]
  %s5 = inlined_call_operand.vmem [shape: f32[1,128], index: 5, kind: input, shape index: {}]
  %s6 = inlined_call_operand.vmem [shape: f32[1,128], index: 6, kind: input, shape index: {}]
  %s7 = inlined_call_operand.hbm [shape: f32[128,128], index: 7, kind: input, shape index: {}]
  %s8 = inlined_call_operand.vmem [shape: f32[8,128], index: 8, kind: input, shape index: {}]
  %s9 = inlined_call_operand.hbm [shape: f32[2,16,128], index: 9, kind: output, shape index: {}]
  %s10 = sld [smem:[#allocation0]]
  $region725: #{tpu_custom_call.1} parent=0
    _
  %s12 = ssub.s32 1, %s10
  %s13 = scalar_select 0, %s12, %s10
  %15 = dma.hbm_to_smem %s0, 16, [#allocation5], [#allocation4]
  %s16 = sshll.u32 %s1, 4
  %s17 = int_to_ptr.vmem [resolvable:$true] %s16
  %19 = dma.vmem_to_smem %s17, 16, [#allocation6], [#allocation4]
  %s20 = sshll.u32 %s2, 4
  %s21 = int_to_ptr.vmem [resolvable:$true] %s20
  %23 = dma.vmem_to_smem %s21, 16, [#allocation7], [#allocation4]
  %24 = dma.done [#allocation4], 48
  %25 = sfence
  $region1: #{tpu_custom_call.1} parent=0
    #allocation8 [shape = 'u8[8192]{0}', space=vmem, size = 0x2000, scoped, tag = 'input window, operand 3, single buffered']
    #allocation9 [shape = 's32[2]{0}', space=sflag, size = 0x8, scoped, tag = 'scoped memory for tpu_custom_call.1']
    #allocation10 [shape = 's32[2]{0}', space=sflag, size = 0x8, scoped, tag = 'scoped memory for tpu_custom_call.1']
    #allocation11 [shape = 'u8[16384]{0}', space=vmem, size = 0x4000, scoped, tag = 'output window, operand 0']
    %26 = vsyncpa [#allocation9], 0
    %27 = vsyncpa [#allocation10], 0
    %s28 = scalar_lea.sflag [#allocation10], 1
    %29 = vsyncpa %s28, 0
    loop: start=0, step=1, limit=4
    $region2: #{tpu_custom_call.1} parent=1 // loop_pre_header
      _
    $region3: #{tpu_custom_call.1} parent=1 // loop_header
      %s31 = sphi 0, %s35
      %p32 = scmp.ge.s32.totalorder %s31, 4
      %s38 = sphi 0, %s50
      %s39 = sphi 0, %s46
      %s40 = sphi 0, %s38
      %s41 = sphi 0, %s39
      %s42 = sphi 0, %s40
      %s43 = sphi 0, %s41
      %s53 = sphi 0, %s55
      %s56 = sphi 0, %s53
      %s57 = sphi 0, %s56
      %s73 = sphi 0, %s57
      %s77 = sphi 0, %s77
      %s79 = sphi 0, %s77
      %s80 = sphi 0, %s79
      %s94 = sphi 0, %s80
      %s98 = sphi 0, %s98
      %s100 = sphi 0, %s98
      %s101 = sphi 0, %s100
      %s115 = sphi 0, %s101
      %s119 = sphi 0, %s119
      %s121 = sphi 0, %s119
      %s122 = sphi 0, %s121
      %s136 = sphi 0, %s122
      %s144 = sphi 0, %s146
      %s147 = sphi 0, %s144
      %s148 = sphi 0, %s147
      %s164 = sphi 0, %s148
    $region4: #{tpu_custom_call.1} parent=1 // loop_header_branch
      %34 = sbr.rel (%p32) target = $region8
    $region5: #{tpu_custom_call.1} parent=1 // loop_body
      %s36 = ssub.s32 %s31, 1
      %s37 = ssub.s32 %s31, 2
      %s44 = sadd.s32 1, %s39
      %p45 = scmp.ge.s32.totalorder %s44, 1
      %s46 = scalar_select %p45, 0, %s44
      %s47 = sadd.s32 1, %s38
      %s48 = scalar_select %p45, %s47, %s38
      %p49 = scmp.ge.s32.totalorder %s48, 2
      %s50 = scalar_select %p49, 0, %s48
      %s51 = ssub.s32 %s39, %s46
      %p52 = scmp.eq.s32.totalorder %s51, 0
      %s54 = sadd.s32 %s53, 1
      %s55 = scalar_select %p52, %s53, %s54
      %p58 = pneg %p52
      %p59 = scmp.eq.s32.totalorder %s31, 1
      %p60 = por %p58, %p59
      %p61 = scmp.ne.s32.totalorder %s53, %s56
      %p62 = scmp.eq.s32.totalorder %s31, 0
      %p63 = por %p61, %p62
      %p64 = scmp.ne.s32.totalorder %s53, %s56
      %p65 = scmp.eq.s32.totalorder %s36, 1
      %p66 = por %p64, %p65
      %p67 = scmp.ne.s32.totalorder %s56, %s57
      %p68 = scmp.eq.s32.totalorder %s36, 0
      %p69 = por %p67, %p68
      %p70 = scmp.ne.s32.totalorder %s56, %s57
      %p71 = scmp.eq.s32.totalorder %s37, 1
      %p72 = por %p70, %p71
      %p74 = scmp.ne.s32.totalorder %s57, %s73
      %p75 = scmp.eq.s32.totalorder %s37, 0
      %p76 = por %p74, %p75
      %s78 = sadd.s32 %s77, 1
      %p81 = scmp.eq.s32.totalorder %s31, 1
      %p82 = scmp.ne.s32.totalorder %s77, %s79
      %p83 = scmp.eq.s32.totalorder %s31, 0
      %p84 = por %p82, %p83
      %p85 = scmp.ne.s32.totalorder %s77, %s79
      %p86 = scmp.eq.s32.totalorder %s36, 1
      %p87 = por %p85, %p86
      %p88 = scmp.ne.s32.totalorder %s79, %s80
      %p89 = scmp.eq.s32.totalorder %s36, 0
      %p90 = por %p88, %p89
      %p91 = scmp.ne.s32.totalorder %s79, %s80
      %p92 = scmp.eq.s32.totalorder %s37, 1
      %p93 = por %p91, %p92
      %p95 = scmp.ne.s32.totalorder %s80, %s94
      %p96 = scmp.eq.s32.totalorder %s37, 0
      %p97 = por %p95, %p96
      %s99 = sadd.s32 %s98, 1
      %p102 = scmp.eq.s32.totalorder %s31, 1
      %p103 = scmp.ne.s32.totalorder %s98, %s100
      %p104 = scmp.eq.s32.totalorder %s31, 0
      %p105 = por %p103, %p104
      %p106 = scmp.ne.s32.totalorder %s98, %s100
      %p107 = scmp.eq.s32.totalorder %s36, 1
      %p108 = por %p106, %p107
      %p109 = scmp.ne.s32.totalorder %s100, %s101
      %p110 = scmp.eq.s32.totalorder %s36, 0
      %p111 = por %p109, %p110
      %p112 = scmp.ne.s32.totalorder %s100, %s101
      %p113 = scmp.eq.s32.totalorder %s37, 1
      %p114 = por %p112, %p113
      %p116 = scmp.ne.s32.totalorder %s101, %s115
      %p117 = scmp.eq.s32.totalorder %s37, 0
      %p118 = por %p116, %p117
      %s120 = sadd.s32 %s119, 1
      %p123 = scmp.eq.s32.totalorder %s31, 1
      %p124 = scmp.ne.s32.totalorder %s119, %s121
      %p125 = scmp.eq.s32.totalorder %s31, 0
      %p126 = por %p124, %p125
      %p127 = scmp.ne.s32.totalorder %s119, %s121
      %p128 = scmp.eq.s32.totalorder %s36, 1
      %p129 = por %p127, %p128
      %p130 = scmp.ne.s32.totalorder %s121, %s122
      %p131 = scmp.eq.s32.totalorder %s36, 0
      %p132 = por %p130, %p131
      %p133 = scmp.ne.s32.totalorder %s121, %s122
      %p134 = scmp.eq.s32.totalorder %s37, 1
      %p135 = por %p133, %p134
      %p137 = scmp.ne.s32.totalorder %s122, %s136
      %p138 = scmp.eq.s32.totalorder %s37, 0
      %p139 = por %p137, %p138
      %s140 = ssub.s32 %s38, %s50
      %s141 = ssub.s32 %s39, %s46
      %s142 = sor.u32 %s140, %s141
      %p143 = scmp.eq.s32.totalorder %s142, 0
      %s145 = sadd.s32 %s144, 1
      %s146 = scalar_select %p143, %s144, %s145
      %p149 = pneg %p143
      %p150 = scmp.eq.s32.totalorder %s31, 1
      %p151 = por %p149, %p150
      %p152 = scmp.ne.s32.totalorder %s144, %s147
      %p153 = scmp.eq.s32.totalorder %s31, 0
      %p154 = por %p152, %p153
      %p155 = scmp.ne.s32.totalorder %s144, %s147
      %p156 = scmp.eq.s32.totalorder %s36, 1
      %p157 = por %p155, %p156
      %p158 = scmp.ne.s32.totalorder %s147, %s148
      %p159 = scmp.eq.s32.totalorder %s36, 0
      %p160 = por %p158, %p159
      %p161 = scmp.ne.s32.totalorder %s147, %s148
      %p162 = scmp.eq.s32.totalorder %s37, 1
      %p163 = por %p161, %p162
      %p165 = scmp.ne.s32.totalorder %s148, %s164
      %p166 = scmp.eq.s32.totalorder %s37, 0
      %p167 = por %p165, %p166
      %p168 = scmp.le.s32.totalorder 1, %s31
      %p169 = scmp.lt.s32.totalorder %s31, 3
      %p170 = pnand %p168, %p169
      %p171 = pneg %p170
      // Predicated region
      $region9: #{tpu_custom_call.1} parent=5 // pred_check
        _
      $region10: #{tpu_custom_call.1} parent=5 // pred_check_branch
        %173 = sbr.rel (%p170) target = $region12
      $region11: #{tpu_custom_call.1} parent=5 // pred_region
        %s174 = ssub.s32 %s31, 1
        // Predicated region
        $region13: #{tpu_custom_call.1} parent=11 // pred_check
          %p175 = pneg %p69
        $region14: #{tpu_custom_call.1} parent=11 // pred_check_branch
          %177 = sbr.rel (%p175) target = $region16
        $region15: #{tpu_custom_call.1} parent=11 // pred_region
          %s178 = smul.u32 2, %s41
          %s180 = ssub.s32 256, 256
          %181 = vsyncadd [#allocation9], %s180
          %s182 = smul.addr %s178, 128
          %s183 = scalar_lea.hbm %s3, %s182
          %s184 = sshll.u32 [#allocation8], 4
          %s185 = int_to_ptr.vmem [resolvable:$true] %s184
          %190 = dma.hbm_to_vmem [thread:$0]  %s183, 256, %s185, [#allocation9], 128, 128, 8
        $region16: #{tpu_custom_call.1} parent=11 // pred_fallthru
          _
        // Predicated region
        $region17: #{tpu_custom_call.1} parent=11 // pred_check
          %p191 = pneg %p90
        $region18: #{tpu_custom_call.1} parent=11 // pred_check_branch
          %193 = sbr.rel (%p191) target = $region20
        $region19: #{tpu_custom_call.1} parent=11 // pred_region
          _
        $region20: #{tpu_custom_call.1} parent=11 // pred_fallthru
          _
        // Predicated region
        $region21: #{tpu_custom_call.1} parent=11 // pred_check
          %p194 = pneg %p111
        $region22: #{tpu_custom_call.1} parent=11 // pred_check_branch
          %196 = sbr.rel (%p194) target = $region24
        $region23: #{tpu_custom_call.1} parent=11 // pred_region
          _
        $region24: #{tpu_custom_call.1} parent=11 // pred_fallthru
          _
        // Predicated region
        $region25: #{tpu_custom_call.1} parent=11 // pred_check
          %p197 = pneg %p132
        $region26: #{tpu_custom_call.1} parent=11 // pred_check_branch
          %199 = sbr.rel (%p197) target = $region28
        $region27: #{tpu_custom_call.1} parent=11 // pred_region
          _
        $region28: #{tpu_custom_call.1} parent=11 // pred_fallthru
          _
      $region12: #{tpu_custom_call.1} parent=5 // pred_fallthru
        _
      %p200 = scmp.lt.s32.totalorder %s31, 2
      // Predicated region
      $region29: #{tpu_custom_call.1} parent=5 // pred_check
        %p201 = pneg %p200
      $region30: #{tpu_custom_call.1} parent=5 // pred_check_branch
        %203 = sbr.rel (%p201) target = $region32
      $region31: #{tpu_custom_call.1} parent=5 // pred_region
        _
      $region32: #{tpu_custom_call.1} parent=5 // pred_fallthru
        _
      %p204 = scmp.le.s32.totalorder 1, %s31
      %p205 = scmp.lt.s32.totalorder %s31, 3
      %p206 = pnand %p204, %p205
      %p207 = pneg %p206
      // Predicated region
      $region33: #{tpu_custom_call.1} parent=5 // pred_check
        _
      $region34: #{tpu_custom_call.1} parent=5 // pred_check_branch
        %209 = sbr.rel (%p206) target = $region36
      $region35: #{tpu_custom_call.1} parent=5 // pred_region
        %s210 = ssub.s32 %s31, 1
        // Predicated region
        $region37: #{tpu_custom_call.1} parent=35 // pred_check
          %p211 = pneg %p69
        $region38: #{tpu_custom_call.1} parent=35 // pred_check_branch
          %213 = sbr.rel (%p211) target = $region40
        $region39: #{tpu_custom_call.1} parent=35 // pred_region
          %214 = dma.done [#allocation9], 256
        $region40: #{tpu_custom_call.1} parent=35 // pred_fallthru
          _
        %p215 = pneg %p69
        %p216 = pneg %p66
        %p217 = pneg %p90
        %p218 = pneg %p87
        %p219 = pneg %p111
        %p220 = pneg %p108
        %p221 = pneg %p132
        %p222 = pneg %p129
        %p223 = pneg %p160
        %p224 = pneg %p157
        %s225 = sand.u32 %s147, 1
        %s226 = scalar_lea.sflag [#allocation10], %s225
        %s227 = sand.u32 %s147, 1
        %s228 = smul.addr %s227, 16
        %s229 = scalar_lea.vmem [#allocation11], %s228
        %s230 = smul.u32 2, %s41
        %s231 = smul.u32 2, %s41
        %s232 = smul.u32 %s40, 16
        %s233 = smul.u32 %s41, 16
        %s234 = sadd.s32 %s232, %s233
        %s235 = sld [smem:[#allocation7 + %s234]]
        %s236 = sld [smem:[#allocation5 + %s234]]
        %s237 = sld [smem:[#allocation6 + %s234]]
        %p238 = scmp.ne.s32.totalorder %s235, 0
        // Predicated region
        $region41: #{tpu_custom_call.1} parent=35 // pred_check
          %p239 = pneg %p238
        $region42: #{tpu_custom_call.1} parent=35 // pred_check_branch
          %241 = sbr.rel (%p239) target = $region44
        $region43: #{tpu_custom_call.1} parent=35 // pred_region
          %s242 = scalar_lea.vmem %s8, %s237
          %p244 = scmp.lt.u32.totalorder 1, 8
          %p245 = pneg %p244
          // Predicated region
          $region45: #{tpu_custom_call.1} parent=43 // pred_check
            _
          $region46: #{tpu_custom_call.1} parent=43 // pred_check_branch
            %247 = sbr.rel (%p244) target = $region48
          $region47: #{tpu_custom_call.1} parent=43 // pred_region
            %s262 = sand.u32 1, 7
            %p263 = scmp.eq.s32.totalorder %s262, 0
            %p264 = pneg %p263
            // Predicated region
            $region60: #{tpu_custom_call.1} parent=47 // pred_check
              _
            $region61: #{tpu_custom_call.1} parent=47 // pred_check_branch
              %266 = sbr.rel (%p263) target = $region63
            $region62: #{tpu_custom_call.1} parent=47 // pred_region
              %s267 = sand.u32 1, 7
              %s268 = ssub.s32 1, %s267
              %s269 = scalar_lea.vmem %s242, %s268
              %s270 = ssub.s32 1, %s267
              %s271 = scalar_lea.vmem [#allocation2], %s270
              %s272 = sshllo.u32 0, %s267
              loop: start=0, step=1, limit=1
              $region64: #{tpu_custom_call.1} parent=62 // loop_pre_header
                _
              $region65: #{tpu_custom_call.1} parent=62 // loop_header
                %s274 = sphi 0, %s278
                %p275 = scmp.ge.s32.totalorder %s274, 1
                %s279 = sphi %s269, %s269
                %s280 = sphi %s271, %s271
              $region66: #{tpu_custom_call.1} parent=62 // loop_header_branch
                %277 = sbr.rel (%p275) target = $region70
              $region67: #{tpu_custom_call.1} parent=62 // loop_body
                %v281 = vld [vmem:[%s279] sm:%s272]
                %282 = vst [vmem:[%s280] sm:%s272] %v281
              $region68: #{tpu_custom_call.1} parent=62 // loop_footer
                %s278 = sadd.s32 1, %s274
              $region69: #{tpu_custom_call.1} parent=62 // loop_footer_branch
                %273 = sbr.rel target = $region65
              $region70: #{tpu_custom_call.1} parent=62 // loop_exit
                _
            $region63: #{tpu_custom_call.1} parent=47 // pred_fallthru
              _
          $region48: #{tpu_custom_call.1} parent=43 // pred_fallthru
            _
          // Predicated region
          $region49: #{tpu_custom_call.1} parent=43 // pred_check
            %p248 = pneg %p244
          $region50: #{tpu_custom_call.1} parent=43 // pred_check_branch
            %250 = sbr.rel (%p248) target = $region52
          $region51: #{tpu_custom_call.1} parent=43 // pred_region
            %s251 = sshllo.u32 0, 1
            loop: start=0, step=1, limit=1
            $region53: #{tpu_custom_call.1} parent=51 // loop_pre_header
              _
            $region54: #{tpu_custom_call.1} parent=51 // loop_header
              %s253 = sphi 0, %s257
              %p254 = scmp.ge.s32.totalorder %s253, 1
              %s258 = sphi %s242, %s242
              %s259 = sphi [#allocation2], [#allocation2]
            $region55: #{tpu_custom_call.1} parent=51 // loop_header_branch
              %256 = sbr.rel (%p254) target = $region59
            $region56: #{tpu_custom_call.1} parent=51 // loop_body
              %v260 = vld [vmem:[%s258] sm:%s251]
              %261 = vst [vmem:[%s259] sm:%s251] %v260
            $region57: #{tpu_custom_call.1} parent=51 // loop_footer
              %s257 = sadd.s32 1, %s253
            $region58: #{tpu_custom_call.1} parent=51 // loop_footer_branch
              %252 = sbr.rel target = $region54
            $region59: #{tpu_custom_call.1} parent=51 // loop_exit
              _
          $region52: #{tpu_custom_call.1} parent=43 // pred_fallthru
            _
          // Predicated region
          $region71: #{tpu_custom_call.1} parent=43 // pred_check
            _
          $region72: #{tpu_custom_call.1} parent=43 // pred_check_branch
            %285 = sbr.rel (0) target = $region74
          $region73: #{tpu_custom_call.1} parent=43 // pred_region
            %286 = vsyncadd [#allocation3], 16
          $region74: #{tpu_custom_call.1} parent=43 // pred_fallthru
            _
        $region44: #{tpu_custom_call.1} parent=35 // pred_fallthru
          _
        %p287 = scmp.eq.s32.totalorder %s235, 0
        // Predicated region
        $region75: #{tpu_custom_call.1} parent=35 // pred_check
          %p288 = pneg %p287
        $region76: #{tpu_custom_call.1} parent=35 // pred_check_branch
          %290 = sbr.rel (%p288) target = $region78
        $region77: #{tpu_custom_call.1} parent=35 // pred_region
          %s291 = smul.addr %s236, 16
          %s292 = scalar_lea.hbm %s7, %s291
          // Predicated region
          $region79: #{tpu_custom_call.1} parent=77 // pred_check
            _
          $region80: #{tpu_custom_call.1} parent=77 // pred_check_branch
            %294 = sbr.rel target = $region82
          $region81: #{tpu_custom_call.1} parent=77 // pred_region
            %295 = sst [smem:[#allocation15]] [#allocation14]
            %296 = sst [smem:[#allocation16]] [#allocation13]
          $region82: #{tpu_custom_call.1} parent=77 // pred_fallthru
            _
          %298 = shalt.err (0)
          %s300 = sshll.u32 [#allocation2], 4
          %s301 = int_to_ptr.vmem [resolvable:$true] %s300
          %303 = dma.hbm_to_vmem [thread:$0]  %s292, 16, %s301, [#allocation3]
        $region78: #{tpu_custom_call.1} parent=35 // pred_fallthru
          _
        %s304 = sadd.s32 %s234, 1
        %s305 = sld [smem:[#allocation7 + %s304]]
        %s306 = sld [smem:[#allocation5 + %s304]]
        %s307 = sld [smem:[#allocation6 + %s304]]
        %p308 = scmp.ne.s32.totalorder %s305, 0
        // Predicated region
        $region83: #{tpu_custom_call.1} parent=35 // pred_check
          %p309 = pneg %p308
        $region84: #{tpu_custom_call.1} parent=35 // pred_check_branch
          %311 = sbr.rel (%p309) target = $region86
        $region85: #{tpu_custom_call.1} parent=35 // pred_region
          %s312 = scalar_lea.vmem %s8, %s307
          %s313 = scalar_lea.vmem [#allocation2], 1
          %s314 = scalar_lea.sflag [#allocation3], 1
          %p316 = scmp.lt.u32.totalorder 1, 8
          %p317 = pneg %p316
          // Predicated region
          $region87: #{tpu_custom_call.1} parent=85 // pred_check
            _
          $region88: #{tpu_custom_call.1} parent=85 // pred_check_branch
            %319 = sbr.rel (%p316) target = $region90
          $region89: #{tpu_custom_call.1} parent=85 // pred_region
            %s334 = sand.u32 1, 7
            %p335 = scmp.eq.s32.totalorder %s334, 0
            %p336 = pneg %p335
            // Predicated region
            $region102: #{tpu_custom_call.1} parent=89 // pred_check
              _
            $region103: #{tpu_custom_call.1} parent=89 // pred_check_branch
              %338 = sbr.rel (%p335) target = $region105
            $region104: #{tpu_custom_call.1} parent=89 // pred_region
              %s339 = sand.u32 1, 7
              %s340 = ssub.s32 1, %s339
              %s341 = scalar_lea.vmem %s312, %s340
              %s342 = ssub.s32 1, %s339
              %s343 = scalar_lea.vmem %s313, %s342 [#allocation2]
              %s344 = sshllo.u32 0, %s339
              loop: start=0, step=1, limit=1
              $region106: #{tpu_custom_call.1} parent=104 // loop_pre_header
                _
              $region107: #{tpu_custom_call.1} parent=104 // loop_header
                %s346 = sphi 0, %s350
                %p347 = scmp.ge.s32.totalorder %s346, 1
                %s351 = sphi %s341, %s341
                %s352 = sphi %s343, %s343
              $region108: #{tpu_custom_call.1} parent=104 // loop_header_branch
                %349 = sbr.rel (%p347) target = $region112
              $region109: #{tpu_custom_call.1} parent=104 // loop_body
                %v353 = vld [vmem:[%s351] sm:%s344]
                %354 = vst [vmem:[%s352] sm:%s344] %v353
              $region110: #{tpu_custom_call.1} parent=104 // loop_footer
                %s350 = sadd.s32 1, %s346
              $region111: #{tpu_custom_call.1} parent=104 // loop_footer_branch
                %345 = sbr.rel target = $region107
              $region112: #{tpu_custom_call.1} parent=104 // loop_exit
                _
            $region105: #{tpu_custom_call.1} parent=89 // pred_fallthru
              _
          $region90: #{tpu_custom_call.1} parent=85 // pred_fallthru
            _
          // Predicated region
          $region91: #{tpu_custom_call.1} parent=85 // pred_check
            %p320 = pneg %p316
          $region92: #{tpu_custom_call.1} parent=85 // pred_check_branch
            %322 = sbr.rel (%p320) target = $region94
          $region93: #{tpu_custom_call.1} parent=85 // pred_region
            %s323 = sshllo.u32 0, 1
            loop: start=0, step=1, limit=1
            $region95: #{tpu_custom_call.1} parent=93 // loop_pre_header
              _
            $region96: #{tpu_custom_call.1} parent=93 // loop_header
              %s325 = sphi 0, %s329
              %p326 = scmp.ge.s32.totalorder %s325, 1
              %s330 = sphi %s312, %s312
              %s331 = sphi %s313, %s313
            $region97: #{tpu_custom_call.1} parent=93 // loop_header_branch
              %328 = sbr.rel (%p326) target = $region101
            $region98: #{tpu_custom_call.1} parent=93 // loop_body
              %v332 = vld [vmem:[%s330] sm:%s323]
              %333 = vst [vmem:[%s331] sm:%s323] %v332
            $region99: #{tpu_custom_call.1} parent=93 // loop_footer
              %s329 = sadd.s32 1, %s325
            $region100: #{tpu_custom_call.1} parent=93 // loop_footer_branch
              %324 = sbr.rel target = $region96
            $region101: #{tpu_custom_call.1} parent=93 // loop_exit
              _
          $region94: #{tpu_custom_call.1} parent=85 // pred_fallthru
            _
          // Predicated region
          $region113: #{tpu_custom_call.1} parent=85 // pred_check
            _
          $region114: #{tpu_custom_call.1} parent=85 // pred_check_branch
            %357 = sbr.rel (0) target = $region116
          $region115: #{tpu_custom_call.1} parent=85 // pred_region
            %358 = vsyncadd %s314, 16
          $region116: #{tpu_custom_call.1} parent=85 // pred_fallthru
            _
        $region86: #{tpu_custom_call.1} parent=35 // pred_fallthru
          _
        %p359 = scmp.eq.s32.totalorder %s305, 0
        // Predicated region
        $region117: #{tpu_custom_call.1} parent=35 // pred_check
          %p360 = pneg %p359
        $region118: #{tpu_custom_call.1} parent=35 // pred_check_branch
          %362 = sbr.rel (%p360) target = $region120
        $region119: #{tpu_custom_call.1} parent=35 // pred_region
          %s363 = smul.addr %s306, 16
          %s364 = scalar_lea.hbm %s7, %s363
          %s365 = scalar_lea.vmem [#allocation2], 1
          %s366 = scalar_lea.sflag [#allocation3], 1
          // Predicated region
          $region121: #{tpu_custom_call.1} parent=119 // pred_check
            _
          $region122: #{tpu_custom_call.1} parent=119 // pred_check_branch
            %368 = sbr.rel target = $region124
          $region123: #{tpu_custom_call.1} parent=119 // pred_region
            %369 = sst [smem:[#allocation15]] [#allocation19]
            %370 = sst [smem:[#allocation16]] [#allocation18]
          $region124: #{tpu_custom_call.1} parent=119 // pred_fallthru
            _
          %372 = shalt.err (0)
          %s374 = sshll.u32 %s365, 4
          %s375 = int_to_ptr.vmem [resolvable:$true] %s374
          %377 = dma.hbm_to_vmem [thread:$0]  %s364, 16, %s375, %s366
        $region120: #{tpu_custom_call.1} parent=35 // pred_fallthru
          _
        %s378 = sadd.s32 %s234, 2
        %s379 = sld [smem:[#allocation7 + %s378]]
        %s380 = sld [smem:[#allocation5 + %s378]]
        %s381 = sld [smem:[#allocation6 + %s378]]
        %p382 = scmp.ne.s32.totalorder %s379, 0
        // Predicated region
        $region125: #{tpu_custom_call.1} parent=35 // pred_check
          %p383 = pneg %p382
        $region126: #{tpu_custom_call.1} parent=35 // pred_check_branch
          %385 = sbr.rel (%p383) target = $region128
        $region127: #{tpu_custom_call.1} parent=35 // pred_region
          %s386 = scalar_lea.vmem %s8, %s381
          %s387 = scalar_lea.vmem [#allocation2], 2
          %s388 = scalar_lea.sflag [#allocation3], 2
          %p390 = scmp.lt.u32.totalorder 1, 8
          %p391 = pneg %p390
          // Predicated region
          $region129: #{tpu_custom_call.1} parent=127 // pred_check
            _
          $region130: #{tpu_custom_call.1} parent=127 // pred_check_branch
            %393 = sbr.rel (%p390) target = $region132
          $region131: #{tpu_custom_call.1} parent=127 // pred_region
            %s408 = sand.u32 1, 7
            %p409 = scmp.eq.s32.totalorder %s408, 0
            %p410 = pneg %p409
            // Predicated region
            $region144: #{tpu_custom_call.1} parent=131 // pred_check
              _
            $region145: #{tpu_custom_call.1} parent=131 // pred_check_branch
              %412 = sbr.rel (%p409) target = $region147
            $region146: #{tpu_custom_call.1} parent=131 // pred_region
              %s413 = sand.u32 1, 7
              %s414 = ssub.s32 1, %s413
              %s415 = scalar_lea.vmem %s386, %s414
              %s416 = ssub.s32 1, %s413
              %s417 = scalar_lea.vmem %s387, %s416 [#allocation2]
              %s418 = sshllo.u32 0, %s413
              loop: start=0, step=1, limit=1
              $region148: #{tpu_custom_call.1} parent=146 // loop_pre_header
                _
              $region149: #{tpu_custom_call.1} parent=146 // loop_header
                %s420 = sphi 0, %s424
                %p421 = scmp.ge.s32.totalorder %s420, 1
                %s425 = sphi %s415, %s415
                %s426 = sphi %s417, %s417
              $region150: #{tpu_custom_call.1} parent=146 // loop_header_branch
                %423 = sbr.rel (%p421) target = $region154
              $region151: #{tpu_custom_call.1} parent=146 // loop_body
                %v427 = vld [vmem:[%s425] sm:%s418]
                %428 = vst [vmem:[%s426] sm:%s418] %v427
              $region152: #{tpu_custom_call.1} parent=146 // loop_footer
                %s424 = sadd.s32 1, %s420
              $region153: #{tpu_custom_call.1} parent=146 // loop_footer_branch
                %419 = sbr.rel target = $region149
              $region154: #{tpu_custom_call.1} parent=146 // loop_exit
                _
            $region147: #{tpu_custom_call.1} parent=131 // pred_fallthru
              _
          $region132: #{tpu_custom_call.1} parent=127 // pred_fallthru
            _
          // Predicated region
          $region133: #{tpu_custom_call.1} parent=127 // pred_check
            %p394 = pneg %p390
          $region134: #{tpu_custom_call.1} parent=127 // pred_check_branch
            %396 = sbr.rel (%p394) target = $region136
          $region135: #{tpu_custom_call.1} parent=127 // pred_region
            %s397 = sshllo.u32 0, 1
            loop: start=0, step=1, limit=1
            $region137: #{tpu_custom_call.1} parent=135 // loop_pre_header
              _
            $region138: #{tpu_custom_call.1} parent=135 // loop_header
              %s399 = sphi 0, %s403
              %p400 = scmp.ge.s32.totalorder %s399, 1
              %s404 = sphi %s386, %s386
              %s405 = sphi %s387, %s387
            $region139: #{tpu_custom_call.1} parent=135 // loop_header_branch
              %402 = sbr.rel (%p400) target = $region143
            $region140: #{tpu_custom_call.1} parent=135 // loop_body
              %v406 = vld [vmem:[%s404] sm:%s397]
              %407 = vst [vmem:[%s405] sm:%s397] %v406
            $region141: #{tpu_custom_call.1} parent=135 // loop_footer
              %s403 = sadd.s32 1, %s399
            $region142: #{tpu_custom_call.1} parent=135 // loop_footer_branch
              %398 = sbr.rel target = $region138
            $region143: #{tpu_custom_call.1} parent=135 // loop_exit
              _
          $region136: #{tpu_custom_call.1} parent=127 // pred_fallthru
            _
          // Predicated region
          $region155: #{tpu_custom_call.1} parent=127 // pred_check
            _
          $region156: #{tpu_custom_call.1} parent=127 // pred_check_branch
            %431 = sbr.rel (0) target = $region158
          $region157: #{tpu_custom_call.1} parent=127 // pred_region
            %432 = vsyncadd %s388, 16
          $region158: #{tpu_custom_call.1} parent=127 // pred_fallthru
            _
        $region128: #{tpu_custom_call.1} parent=35 // pred_fallthru
          _
        %p433 = scmp.eq.s32.totalorder %s379, 0
        // Predicated region
        $region159: #{tpu_custom_call.1} parent=35 // pred_check
          %p434 = pneg %p433
        $region160: #{tpu_custom_call.1} parent=35 // pred_check_branch
          %436 = sbr.rel (%p434) target = $region162
        $region161: #{tpu_custom_call.1} parent=35 // pred_region
          %s437 = smul.addr %s380, 16
          %s438 = scalar_lea.hbm %s7, %s437
          %s439 = scalar_lea.vmem [#allocation2], 2
          %s440 = scalar_lea.sflag [#allocation3], 2
          // Predicated region
          $region163: #{tpu_custom_call.1} parent=161 // pred_check
            _
          $region164: #{tpu_custom_call.1} parent=161 // pred_check_branch
            %442 = sbr.rel target = $region166
          $region165: #{tpu_custom_call.1} parent=161 // pred_region
            %443 = sst [smem:[#allocation15]] [#allocation22]
            %444 = sst [smem:[#allocation16]] [#allocation21]
          $region166: #{tpu_custom_call.1} parent=161 // pred_fallthru
            _
          %446 = shalt.err (0)
          %s448 = sshll.u32 %s439, 4
          %s449 = int_to_ptr.vmem [resolvable:$true] %s448
          %451 = dma.hbm_to_vmem [thread:$0]  %s438, 16, %s449, %s440
        $region162: #{tpu_custom_call.1} parent=35 // pred_fallthru
          _
        %s452 = sadd.s32 %s234, 3
        %s453 = sld [smem:[#allocation7 + %s452]]
        %s454 = sld [smem:[#allocation5 + %s452]]
        %s455 = sld [smem:[#allocation6 + %s452]]
        %p456 = scmp.ne.s32.totalorder %s453, 0
        // Predicated region
        $region167: #{tpu_custom_call.1} parent=35 // pred_check
          %p457 = pneg %p456
        $region168: #{tpu_custom_call.1} parent=35 // pred_check_branch
          %459 = sbr.rel (%p457) target = $region170
        $region169: #{tpu_custom_call.1} parent=35 // pred_region
          %s460 = scalar_lea.vmem %s8, %s455
          %s461 = scalar_lea.vmem [#allocation2], 3
          %s462 = scalar_lea.sflag [#allocation3], 3
          %p464 = scmp.lt.u32.totalorder 1, 8
          %p465 = pneg %p464
          // Predicated region
          $region171: #{tpu_custom_call.1} parent=169 // pred_check
            _
          $region172: #{tpu_custom_call.1} parent=169 // pred_check_branch
            %467 = sbr.rel (%p464) target = $region174
          $region173: #{tpu_custom_call.1} parent=169 // pred_region
            %s482 = sand.u32 1, 7
            %p483 = scmp.eq.s32.totalorder %s482, 0
            %p484 = pneg %p483
            // Predicated region
            $region186: #{tpu_custom_call.1} parent=173 // pred_check
              _
            $region187: #{tpu_custom_call.1} parent=173 // pred_check_branch
              %486 = sbr.rel (%p483) target = $region189
            $region188: #{tpu_custom_call.1} parent=173 // pred_region
              %s487 = sand.u32 1, 7
              %s488 = ssub.s32 1, %s487
              %s489 = scalar_lea.vmem %s460, %s488
              %s490 = ssub.s32 1, %s487
              %s491 = scalar_lea.vmem %s461, %s490 [#allocation2]
              %s492 = sshllo.u32 0, %s487
              loop: start=0, step=1, limit=1
              $region190: #{tpu_custom_call.1} parent=188 // loop_pre_header
                _
              $region191: #{tpu_custom_call.1} parent=188 // loop_header
                %s494 = sphi 0, %s498
                %p495 = scmp.ge.s32.totalorder %s494, 1
                %s499 = sphi %s489, %s489
                %s500 = sphi %s491, %s491
              $region192: #{tpu_custom_call.1} parent=188 // loop_header_branch
                %497 = sbr.rel (%p495) target = $region196
              $region193: #{tpu_custom_call.1} parent=188 // loop_body
                %v501 = vld [vmem:[%s499] sm:%s492]
                %502 = vst [vmem:[%s500] sm:%s492] %v501
              $region194: #{tpu_custom_call.1} parent=188 // loop_footer
                %s498 = sadd.s32 1, %s494
              $region195: #{tpu_custom_call.1} parent=188 // loop_footer_branch
                %493 = sbr.rel target = $region191
              $region196: #{tpu_custom_call.1} parent=188 // loop_exit
                _
            $region189: #{tpu_custom_call.1} parent=173 // pred_fallthru
              _
          $region174: #{tpu_custom_call.1} parent=169 // pred_fallthru
            _
          // Predicated region
          $region175: #{tpu_custom_call.1} parent=169 // pred_check
            %p468 = pneg %p464
          $region176: #{tpu_custom_call.1} parent=169 // pred_check_branch
            %470 = sbr.rel (%p468) target = $region178
          $region177: #{tpu_custom_call.1} parent=169 // pred_region
            %s471 = sshllo.u32 0, 1
            loop: start=0, step=1, limit=1
            $region179: #{tpu_custom_call.1} parent=177 // loop_pre_header
              _
            $region180: #{tpu_custom_call.1} parent=177 // loop_header
              %s473 = sphi 0, %s477
              %p474 = scmp.ge.s32.totalorder %s473, 1
              %s478 = sphi %s460, %s460
              %s479 = sphi %s461, %s461
            $region181: #{tpu_custom_call.1} parent=177 // loop_header_branch
              %476 = sbr.rel (%p474) target = $region185
            $region182: #{tpu_custom_call.1} parent=177 // loop_body
              %v480 = vld [vmem:[%s478] sm:%s471]
              %481 = vst [vmem:[%s479] sm:%s471] %v480
            $region183: #{tpu_custom_call.1} parent=177 // loop_footer
              %s477 = sadd.s32 1, %s473
            $region184: #{tpu_custom_call.1} parent=177 // loop_footer_branch
              %472 = sbr.rel target = $region180
            $region185: #{tpu_custom_call.1} parent=177 // loop_exit
              _
          $region178: #{tpu_custom_call.1} parent=169 // pred_fallthru
            _
          // Predicated region
          $region197: #{tpu_custom_call.1} parent=169 // pred_check
            _
          $region198: #{tpu_custom_call.1} parent=169 // pred_check_branch
            %505 = sbr.rel (0) target = $region200
          $region199: #{tpu_custom_call.1} parent=169 // pred_region
            %506 = vsyncadd %s462, 16
          $region200: #{tpu_custom_call.1} parent=169 // pred_fallthru
            _
        $region170: #{tpu_custom_call.1} parent=35 // pred_fallthru
          _
        %p507 = scmp.eq.s32.totalorder %s453, 0
        // Predicated region
        $region201: #{tpu_custom_call.1} parent=35 // pred_check
          %p508 = pneg %p507
        $region202: #{tpu_custom_call.1} parent=35 // pred_check_branch
          %510 = sbr.rel (%p508) target = $region204
        $region203: #{tpu_custom_call.1} parent=35 // pred_region
          %s511 = smul.addr %s454, 16
          %s512 = scalar_lea.hbm %s7, %s511
          %s513 = scalar_lea.vmem [#allocation2], 3
          %s514 = scalar_lea.sflag [#allocation3], 3
          // Predicated region
          $region205: #{tpu_custom_call.1} parent=203 // pred_check
            _
          $region206: #{tpu_custom_call.1} parent=203 // pred_check_branch
            %516 = sbr.rel target = $region208
          $region207: #{tpu_custom_call.1} parent=203 // pred_region
            %517 = sst [smem:[#allocation15]] [#allocation25]
            %518 = sst [smem:[#allocation16]] [#allocation24]
          $region208: #{tpu_custom_call.1} parent=203 // pred_fallthru
            _
          %520 = shalt.err (0)
          %s522 = sshll.u32 %s513, 4
          %s523 = int_to_ptr.vmem [resolvable:$true] %s522
          %525 = dma.hbm_to_vmem [thread:$0]  %s512, 16, %s523, %s514
        $region204: #{tpu_custom_call.1} parent=35 // pred_fallthru
          _
        %s526 = sadd.s32 %s234, 4
        %s527 = sld [smem:[#allocation7 + %s526]]
        %s528 = sld [smem:[#allocation5 + %s526]]
        %s529 = sld [smem:[#allocation6 + %s526]]
        %p530 = scmp.ne.s32.totalorder %s527, 0
        // Predicated region
        $region209: #{tpu_custom_call.1} parent=35 // pred_check
          %p531 = pneg %p530
        $region210: #{tpu_custom_call.1} parent=35 // pred_check_branch
          %533 = sbr.rel (%p531) target = $region212
        $region211: #{tpu_custom_call.1} parent=35 // pred_region
          %s534 = scalar_lea.vmem %s8, %s529
          %s535 = scalar_lea.vmem [#allocation2], 4
          %s536 = scalar_lea.sflag [#allocation3], 4
          %p538 = scmp.lt.u32.totalorder 1, 8
          %p539 = pneg %p538
          // Predicated region
          $region213: #{tpu_custom_call.1} parent=211 // pred_check
            _
          $region214: #{tpu_custom_call.1} parent=211 // pred_check_branch
            %541 = sbr.rel (%p538) target = $region216
          $region215: #{tpu_custom_call.1} parent=211 // pred_region
            %s556 = sand.u32 1, 7
            %p557 = scmp.eq.s32.totalorder %s556, 0
            %p558 = pneg %p557
            // Predicated region
            $region228: #{tpu_custom_call.1} parent=215 // pred_check
              _
            $region229: #{tpu_custom_call.1} parent=215 // pred_check_branch
              %560 = sbr.rel (%p557) target = $region231
            $region230: #{tpu_custom_call.1} parent=215 // pred_region
              %s561 = sand.u32 1, 7
              %s562 = ssub.s32 1, %s561
              %s563 = scalar_lea.vmem %s534, %s562
              %s564 = ssub.s32 1, %s561
              %s565 = scalar_lea.vmem %s535, %s564 [#allocation2]
              %s566 = sshllo.u32 0, %s561
              loop: start=0, step=1, limit=1
              $region232: #{tpu_custom_call.1} parent=230 // loop_pre_header
                _
              $region233: #{tpu_custom_call.1} parent=230 // loop_header
                %s568 = sphi 0, %s572
                %p569 = scmp.ge.s32.totalorder %s568, 1
                %s573 = sphi %s563, %s563
                %s574 = sphi %s565, %s565
              $region234: #{tpu_custom_call.1} parent=230 // loop_header_branch
                %571 = sbr.rel (%p569) target = $region238
              $region235: #{tpu_custom_call.1} parent=230 // loop_body
                %v575 = vld [vmem:[%s573] sm:%s566]
                %576 = vst [vmem:[%s574] sm:%s566] %v575
              $region236: #{tpu_custom_call.1} parent=230 // loop_footer
                %s572 = sadd.s32 1, %s568
              $region237: #{tpu_custom_call.1} parent=230 // loop_footer_branch
                %567 = sbr.rel target = $region233
              $region238: #{tpu_custom_call.1} parent=230 // loop_exit
                _
            $region231: #{tpu_custom_call.1} parent=215 // pred_fallthru
              _
          $region216: #{tpu_custom_call.1} parent=211 // pred_fallthru
            _
          // Predicated region
          $region217: #{tpu_custom_call.1} parent=211 // pred_check
            %p542 = pneg %p538
          $region218: #{tpu_custom_call.1} parent=211 // pred_check_branch
            %544 = sbr.rel (%p542) target = $region220
          $region219: #{tpu_custom_call.1} parent=211 // pred_region
            %s545 = sshllo.u32 0, 1
            loop: start=0, step=1, limit=1
            $region221: #{tpu_custom_call.1} parent=219 // loop_pre_header
              _
            $region222: #{tpu_custom_call.1} parent=219 // loop_header
              %s547 = sphi 0, %s551
              %p548 = scmp.ge.s32.totalorder %s547, 1
              %s552 = sphi %s534, %s534
              %s553 = sphi %s535, %s535
            $region223: #{tpu_custom_call.1} parent=219 // loop_header_branch
              %550 = sbr.rel (%p548) target = $region227
            $region224: #{tpu_custom_call.1} parent=219 // loop_body
              %v554 = vld [vmem:[%s552] sm:%s545]
              %555 = vst [vmem:[%s553] sm:%s545] %v554
            $region225: #{tpu_custom_call.1} parent=219 // loop_footer
              %s551 = sadd.s32 1, %s547
            $region226: #{tpu_custom_call.1} parent=219 // loop_footer_branch
              %546 = sbr.rel target = $region222
            $region227: #{tpu_custom_call.1} parent=219 // loop_exit
              _
          $region220: #{tpu_custom_call.1} parent=211 // pred_fallthru
            _
          // Predicated region
          $region239: #{tpu_custom_call.1} parent=211 // pred_check
            _
          $region240: #{tpu_custom_call.1} parent=211 // pred_check_branch
            %579 = sbr.rel (0) target = $region242
          $region241: #{tpu_custom_call.1} parent=211 // pred_region
            %580 = vsyncadd %s536, 16
          $region242: #{tpu_custom_call.1} parent=211 // pred_fallthru
            _
        $region212: #{tpu_custom_call.1} parent=35 // pred_fallthru
          _
        %p581 = scmp.eq.s32.totalorder %s527, 0
        // Predicated region
        $region243: #{tpu_custom_call.1} parent=35 // pred_check
          %p582 = pneg %p581
        $region244: #{tpu_custom_call.1} parent=35 // pred_check_branch
          %584 = sbr.rel (%p582) target = $region246
        $region245: #{tpu_custom_call.1} parent=35 // pred_region
          %s585 = smul.addr %s528, 16
          %s586 = scalar_lea.hbm %s7, %s585
          %s587 = scalar_lea.vmem [#allocation2], 4
          %s588 = scalar_lea.sflag [#allocation3], 4
          // Predicated region
          $region247: #{tpu_custom_call.1} parent=245 // pred_check
            _
          $region248: #{tpu_custom_call.1} parent=245 // pred_check_branch
            %590 = sbr.rel target = $region250
          $region249: #{tpu_custom_call.1} parent=245 // pred_region
            %591 = sst [smem:[#allocation15]] [#allocation28]
            %592 = sst [smem:[#allocation16]] [#allocation27]
          $region250: #{tpu_custom_call.1} parent=245 // pred_fallthru
            _
          %594 = shalt.err (0)
          %s596 = sshll.u32 %s587, 4
          %s597 = int_to_ptr.vmem [resolvable:$true] %s596
          %599 = dma.hbm_to_vmem [thread:$0]  %s586, 16, %s597, %s588
        $region246: #{tpu_custom_call.1} parent=35 // pred_fallthru
          _
        %s600 = sadd.s32 %s234, 5
        %s601 = sld [smem:[#allocation7 + %s600]]
        %s602 = sld [smem:[#allocation5 + %s600]]
        %s603 = sld [smem:[#allocation6 + %s600]]
        %p604 = scmp.ne.s32.totalorder %s601, 0
        // Predicated region
        $region251: #{tpu_custom_call.1} parent=35 // pred_check
          %p605 = pneg %p604
        $region252: #{tpu_custom_call.1} parent=35 // pred_check_branch
          %607 = sbr.rel (%p605) target = $region254
        $region253: #{tpu_custom_call.1} parent=35 // pred_region
          %s608 = scalar_lea.vmem %s8, %s603
          %s609 = scalar_lea.vmem [#allocation2], 5
          %s610 = scalar_lea.sflag [#allocation3], 5
          %p612 = scmp.lt.u32.totalorder 1, 8
          %p613 = pneg %p612
          // Predicated region
          $region255: #{tpu_custom_call.1} parent=253 // pred_check
            _
          $region256: #{tpu_custom_call.1} parent=253 // pred_check_branch
            %615 = sbr.rel (%p612) target = $region258
          $region257: #{tpu_custom_call.1} parent=253 // pred_region
            %s630 = sand.u32 1, 7
            %p631 = scmp.eq.s32.totalorder %s630, 0
            %p632 = pneg %p631
            // Predicated region
            $region270: #{tpu_custom_call.1} parent=257 // pred_check
              _
            $region271: #{tpu_custom_call.1} parent=257 // pred_check_branch
              %634 = sbr.rel (%p631) target = $region273
            $region272: #{tpu_custom_call.1} parent=257 // pred_region
              %s635 = sand.u32 1, 7
              %s636 = ssub.s32 1, %s635
              %s637 = scalar_lea.vmem %s608, %s636
              %s638 = ssub.s32 1, %s635
              %s639 = scalar_lea.vmem %s609, %s638 [#allocation2]
              %s640 = sshllo.u32 0, %s635
              loop: start=0, step=1, limit=1
              $region274: #{tpu_custom_call.1} parent=272 // loop_pre_header
                _
              $region275: #{tpu_custom_call.1} parent=272 // loop_header
                %s642 = sphi 0, %s646
                %p643 = scmp.ge.s32.totalorder %s642, 1
                %s647 = sphi %s637, %s637
                %s648 = sphi %s639, %s639
              $region276: #{tpu_custom_call.1} parent=272 // loop_header_branch
                %645 = sbr.rel (%p643) target = $region280
              $region277: #{tpu_custom_call.1} parent=272 // loop_body
                %v649 = vld [vmem:[%s647] sm:%s640]
                %650 = vst [vmem:[%s648] sm:%s640] %v649
              $region278: #{tpu_custom_call.1} parent=272 // loop_footer
                %s646 = sadd.s32 1, %s642
              $region279: #{tpu_custom_call.1} parent=272 // loop_footer_branch
                %641 = sbr.rel target = $region275
              $region280: #{tpu_custom_call.1} parent=272 // loop_exit
                _
            $region273: #{tpu_custom_call.1} parent=257 // pred_fallthru
              _
          $region258: #{tpu_custom_call.1} parent=253 // pred_fallthru
            _
          // Predicated region
          $region259: #{tpu_custom_call.1} parent=253 // pred_check
            %p616 = pneg %p612
          $region260: #{tpu_custom_call.1} parent=253 // pred_check_branch
            %618 = sbr.rel (%p616) target = $region262
          $region261: #{tpu_custom_call.1} parent=253 // pred_region
            %s619 = sshllo.u32 0, 1
            loop: start=0, step=1, limit=1
            $region263: #{tpu_custom_call.1} parent=261 // loop_pre_header
              _
            $region264: #{tpu_custom_call.1} parent=261 // loop_header
              %s621 = sphi 0, %s625
              %p622 = scmp.ge.s32.totalorder %s621, 1
              %s626 = sphi %s608, %s608
              %s627 = sphi %s609, %s609
            $region265: #{tpu_custom_call.1} parent=261 // loop_header_branch
              %624 = sbr.rel (%p622) target = $region269
            $region266: #{tpu_custom_call.1} parent=261 // loop_body
              %v628 = vld [vmem:[%s626] sm:%s619]
              %629 = vst [vmem:[%s627] sm:%s619] %v628
            $region267: #{tpu_custom_call.1} parent=261 // loop_footer
              %s625 = sadd.s32 1, %s621
            $region268: #{tpu_custom_call.1} parent=261 // loop_footer_branch
              %620 = sbr.rel target = $region264
            $region269: #{tpu_custom_call.1} parent=261 // loop_exit
              _
          $region262: #{tpu_custom_call.1} parent=253 // pred_fallthru
            _
          // Predicated region
          $region281: #{tpu_custom_call.1} parent=253 // pred_check
            _
          $region282: #{tpu_custom_call.1} parent=253 // pred_check_branch
            %653 = sbr.rel (0) target = $region284
          $region283: #{tpu_custom_call.1} parent=253 // pred_region
            %654 = vsyncadd %s610, 16
          $region284: #{tpu_custom_call.1} parent=253 // pred_fallthru
            _
        $region254: #{tpu_custom_call.1} parent=35 // pred_fallthru
          _
        %p655 = scmp.eq.s32.totalorder %s601, 0
        // Predicated region
        $region285: #{tpu_custom_call.1} parent=35 // pred_check
          %p656 = pneg %p655
        $region286: #{tpu_custom_call.1} parent=35 // pred_check_branch
          %658 = sbr.rel (%p656) target = $region288
        $region287: #{tpu_custom_call.1} parent=35 // pred_region
          %s659 = smul.addr %s602, 16
          %s660 = scalar_lea.hbm %s7, %s659
          %s661 = scalar_lea.vmem [#allocation2], 5
          %s662 = scalar_lea.sflag [#allocation3], 5
          // Predicated region
          $region289: #{tpu_custom_call.1} parent=287 // pred_check
            _
          $region290: #{tpu_custom_call.1} parent=287 // pred_check_branch
            %664 = sbr.rel target = $region292
          $region291: #{tpu_custom_call.1} parent=287 // pred_region
            %665 = sst [smem:[#allocation15]] [#allocation31]
            %666 = sst [smem:[#allocation16]] [#allocation30]
          $region292: #{tpu_custom_call.1} parent=287 // pred_fallthru
            _
          %668 = shalt.err (0)
          %s670 = sshll.u32 %s661, 4
          %s671 = int_to_ptr.vmem [resolvable:$true] %s670
          %673 = dma.hbm_to_vmem [thread:$0]  %s660, 16, %s671, %s662
        $region288: #{tpu_custom_call.1} parent=35 // pred_fallthru
          _
        %s674 = sadd.s32 %s234, 6
        %s675 = sld [smem:[#allocation7 + %s674]]
        %s676 = sld [smem:[#allocation5 + %s674]]
        %s677 = sld [smem:[#allocation6 + %s674]]
        %p678 = scmp.ne.s32.totalorder %s675, 0
        // Predicated region
        $region293: #{tpu_custom_call.1} parent=35 // pred_check
          %p679 = pneg %p678
        $region294: #{tpu_custom_call.1} parent=35 // pred_check_branch
          %681 = sbr.rel (%p679) target = $region296
        $region295: #{tpu_custom_call.1} parent=35 // pred_region
          %s682 = scalar_lea.vmem %s8, %s677
          %s683 = scalar_lea.vmem [#allocation2], 6
          %s684 = scalar_lea.sflag [#allocation3], 6
          %p686 = scmp.lt.u32.totalorder 1, 8
          %p687 = pneg %p686
          // Predicated region
          $region297: #{tpu_custom_call.1} parent=295 // pred_check
            _
          $region298: #{tpu_custom_call.1} parent=295 // pred_check_branch
            %689 = sbr.rel (%p686) target = $region300
          $region299: #{tpu_custom_call.1} parent=295 // pred_region
            %s704 = sand.u32 1, 7
            %p705 = scmp.eq.s32.totalorder %s704, 0
            %p706 = pneg %p705
            // Predicated region
            $region312: #{tpu_custom_call.1} parent=299 // pred_check
              _
            $region313: #{tpu_custom_call.1} parent=299 // pred_check_branch
              %708 = sbr.rel (%p705) target = $region315
            $region314: #{tpu_custom_call.1} parent=299 // pred_region
              %s709 = sand.u32 1, 7
              %s710 = ssub.s32 1, %s709
              %s711 = scalar_lea.vmem %s682, %s710
              %s712 = ssub.s32 1, %s709
              %s713 = scalar_lea.vmem %s683, %s712 [#allocation2]
              %s714 = sshllo.u32 0, %s709
              loop: start=0, step=1, limit=1
              $region316: #{tpu_custom_call.1} parent=314 // loop_pre_header
                _
              $region317: #{tpu_custom_call.1} parent=314 // loop_header
                %s716 = sphi 0, %s720
                %p717 = scmp.ge.s32.totalorder %s716, 1
                %s721 = sphi %s711, %s711
                %s722 = sphi %s713, %s713
              $region318: #{tpu_custom_call.1} parent=314 // loop_header_branch
                %719 = sbr.rel (%p717) target = $region322
              $region319: #{tpu_custom_call.1} parent=314 // loop_body
                %v723 = vld [vmem:[%s721] sm:%s714]
                %724 = vst [vmem:[%s722] sm:%s714] %v723
              $region320: #{tpu_custom_call.1} parent=314 // loop_footer
                %s720 = sadd.s32 1, %s716
              $region321: #{tpu_custom_call.1} parent=314 // loop_footer_branch
                %715 = sbr.rel target = $region317
              $region322: #{tpu_custom_call.1} parent=314 // loop_exit
                _
            $region315: #{tpu_custom_call.1} parent=299 // pred_fallthru
              _
          $region300: #{tpu_custom_call.1} parent=295 // pred_fallthru
            _
          // Predicated region
          $region301: #{tpu_custom_call.1} parent=295 // pred_check
            %p690 = pneg %p686
          $region302: #{tpu_custom_call.1} parent=295 // pred_check_branch
            %692 = sbr.rel (%p690) target = $region304
          $region303: #{tpu_custom_call.1} parent=295 // pred_region
            %s693 = sshllo.u32 0, 1
            loop: start=0, step=1, limit=1
            $region305: #{tpu_custom_call.1} parent=303 // loop_pre_header
              _
            $region306: #{tpu_custom_call.1} parent=303 // loop_header
              %s695 = sphi 0, %s699
              %p696 = scmp.ge.s32.totalorder %s695, 1
              %s700 = sphi %s682, %s682
              %s701 = sphi %s683, %s683
            $region307: #{tpu_custom_call.1} parent=303 // loop_header_branch
              %698 = sbr.rel (%p696) target = $region311
            $region308: #{tpu_custom_call.1} parent=303 // loop_body
              %v702 = vld [vmem:[%s700] sm:%s693]
              %703 = vst [vmem:[%s701] sm:%s693] %v702
            $region309: #{tpu_custom_call.1} parent=303 // loop_footer
              %s699 = sadd.s32 1, %s695
            $region310: #{tpu_custom_call.1} parent=303 // loop_footer_branch
              %694 = sbr.rel target = $region306
            $region311: #{tpu_custom_call.1} parent=303 // loop_exit
              _
          $region304: #{tpu_custom_call.1} parent=295 // pred_fallthru
            _
          // Predicated region
          $region323: #{tpu_custom_call.1} parent=295 // pred_check
            _
          $region324: #{tpu_custom_call.1} parent=295 // pred_check_branch
            %727 = sbr.rel (0) target = $region326
          $region325: #{tpu_custom_call.1} parent=295 // pred_region
            %728 = vsyncadd %s684, 16
          $region326: #{tpu_custom_call.1} parent=295 // pred_fallthru
            _
        $region296: #{tpu_custom_call.1} parent=35 // pred_fallthru
          _
        %p729 = scmp.eq.s32.totalorder %s675, 0
        // Predicated region
        $region327: #{tpu_custom_call.1} parent=35 // pred_check
          %p730 = pneg %p729
        $region328: #{tpu_custom_call.1} parent=35 // pred_check_branch
          %732 = sbr.rel (%p730) target = $region330
        $region329: #{tpu_custom_call.1} parent=35 // pred_region
          %s733 = smul.addr %s676, 16
          %s734 = scalar_lea.hbm %s7, %s733
          %s735 = scalar_lea.vmem [#allocation2], 6
          %s736 = scalar_lea.sflag [#allocation3], 6
          // Predicated region
          $region331: #{tpu_custom_call.1} parent=329 // pred_check
            _
          $region332: #{tpu_custom_call.1} parent=329 // pred_check_branch
            %738 = sbr.rel target = $region334
          $region333: #{tpu_custom_call.1} parent=329 // pred_region
            %739 = sst [smem:[#allocation15]] [#allocation34]
            %740 = sst [smem:[#allocation16]] [#allocation33]
          $region334: #{tpu_custom_call.1} parent=329 // pred_fallthru
            _
          %742 = shalt.err (0)
          %s744 = sshll.u32 %s735, 4
          %s745 = int_to_ptr.vmem [resolvable:$true] %s744
          %747 = dma.hbm_to_vmem [thread:$0]  %s734, 16, %s745, %s736
        $region330: #{tpu_custom_call.1} parent=35 // pred_fallthru
          _
        %s748 = sadd.s32 %s234, 7
        %s749 = sld [smem:[#allocation7 + %s748]]
        %s750 = sld [smem:[#allocation5 + %s748]]
        %s751 = sld [smem:[#allocation6 + %s748]]
        %p752 = scmp.ne.s32.totalorder %s749, 0
        // Predicated region
        $region335: #{tpu_custom_call.1} parent=35 // pred_check
          %p753 = pneg %p752
        $region336: #{tpu_custom_call.1} parent=35 // pred_check_branch
          %755 = sbr.rel (%p753) target = $region338
        $region337: #{tpu_custom_call.1} parent=35 // pred_region
          %s756 = scalar_lea.vmem %s8, %s751
          %s757 = scalar_lea.vmem [#allocation2], 7
          %s758 = scalar_lea.sflag [#allocation3], 7
          %p760 = scmp.lt.u32.totalorder 1, 8
          %p761 = pneg %p760
          // Predicated region
          $region339: #{tpu_custom_call.1} parent=337 // pred_check
            _
          $region340: #{tpu_custom_call.1} parent=337 // pred_check_branch
            %763 = sbr.rel (%p760) target = $region342
          $region341: #{tpu_custom_call.1} parent=337 // pred_region
            %s778 = sand.u32 1, 7
            %p779 = scmp.eq.s32.totalorder %s778, 0
            %p780 = pneg %p779
            // Predicated region
            $region354: #{tpu_custom_call.1} parent=341 // pred_check
              _
            $region355: #{tpu_custom_call.1} parent=341 // pred_check_branch
              %782 = sbr.rel (%p779) target = $region357
            $region356: #{tpu_custom_call.1} parent=341 // pred_region
              %s783 = sand.u32 1, 7
              %s784 = ssub.s32 1, %s783
              %s785 = scalar_lea.vmem %s756, %s784
              %s786 = ssub.s32 1, %s783
              %s787 = scalar_lea.vmem %s757, %s786 [#allocation2]
              %s788 = sshllo.u32 0, %s783
              loop: start=0, step=1, limit=1
              $region358: #{tpu_custom_call.1} parent=356 // loop_pre_header
                _
              $region359: #{tpu_custom_call.1} parent=356 // loop_header
                %s790 = sphi 0, %s794
                %p791 = scmp.ge.s32.totalorder %s790, 1
                %s795 = sphi %s785, %s785
                %s796 = sphi %s787, %s787
              $region360: #{tpu_custom_call.1} parent=356 // loop_header_branch
                %793 = sbr.rel (%p791) target = $region364
              $region361: #{tpu_custom_call.1} parent=356 // loop_body
                %v797 = vld [vmem:[%s795] sm:%s788]
                %798 = vst [vmem:[%s796] sm:%s788] %v797
              $region362: #{tpu_custom_call.1} parent=356 // loop_footer
                %s794 = sadd.s32 1, %s790
              $region363: #{tpu_custom_call.1} parent=356 // loop_footer_branch
                %789 = sbr.rel target = $region359
              $region364: #{tpu_custom_call.1} parent=356 // loop_exit
                _
            $region357: #{tpu_custom_call.1} parent=341 // pred_fallthru
              _
          $region342: #{tpu_custom_call.1} parent=337 // pred_fallthru
            _
          // Predicated region
          $region343: #{tpu_custom_call.1} parent=337 // pred_check
            %p764 = pneg %p760
          $region344: #{tpu_custom_call.1} parent=337 // pred_check_branch
            %766 = sbr.rel (%p764) target = $region346
          $region345: #{tpu_custom_call.1} parent=337 // pred_region
            %s767 = sshllo.u32 0, 1
            loop: start=0, step=1, limit=1
            $region347: #{tpu_custom_call.1} parent=345 // loop_pre_header
              _
            $region348: #{tpu_custom_call.1} parent=345 // loop_header
              %s769 = sphi 0, %s773
              %p770 = scmp.ge.s32.totalorder %s769, 1
              %s774 = sphi %s756, %s756
              %s775 = sphi %s757, %s757
            $region349: #{tpu_custom_call.1} parent=345 // loop_header_branch
              %772 = sbr.rel (%p770) target = $region353
            $region350: #{tpu_custom_call.1} parent=345 // loop_body
              %v776 = vld [vmem:[%s774] sm:%s767]
              %777 = vst [vmem:[%s775] sm:%s767] %v776
            $region351: #{tpu_custom_call.1} parent=345 // loop_footer
              %s773 = sadd.s32 1, %s769
            $region352: #{tpu_custom_call.1} parent=345 // loop_footer_branch
              %768 = sbr.rel target = $region348
            $region353: #{tpu_custom_call.1} parent=345 // loop_exit
              _
          $region346: #{tpu_custom_call.1} parent=337 // pred_fallthru
            _
          // Predicated region
          $region365: #{tpu_custom_call.1} parent=337 // pred_check
            _
          $region366: #{tpu_custom_call.1} parent=337 // pred_check_branch
            %801 = sbr.rel (0) target = $region368
          $region367: #{tpu_custom_call.1} parent=337 // pred_region
            %802 = vsyncadd %s758, 16
          $region368: #{tpu_custom_call.1} parent=337 // pred_fallthru
            _
        $region338: #{tpu_custom_call.1} parent=35 // pred_fallthru
          _
        %p803 = scmp.eq.s32.totalorder %s749, 0
        // Predicated region
        $region369: #{tpu_custom_call.1} parent=35 // pred_check
          %p804 = pneg %p803
        $region370: #{tpu_custom_call.1} parent=35 // pred_check_branch
          %806 = sbr.rel (%p804) target = $region372
        $region371: #{tpu_custom_call.1} parent=35 // pred_region
          %s807 = smul.addr %s750, 16
          %s808 = scalar_lea.hbm %s7, %s807
          %s809 = scalar_lea.vmem [#allocation2], 7
          %s810 = scalar_lea.sflag [#allocation3], 7
          // Predicated region
          $region373: #{tpu_custom_call.1} parent=371 // pred_check
            _
          $region374: #{tpu_custom_call.1} parent=371 // pred_check_branch
            %812 = sbr.rel target = $region376
          $region375: #{tpu_custom_call.1} parent=371 // pred_region
            %813 = sst [smem:[#allocation15]] [#allocation37]
            %814 = sst [smem:[#allocation16]] [#allocation36]
          $region376: #{tpu_custom_call.1} parent=371 // pred_fallthru
            _
          %816 = shalt.err (0)
          %s818 = sshll.u32 %s809, 4
          %s819 = int_to_ptr.vmem [resolvable:$true] %s818
          %821 = dma.hbm_to_vmem [thread:$0]  %s808, 16, %s819, %s810
        $region372: #{tpu_custom_call.1} parent=35 // pred_fallthru
          _
        %s822 = sadd.s32 %s234, 8
        %s823 = sld [smem:[#allocation7 + %s822]]
        %s824 = sld [smem:[#allocation5 + %s822]]
        %s825 = sld [smem:[#allocation6 + %s822]]
        %p826 = scmp.ne.s32.totalorder %s823, 0
        // Predicated region
        $region377: #{tpu_custom_call.1} parent=35 // pred_check
          %p827 = pneg %p826
        $region378: #{tpu_custom_call.1} parent=35 // pred_check_branch
          %829 = sbr.rel (%p827) target = $region380
        $region379: #{tpu_custom_call.1} parent=35 // pred_region
          %s830 = scalar_lea.vmem %s8, %s825
          %s831 = scalar_lea.vmem [#allocation2], 8
          %s832 = scalar_lea.sflag [#allocation3], 8
          %p834 = scmp.lt.u32.totalorder 1, 8
          %p835 = pneg %p834
          // Predicated region
          $region381: #{tpu_custom_call.1} parent=379 // pred_check
            _
          $region382: #{tpu_custom_call.1} parent=379 // pred_check_branch
            %837 = sbr.rel (%p834) target = $region384
          $region383: #{tpu_custom_call.1} parent=379 // pred_region
            %s852 = sand.u32 1, 7
            %p853 = scmp.eq.s32.totalorder %s852, 0
            %p854 = pneg %p853
            // Predicated region
            $region396: #{tpu_custom_call.1} parent=383 // pred_check
              _
            $region397: #{tpu_custom_call.1} parent=383 // pred_check_branch
              %856 = sbr.rel (%p853) target = $region399
            $region398: #{tpu_custom_call.1} parent=383 // pred_region
              %s857 = sand.u32 1, 7
              %s858 = ssub.s32 1, %s857
              %s859 = scalar_lea.vmem %s830, %s858
              %s860 = ssub.s32 1, %s857
              %s861 = scalar_lea.vmem %s831, %s860 [#allocation2]
              %s862 = sshllo.u32 0, %s857
              loop: start=0, step=1, limit=1
              $region400: #{tpu_custom_call.1} parent=398 // loop_pre_header
                _
              $region401: #{tpu_custom_call.1} parent=398 // loop_header
                %s864 = sphi 0, %s868
                %p865 = scmp.ge.s32.totalorder %s864, 1
                %s869 = sphi %s859, %s859
                %s870 = sphi %s861, %s861
              $region402: #{tpu_custom_call.1} parent=398 // loop_header_branch
                %867 = sbr.rel (%p865) target = $region406
              $region403: #{tpu_custom_call.1} parent=398 // loop_body
                %v871 = vld [vmem:[%s869] sm:%s862]
                %872 = vst [vmem:[%s870] sm:%s862] %v871
              $region404: #{tpu_custom_call.1} parent=398 // loop_footer
                %s868 = sadd.s32 1, %s864
              $region405: #{tpu_custom_call.1} parent=398 // loop_footer_branch
                %863 = sbr.rel target = $region401
              $region406: #{tpu_custom_call.1} parent=398 // loop_exit
                _
            $region399: #{tpu_custom_call.1} parent=383 // pred_fallthru
              _
          $region384: #{tpu_custom_call.1} parent=379 // pred_fallthru
            _
          // Predicated region
          $region385: #{tpu_custom_call.1} parent=379 // pred_check
            %p838 = pneg %p834
          $region386: #{tpu_custom_call.1} parent=379 // pred_check_branch
            %840 = sbr.rel (%p838) target = $region388
          $region387: #{tpu_custom_call.1} parent=379 // pred_region
            %s841 = sshllo.u32 0, 1
            loop: start=0, step=1, limit=1
            $region389: #{tpu_custom_call.1} parent=387 // loop_pre_header
              _
            $region390: #{tpu_custom_call.1} parent=387 // loop_header
              %s843 = sphi 0, %s847
              %p844 = scmp.ge.s32.totalorder %s843, 1
              %s848 = sphi %s830, %s830
              %s849 = sphi %s831, %s831
            $region391: #{tpu_custom_call.1} parent=387 // loop_header_branch
              %846 = sbr.rel (%p844) target = $region395
            $region392: #{tpu_custom_call.1} parent=387 // loop_body
              %v850 = vld [vmem:[%s848] sm:%s841]
              %851 = vst [vmem:[%s849] sm:%s841] %v850
            $region393: #{tpu_custom_call.1} parent=387 // loop_footer
              %s847 = sadd.s32 1, %s843
            $region394: #{tpu_custom_call.1} parent=387 // loop_footer_branch
              %842 = sbr.rel target = $region390
            $region395: #{tpu_custom_call.1} parent=387 // loop_exit
              _
          $region388: #{tpu_custom_call.1} parent=379 // pred_fallthru
            _
          // Predicated region
          $region407: #{tpu_custom_call.1} parent=379 // pred_check
            _
          $region408: #{tpu_custom_call.1} parent=379 // pred_check_branch
            %875 = sbr.rel (0) target = $region410
          $region409: #{tpu_custom_call.1} parent=379 // pred_region
            %876 = vsyncadd %s832, 16
          $region410: #{tpu_custom_call.1} parent=379 // pred_fallthru
            _
        $region380: #{tpu_custom_call.1} parent=35 // pred_fallthru
          _
        %p877 = scmp.eq.s32.totalorder %s823, 0
        // Predicated region
        $region411: #{tpu_custom_call.1} parent=35 // pred_check
          %p878 = pneg %p877
        $region412: #{tpu_custom_call.1} parent=35 // pred_check_branch
          %880 = sbr.rel (%p878) target = $region414
        $region413: #{tpu_custom_call.1} parent=35 // pred_region
          %s881 = smul.addr %s824, 16
          %s882 = scalar_lea.hbm %s7, %s881
          %s883 = scalar_lea.vmem [#allocation2], 8
          %s884 = scalar_lea.sflag [#allocation3], 8
          // Predicated region
          $region415: #{tpu_custom_call.1} parent=413 // pred_check
            _
          $region416: #{tpu_custom_call.1} parent=413 // pred_check_branch
            %886 = sbr.rel target = $region418
          $region417: #{tpu_custom_call.1} parent=413 // pred_region
            %887 = sst [smem:[#allocation15]] [#allocation40]
            %888 = sst [smem:[#allocation16]] [#allocation39]
          $region418: #{tpu_custom_call.1} parent=413 // pred_fallthru
            _
          %890 = shalt.err (0)
          %s892 = sshll.u32 %s883, 4
          %s893 = int_to_ptr.vmem [resolvable:$true] %s892
          %895 = dma.hbm_to_vmem [thread:$0]  %s882, 16, %s893, %s884
        $region414: #{tpu_custom_call.1} parent=35 // pred_fallthru
          _
        %s896 = sadd.s32 %s234, 9
        %s897 = sld [smem:[#allocation7 + %s896]]
        %s898 = sld [smem:[#allocation5 + %s896]]
        %s899 = sld [smem:[#allocation6 + %s896]]
        %p900 = scmp.ne.s32.totalorder %s897, 0
        // Predicated region
        $region419: #{tpu_custom_call.1} parent=35 // pred_check
          %p901 = pneg %p900
        $region420: #{tpu_custom_call.1} parent=35 // pred_check_branch
          %903 = sbr.rel (%p901) target = $region422
        $region421: #{tpu_custom_call.1} parent=35 // pred_region
          %s904 = scalar_lea.vmem %s8, %s899
          %s905 = scalar_lea.vmem [#allocation2], 9
          %s906 = scalar_lea.sflag [#allocation3], 9
          %p908 = scmp.lt.u32.totalorder 1, 8
          %p909 = pneg %p908
          // Predicated region
          $region423: #{tpu_custom_call.1} parent=421 // pred_check
            _
          $region424: #{tpu_custom_call.1} parent=421 // pred_check_branch
            %911 = sbr.rel (%p908) target = $region426
          $region425: #{tpu_custom_call.1} parent=421 // pred_region
            %s926 = sand.u32 1, 7
            %p927 = scmp.eq.s32.totalorder %s926, 0
            %p928 = pneg %p927
            // Predicated region
            $region438: #{tpu_custom_call.1} parent=425 // pred_check
              _
            $region439: #{tpu_custom_call.1} parent=425 // pred_check_branch
              %930 = sbr.rel (%p927) target = $region441
            $region440: #{tpu_custom_call.1} parent=425 // pred_region
              %s931 = sand.u32 1, 7
              %s932 = ssub.s32 1, %s931
              %s933 = scalar_lea.vmem %s904, %s932
              %s934 = ssub.s32 1, %s931
              %s935 = scalar_lea.vmem %s905, %s934 [#allocation2]
              %s936 = sshllo.u32 0, %s931
              loop: start=0, step=1, limit=1
              $region442: #{tpu_custom_call.1} parent=440 // loop_pre_header
                _
              $region443: #{tpu_custom_call.1} parent=440 // loop_header
                %s938 = sphi 0, %s942
                %p939 = scmp.ge.s32.totalorder %s938, 1
                %s943 = sphi %s933, %s933
                %s944 = sphi %s935, %s935
              $region444: #{tpu_custom_call.1} parent=440 // loop_header_branch
                %941 = sbr.rel (%p939) target = $region448
              $region445: #{tpu_custom_call.1} parent=440 // loop_body
                %v945 = vld [vmem:[%s943] sm:%s936]
                %946 = vst [vmem:[%s944] sm:%s936] %v945
              $region446: #{tpu_custom_call.1} parent=440 // loop_footer
                %s942 = sadd.s32 1, %s938
              $region447: #{tpu_custom_call.1} parent=440 // loop_footer_branch
                %937 = sbr.rel target = $region443
              $region448: #{tpu_custom_call.1} parent=440 // loop_exit
                _
            $region441: #{tpu_custom_call.1} parent=425 // pred_fallthru
              _
          $region426: #{tpu_custom_call.1} parent=421 // pred_fallthru
            _
          // Predicated region
          $region427: #{tpu_custom_call.1} parent=421 // pred_check
            %p912 = pneg %p908
          $region428: #{tpu_custom_call.1} parent=421 // pred_check_branch
            %914 = sbr.rel (%p912) target = $region430
          $region429: #{tpu_custom_call.1} parent=421 // pred_region
            %s915 = sshllo.u32 0, 1
            loop: start=0, step=1, limit=1
            $region431: #{tpu_custom_call.1} parent=429 // loop_pre_header
              _
            $region432: #{tpu_custom_call.1} parent=429 // loop_header
              %s917 = sphi 0, %s921
              %p918 = scmp.ge.s32.totalorder %s917, 1
              %s922 = sphi %s904, %s904
              %s923 = sphi %s905, %s905
            $region433: #{tpu_custom_call.1} parent=429 // loop_header_branch
              %920 = sbr.rel (%p918) target = $region437
            $region434: #{tpu_custom_call.1} parent=429 // loop_body
              %v924 = vld [vmem:[%s922] sm:%s915]
              %925 = vst [vmem:[%s923] sm:%s915] %v924
            $region435: #{tpu_custom_call.1} parent=429 // loop_footer
              %s921 = sadd.s32 1, %s917
            $region436: #{tpu_custom_call.1} parent=429 // loop_footer_branch
              %916 = sbr.rel target = $region432
            $region437: #{tpu_custom_call.1} parent=429 // loop_exit
              _
          $region430: #{tpu_custom_call.1} parent=421 // pred_fallthru
            _
          // Predicated region
          $region449: #{tpu_custom_call.1} parent=421 // pred_check
            _
          $region450: #{tpu_custom_call.1} parent=421 // pred_check_branch
            %949 = sbr.rel (0) target = $region452
          $region451: #{tpu_custom_call.1} parent=421 // pred_region
            %950 = vsyncadd %s906, 16
          $region452: #{tpu_custom_call.1} parent=421 // pred_fallthru
            _
        $region422: #{tpu_custom_call.1} parent=35 // pred_fallthru
          _
        %p951 = scmp.eq.s32.totalorder %s897, 0
        // Predicated region
        $region453: #{tpu_custom_call.1} parent=35 // pred_check
          %p952 = pneg %p951
        $region454: #{tpu_custom_call.1} parent=35 // pred_check_branch
          %954 = sbr.rel (%p952) target = $region456
        $region455: #{tpu_custom_call.1} parent=35 // pred_region
          %s955 = smul.addr %s898, 16
          %s956 = scalar_lea.hbm %s7, %s955
          %s957 = scalar_lea.vmem [#allocation2], 9
          %s958 = scalar_lea.sflag [#allocation3], 9
          // Predicated region
          $region457: #{tpu_custom_call.1} parent=455 // pred_check
            _
          $region458: #{tpu_custom_call.1} parent=455 // pred_check_branch
            %960 = sbr.rel target = $region460
          $region459: #{tpu_custom_call.1} parent=455 // pred_region
            %961 = sst [smem:[#allocation15]] [#allocation43]
            %962 = sst [smem:[#allocation16]] [#allocation42]
          $region460: #{tpu_custom_call.1} parent=455 // pred_fallthru
            _
          %964 = shalt.err (0)
          %s966 = sshll.u32 %s957, 4
          %s967 = int_to_ptr.vmem [resolvable:$true] %s966
          %969 = dma.hbm_to_vmem [thread:$0]  %s956, 16, %s967, %s958
        $region456: #{tpu_custom_call.1} parent=35 // pred_fallthru
          _
        %s970 = sadd.s32 %s234, 10
        %s971 = sld [smem:[#allocation7 + %s970]]
        %s972 = sld [smem:[#allocation5 + %s970]]
        %s973 = sld [smem:[#allocation6 + %s970]]
        %p974 = scmp.ne.s32.totalorder %s971, 0
        // Predicated region
        $region461: #{tpu_custom_call.1} parent=35 // pred_check
          %p975 = pneg %p974
        $region462: #{tpu_custom_call.1} parent=35 // pred_check_branch
          %977 = sbr.rel (%p975) target = $region464
        $region463: #{tpu_custom_call.1} parent=35 // pred_region
          %s978 = scalar_lea.vmem %s8, %s973
          %s979 = scalar_lea.vmem [#allocation2], 10
          %s980 = scalar_lea.sflag [#allocation3], 10
          %p982 = scmp.lt.u32.totalorder 1, 8
          %p983 = pneg %p982
          // Predicated region
          $region465: #{tpu_custom_call.1} parent=463 // pred_check
            _
          $region466: #{tpu_custom_call.1} parent=463 // pred_check_branch
            %985 = sbr.rel (%p982) target = $region468
          $region467: #{tpu_custom_call.1} parent=463 // pred_region
            %s1000 = sand.u32 1, 7
            %p1001 = scmp.eq.s32.totalorder %s1000, 0
            %p1002 = pneg %p1001
            // Predicated region
            $region480: #{tpu_custom_call.1} parent=467 // pred_check
              _
            $region481: #{tpu_custom_call.1} parent=467 // pred_check_branch
              %1004 = sbr.rel (%p1001) target = $region483
            $region482: #{tpu_custom_call.1} parent=467 // pred_region
              %s1005 = sand.u32 1, 7
              %s1006 = ssub.s32 1, %s1005
              %s1007 = scalar_lea.vmem %s978, %s1006
              %s1008 = ssub.s32 1, %s1005
              %s1009 = scalar_lea.vmem %s979, %s1008 [#allocation2]
              %s1010 = sshllo.u32 0, %s1005
              loop: start=0, step=1, limit=1
              $region484: #{tpu_custom_call.1} parent=482 // loop_pre_header
                _
              $region485: #{tpu_custom_call.1} parent=482 // loop_header
                %s1012 = sphi 0, %s1016
                %p1013 = scmp.ge.s32.totalorder %s1012, 1
                %s1017 = sphi %s1007, %s1007
                %s1018 = sphi %s1009, %s1009
              $region486: #{tpu_custom_call.1} parent=482 // loop_header_branch
                %1015 = sbr.rel (%p1013) target = $region490
              $region487: #{tpu_custom_call.1} parent=482 // loop_body
                %v1019 = vld [vmem:[%s1017] sm:%s1010]
                %1020 = vst [vmem:[%s1018] sm:%s1010] %v1019
              $region488: #{tpu_custom_call.1} parent=482 // loop_footer
                %s1016 = sadd.s32 1, %s1012
              $region489: #{tpu_custom_call.1} parent=482 // loop_footer_branch
                %1011 = sbr.rel target = $region485
              $region490: #{tpu_custom_call.1} parent=482 // loop_exit
                _
            $region483: #{tpu_custom_call.1} parent=467 // pred_fallthru
              _
          $region468: #{tpu_custom_call.1} parent=463 // pred_fallthru
            _
          // Predicated region
          $region469: #{tpu_custom_call.1} parent=463 // pred_check
            %p986 = pneg %p982
          $region470: #{tpu_custom_call.1} parent=463 // pred_check_branch
            %988 = sbr.rel (%p986) target = $region472
          $region471: #{tpu_custom_call.1} parent=463 // pred_region
            %s989 = sshllo.u32 0, 1
            loop: start=0, step=1, limit=1
            $region473: #{tpu_custom_call.1} parent=471 // loop_pre_header
              _
            $region474: #{tpu_custom_call.1} parent=471 // loop_header
              %s991 = sphi 0, %s995
              %p992 = scmp.ge.s32.totalorder %s991, 1
              %s996 = sphi %s978, %s978
              %s997 = sphi %s979, %s979
            $region475: #{tpu_custom_call.1} parent=471 // loop_header_branch
              %994 = sbr.rel (%p992) target = $region479
            $region476: #{tpu_custom_call.1} parent=471 // loop_body
              %v998 = vld [vmem:[%s996] sm:%s989]
              %999 = vst [vmem:[%s997] sm:%s989] %v998
            $region477: #{tpu_custom_call.1} parent=471 // loop_footer
              %s995 = sadd.s32 1, %s991
            $region478: #{tpu_custom_call.1} parent=471 // loop_footer_branch
              %990 = sbr.rel target = $region474
            $region479: #{tpu_custom_call.1} parent=471 // loop_exit
              _
          $region472: #{tpu_custom_call.1} parent=463 // pred_fallthru
            _
          // Predicated region
          $region491: #{tpu_custom_call.1} parent=463 // pred_check
            _
          $region492: #{tpu_custom_call.1} parent=463 // pred_check_branch
            %1023 = sbr.rel (0) target = $region494
          $region493: #{tpu_custom_call.1} parent=463 // pred_region
            %1024 = vsyncadd %s980, 16
          $region494: #{tpu_custom_call.1} parent=463 // pred_fallthru
            _
        $region464: #{tpu_custom_call.1} parent=35 // pred_fallthru
          _
        %p1025 = scmp.eq.s32.totalorder %s971, 0
        // Predicated region
        $region495: #{tpu_custom_call.1} parent=35 // pred_check
          %p1026 = pneg %p1025
        $region496: #{tpu_custom_call.1} parent=35 // pred_check_branch
          %1028 = sbr.rel (%p1026) target = $region498
        $region497: #{tpu_custom_call.1} parent=35 // pred_region
          %s1029 = smul.addr %s972, 16
          %s1030 = scalar_lea.hbm %s7, %s1029
          %s1031 = scalar_lea.vmem [#allocation2], 10
          %s1032 = scalar_lea.sflag [#allocation3], 10
          // Predicated region
          $region499: #{tpu_custom_call.1} parent=497 // pred_check
            _
          $region500: #{tpu_custom_call.1} parent=497 // pred_check_branch
            %1034 = sbr.rel target = $region502
          $region501: #{tpu_custom_call.1} parent=497 // pred_region
            %1035 = sst [smem:[#allocation15]] [#allocation46]
            %1036 = sst [smem:[#allocation16]] [#allocation45]
          $region502: #{tpu_custom_call.1} parent=497 // pred_fallthru
            _
          %1038 = shalt.err (0)
          %s1040 = sshll.u32 %s1031, 4
          %s1041 = int_to_ptr.vmem [resolvable:$true] %s1040
          %1043 = dma.hbm_to_vmem [thread:$0]  %s1030, 16, %s1041, %s1032
        $region498: #{tpu_custom_call.1} parent=35 // pred_fallthru
          _
        %s1044 = sadd.s32 %s234, 11
        %s1045 = sld [smem:[#allocation7 + %s1044]]
        %s1046 = sld [smem:[#allocation5 + %s1044]]
        %s1047 = sld [smem:[#allocation6 + %s1044]]
        %p1048 = scmp.ne.s32.totalorder %s1045, 0
        // Predicated region
        $region503: #{tpu_custom_call.1} parent=35 // pred_check
          %p1049 = pneg %p1048
        $region504: #{tpu_custom_call.1} parent=35 // pred_check_branch
          %1051 = sbr.rel (%p1049) target = $region506
        $region505: #{tpu_custom_call.1} parent=35 // pred_region
          %s1052 = scalar_lea.vmem %s8, %s1047
          %s1053 = scalar_lea.vmem [#allocation2], 11
          %s1054 = scalar_lea.sflag [#allocation3], 11
          %p1056 = scmp.lt.u32.totalorder 1, 8
          %p1057 = pneg %p1056
          // Predicated region
          $region507: #{tpu_custom_call.1} parent=505 // pred_check
            _
          $region508: #{tpu_custom_call.1} parent=505 // pred_check_branch
            %1059 = sbr.rel (%p1056) target = $region510
          $region509: #{tpu_custom_call.1} parent=505 // pred_region
            %s1074 = sand.u32 1, 7
            %p1075 = scmp.eq.s32.totalorder %s1074, 0
            %p1076 = pneg %p1075
            // Predicated region
            $region522: #{tpu_custom_call.1} parent=509 // pred_check
              _
            $region523: #{tpu_custom_call.1} parent=509 // pred_check_branch
              %1078 = sbr.rel (%p1075) target = $region525
            $region524: #{tpu_custom_call.1} parent=509 // pred_region
              %s1079 = sand.u32 1, 7
              %s1080 = ssub.s32 1, %s1079
              %s1081 = scalar_lea.vmem %s1052, %s1080
              %s1082 = ssub.s32 1, %s1079
              %s1083 = scalar_lea.vmem %s1053, %s1082 [#allocation2]
              %s1084 = sshllo.u32 0, %s1079
              loop: start=0, step=1, limit=1
              $region526: #{tpu_custom_call.1} parent=524 // loop_pre_header
                _
              $region527: #{tpu_custom_call.1} parent=524 // loop_header
                %s1086 = sphi 0, %s1090
                %p1087 = scmp.ge.s32.totalorder %s1086, 1
                %s1091 = sphi %s1081, %s1081
                %s1092 = sphi %s1083, %s1083
              $region528: #{tpu_custom_call.1} parent=524 // loop_header_branch
                %1089 = sbr.rel (%p1087) target = $region532
              $region529: #{tpu_custom_call.1} parent=524 // loop_body
                %v1093 = vld [vmem:[%s1091] sm:%s1084]
                %1094 = vst [vmem:[%s1092] sm:%s1084] %v1093
              $region530: #{tpu_custom_call.1} parent=524 // loop_footer
                %s1090 = sadd.s32 1, %s1086
              $region531: #{tpu_custom_call.1} parent=524 // loop_footer_branch
                %1085 = sbr.rel target = $region527
              $region532: #{tpu_custom_call.1} parent=524 // loop_exit
                _
            $region525: #{tpu_custom_call.1} parent=509 // pred_fallthru
              _
          $region510: #{tpu_custom_call.1} parent=505 // pred_fallthru
            _
          // Predicated region
          $region511: #{tpu_custom_call.1} parent=505 // pred_check
            %p1060 = pneg %p1056
          $region512: #{tpu_custom_call.1} parent=505 // pred_check_branch
            %1062 = sbr.rel (%p1060) target = $region514
          $region513: #{tpu_custom_call.1} parent=505 // pred_region
            %s1063 = sshllo.u32 0, 1
            loop: start=0, step=1, limit=1
            $region515: #{tpu_custom_call.1} parent=513 // loop_pre_header
              _
            $region516: #{tpu_custom_call.1} parent=513 // loop_header
              %s1065 = sphi 0, %s1069
              %p1066 = scmp.ge.s32.totalorder %s1065, 1
              %s1070 = sphi %s1052, %s1052
              %s1071 = sphi %s1053, %s1053
            $region517: #{tpu_custom_call.1} parent=513 // loop_header_branch
              %1068 = sbr.rel (%p1066) target = $region521
            $region518: #{tpu_custom_call.1} parent=513 // loop_body
              %v1072 = vld [vmem:[%s1070] sm:%s1063]
              %1073 = vst [vmem:[%s1071] sm:%s1063] %v1072
            $region519: #{tpu_custom_call.1} parent=513 // loop_footer
              %s1069 = sadd.s32 1, %s1065
            $region520: #{tpu_custom_call.1} parent=513 // loop_footer_branch
              %1064 = sbr.rel target = $region516
            $region521: #{tpu_custom_call.1} parent=513 // loop_exit
              _
          $region514: #{tpu_custom_call.1} parent=505 // pred_fallthru
            _
          // Predicated region
          $region533: #{tpu_custom_call.1} parent=505 // pred_check
            _
          $region534: #{tpu_custom_call.1} parent=505 // pred_check_branch
            %1097 = sbr.rel (0) target = $region536
          $region535: #{tpu_custom_call.1} parent=505 // pred_region
            %1098 = vsyncadd %s1054, 16
          $region536: #{tpu_custom_call.1} parent=505 // pred_fallthru
            _
        $region506: #{tpu_custom_call.1} parent=35 // pred_fallthru
          _
        %p1099 = scmp.eq.s32.totalorder %s1045, 0
        // Predicated region
        $region537: #{tpu_custom_call.1} parent=35 // pred_check
          %p1100 = pneg %p1099
        $region538: #{tpu_custom_call.1} parent=35 // pred_check_branch
          %1102 = sbr.rel (%p1100) target = $region540
        $region539: #{tpu_custom_call.1} parent=35 // pred_region
          %s1103 = smul.addr %s1046, 16
          %s1104 = scalar_lea.hbm %s7, %s1103
          %s1105 = scalar_lea.vmem [#allocation2], 11
          %s1106 = scalar_lea.sflag [#allocation3], 11
          // Predicated region
          $region541: #{tpu_custom_call.1} parent=539 // pred_check
            _
          $region542: #{tpu_custom_call.1} parent=539 // pred_check_branch
            %1108 = sbr.rel target = $region544
          $region543: #{tpu_custom_call.1} parent=539 // pred_region
            %1109 = sst [smem:[#allocation15]] [#allocation49]
            %1110 = sst [smem:[#allocation16]] [#allocation48]
          $region544: #{tpu_custom_call.1} parent=539 // pred_fallthru
            _
          %1112 = shalt.err (0)
          %s1114 = sshll.u32 %s1105, 4
          %s1115 = int_to_ptr.vmem [resolvable:$true] %s1114
          %1117 = dma.hbm_to_vmem [thread:$0]  %s1104, 16, %s1115, %s1106
        $region540: #{tpu_custom_call.1} parent=35 // pred_fallthru
          _
        %s1118 = sadd.s32 %s234, 12
        %s1119 = sld [smem:[#allocation7 + %s1118]]
        %s1120 = sld [smem:[#allocation5 + %s1118]]
        %s1121 = sld [smem:[#allocation6 + %s1118]]
        %p1122 = scmp.ne.s32.totalorder %s1119, 0
        // Predicated region
        $region545: #{tpu_custom_call.1} parent=35 // pred_check
          %p1123 = pneg %p1122
        $region546: #{tpu_custom_call.1} parent=35 // pred_check_branch
          %1125 = sbr.rel (%p1123) target = $region548
        $region547: #{tpu_custom_call.1} parent=35 // pred_region
          %s1126 = scalar_lea.vmem %s8, %s1121
          %s1127 = scalar_lea.vmem [#allocation2], 12
          %s1128 = scalar_lea.sflag [#allocation3], 12
          %p1130 = scmp.lt.u32.totalorder 1, 8
          %p1131 = pneg %p1130
          // Predicated region
          $region549: #{tpu_custom_call.1} parent=547 // pred_check
            _
          $region550: #{tpu_custom_call.1} parent=547 // pred_check_branch
            %1133 = sbr.rel (%p1130) target = $region552
          $region551: #{tpu_custom_call.1} parent=547 // pred_region
            %s1148 = sand.u32 1, 7
            %p1149 = scmp.eq.s32.totalorder %s1148, 0
            %p1150 = pneg %p1149
            // Predicated region
            $region564: #{tpu_custom_call.1} parent=551 // pred_check
              _
            $region565: #{tpu_custom_call.1} parent=551 // pred_check_branch
              %1152 = sbr.rel (%p1149) target = $region567
            $region566: #{tpu_custom_call.1} parent=551 // pred_region
              %s1153 = sand.u32 1, 7
              %s1154 = ssub.s32 1, %s1153
              %s1155 = scalar_lea.vmem %s1126, %s1154
              %s1156 = ssub.s32 1, %s1153
              %s1157 = scalar_lea.vmem %s1127, %s1156 [#allocation2]
              %s1158 = sshllo.u32 0, %s1153
              loop: start=0, step=1, limit=1
              $region568: #{tpu_custom_call.1} parent=566 // loop_pre_header
                _
              $region569: #{tpu_custom_call.1} parent=566 // loop_header
                %s1160 = sphi 0, %s1164
                %p1161 = scmp.ge.s32.totalorder %s1160, 1
                %s1165 = sphi %s1155, %s1155
                %s1166 = sphi %s1157, %s1157
              $region570: #{tpu_custom_call.1} parent=566 // loop_header_branch
                %1163 = sbr.rel (%p1161) target = $region574
              $region571: #{tpu_custom_call.1} parent=566 // loop_body
                %v1167 = vld [vmem:[%s1165] sm:%s1158]
                %1168 = vst [vmem:[%s1166] sm:%s1158] %v1167
              $region572: #{tpu_custom_call.1} parent=566 // loop_footer
                %s1164 = sadd.s32 1, %s1160
              $region573: #{tpu_custom_call.1} parent=566 // loop_footer_branch
                %1159 = sbr.rel target = $region569
              $region574: #{tpu_custom_call.1} parent=566 // loop_exit
                _
            $region567: #{tpu_custom_call.1} parent=551 // pred_fallthru
              _
          $region552: #{tpu_custom_call.1} parent=547 // pred_fallthru
            _
          // Predicated region
          $region553: #{tpu_custom_call.1} parent=547 // pred_check
            %p1134 = pneg %p1130
          $region554: #{tpu_custom_call.1} parent=547 // pred_check_branch
            %1136 = sbr.rel (%p1134) target = $region556
          $region555: #{tpu_custom_call.1} parent=547 // pred_region
            %s1137 = sshllo.u32 0, 1
            loop: start=0, step=1, limit=1
            $region557: #{tpu_custom_call.1} parent=555 // loop_pre_header
              _
            $region558: #{tpu_custom_call.1} parent=555 // loop_header
              %s1139 = sphi 0, %s1143
              %p1140 = scmp.ge.s32.totalorder %s1139, 1
              %s1144 = sphi %s1126, %s1126
              %s1145 = sphi %s1127, %s1127
            $region559: #{tpu_custom_call.1} parent=555 // loop_header_branch
              %1142 = sbr.rel (%p1140) target = $region563
            $region560: #{tpu_custom_call.1} parent=555 // loop_body
              %v1146 = vld [vmem:[%s1144] sm:%s1137]
              %1147 = vst [vmem:[%s1145] sm:%s1137] %v1146
            $region561: #{tpu_custom_call.1} parent=555 // loop_footer
              %s1143 = sadd.s32 1, %s1139
            $region562: #{tpu_custom_call.1} parent=555 // loop_footer_branch
              %1138 = sbr.rel target = $region558
            $region563: #{tpu_custom_call.1} parent=555 // loop_exit
              _
          $region556: #{tpu_custom_call.1} parent=547 // pred_fallthru
            _
          // Predicated region
          $region575: #{tpu_custom_call.1} parent=547 // pred_check
            _
          $region576: #{tpu_custom_call.1} parent=547 // pred_check_branch
            %1171 = sbr.rel (0) target = $region578
          $region577: #{tpu_custom_call.1} parent=547 // pred_region
            %1172 = vsyncadd %s1128, 16
          $region578: #{tpu_custom_call.1} parent=547 // pred_fallthru
            _
        $region548: #{tpu_custom_call.1} parent=35 // pred_fallthru
          _
        %p1173 = scmp.eq.s32.totalorder %s1119, 0
        // Predicated region
        $region579: #{tpu_custom_call.1} parent=35 // pred_check
          %p1174 = pneg %p1173
        $region580: #{tpu_custom_call.1} parent=35 // pred_check_branch
          %1176 = sbr.rel (%p1174) target = $region582
        $region581: #{tpu_custom_call.1} parent=35 // pred_region
          %s1177 = smul.addr %s1120, 16
          %s1178 = scalar_lea.hbm %s7, %s1177
          %s1179 = scalar_lea.vmem [#allocation2], 12
          %s1180 = scalar_lea.sflag [#allocation3], 12
          // Predicated region
          $region583: #{tpu_custom_call.1} parent=581 // pred_check
            _
          $region584: #{tpu_custom_call.1} parent=581 // pred_check_branch
            %1182 = sbr.rel target = $region586
          $region585: #{tpu_custom_call.1} parent=581 // pred_region
            %1183 = sst [smem:[#allocation15]] [#allocation52]
            %1184 = sst [smem:[#allocation16]] [#allocation51]
          $region586: #{tpu_custom_call.1} parent=581 // pred_fallthru
            _
          %1186 = shalt.err (0)
          %s1188 = sshll.u32 %s1179, 4
          %s1189 = int_to_ptr.vmem [resolvable:$true] %s1188
          %1191 = dma.hbm_to_vmem [thread:$0]  %s1178, 16, %s1189, %s1180
        $region582: #{tpu_custom_call.1} parent=35 // pred_fallthru
          _
        %s1192 = sadd.s32 %s234, 13
        %s1193 = sld [smem:[#allocation7 + %s1192]]
        %s1194 = sld [smem:[#allocation5 + %s1192]]
        %s1195 = sld [smem:[#allocation6 + %s1192]]
        %p1196 = scmp.ne.s32.totalorder %s1193, 0
        // Predicated region
        $region587: #{tpu_custom_call.1} parent=35 // pred_check
          %p1197 = pneg %p1196
        $region588: #{tpu_custom_call.1} parent=35 // pred_check_branch
          %1199 = sbr.rel (%p1197) target = $region590
        $region589: #{tpu_custom_call.1} parent=35 // pred_region
          %s1200 = scalar_lea.vmem %s8, %s1195
          %s1201 = scalar_lea.vmem [#allocation2], 13
          %s1202 = scalar_lea.sflag [#allocation3], 13
          %p1204 = scmp.lt.u32.totalorder 1, 8
          %p1205 = pneg %p1204
          // Predicated region
          $region591: #{tpu_custom_call.1} parent=589 // pred_check
            _
          $region592: #{tpu_custom_call.1} parent=589 // pred_check_branch
            %1207 = sbr.rel (%p1204) target = $region594
          $region593: #{tpu_custom_call.1} parent=589 // pred_region
            %s1222 = sand.u32 1, 7
            %p1223 = scmp.eq.s32.totalorder %s1222, 0
            %p1224 = pneg %p1223
            // Predicated region
            $region606: #{tpu_custom_call.1} parent=593 // pred_check
              _
            $region607: #{tpu_custom_call.1} parent=593 // pred_check_branch
              %1226 = sbr.rel (%p1223) target = $region609
            $region608: #{tpu_custom_call.1} parent=593 // pred_region
              %s1227 = sand.u32 1, 7
              %s1228 = ssub.s32 1, %s1227
              %s1229 = scalar_lea.vmem %s1200, %s1228
              %s1230 = ssub.s32 1, %s1227
              %s1231 = scalar_lea.vmem %s1201, %s1230 [#allocation2]
              %s1232 = sshllo.u32 0, %s1227
              loop: start=0, step=1, limit=1
              $region610: #{tpu_custom_call.1} parent=608 // loop_pre_header
                _
              $region611: #{tpu_custom_call.1} parent=608 // loop_header
                %s1234 = sphi 0, %s1238
                %p1235 = scmp.ge.s32.totalorder %s1234, 1
                %s1239 = sphi %s1229, %s1229
                %s1240 = sphi %s1231, %s1231
              $region612: #{tpu_custom_call.1} parent=608 // loop_header_branch
                %1237 = sbr.rel (%p1235) target = $region616
              $region613: #{tpu_custom_call.1} parent=608 // loop_body
                %v1241 = vld [vmem:[%s1239] sm:%s1232]
                %1242 = vst [vmem:[%s1240] sm:%s1232] %v1241
              $region614: #{tpu_custom_call.1} parent=608 // loop_footer
                %s1238 = sadd.s32 1, %s1234
              $region615: #{tpu_custom_call.1} parent=608 // loop_footer_branch
                %1233 = sbr.rel target = $region611
              $region616: #{tpu_custom_call.1} parent=608 // loop_exit
                _
            $region609: #{tpu_custom_call.1} parent=593 // pred_fallthru
              _
          $region594: #{tpu_custom_call.1} parent=589 // pred_fallthru
            _
          // Predicated region
          $region595: #{tpu_custom_call.1} parent=589 // pred_check
            %p1208 = pneg %p1204
          $region596: #{tpu_custom_call.1} parent=589 // pred_check_branch
            %1210 = sbr.rel (%p1208) target = $region598
          $region597: #{tpu_custom_call.1} parent=589 // pred_region
            %s1211 = sshllo.u32 0, 1
            loop: start=0, step=1, limit=1
            $region599: #{tpu_custom_call.1} parent=597 // loop_pre_header
              _
            $region600: #{tpu_custom_call.1} parent=597 // loop_header
              %s1213 = sphi 0, %s1217
              %p1214 = scmp.ge.s32.totalorder %s1213, 1
              %s1218 = sphi %s1200, %s1200
              %s1219 = sphi %s1201, %s1201
            $region601: #{tpu_custom_call.1} parent=597 // loop_header_branch
              %1216 = sbr.rel (%p1214) target = $region605
            $region602: #{tpu_custom_call.1} parent=597 // loop_body
              %v1220 = vld [vmem:[%s1218] sm:%s1211]
              %1221 = vst [vmem:[%s1219] sm:%s1211] %v1220
            $region603: #{tpu_custom_call.1} parent=597 // loop_footer
              %s1217 = sadd.s32 1, %s1213
            $region604: #{tpu_custom_call.1} parent=597 // loop_footer_branch
              %1212 = sbr.rel target = $region600
            $region605: #{tpu_custom_call.1} parent=597 // loop_exit
              _
          $region598: #{tpu_custom_call.1} parent=589 // pred_fallthru
            _
          // Predicated region
          $region617: #{tpu_custom_call.1} parent=589 // pred_check
            _
          $region618: #{tpu_custom_call.1} parent=589 // pred_check_branch
            %1245 = sbr.rel (0) target = $region620
          $region619: #{tpu_custom_call.1} parent=589 // pred_region
            %1246 = vsyncadd %s1202, 16
          $region620: #{tpu_custom_call.1} parent=589 // pred_fallthru
            _
        $region590: #{tpu_custom_call.1} parent=35 // pred_fallthru
          _
        %p1247 = scmp.eq.s32.totalorder %s1193, 0
        // Predicated region
        $region621: #{tpu_custom_call.1} parent=35 // pred_check
          %p1248 = pneg %p1247
        $region622: #{tpu_custom_call.1} parent=35 // pred_check_branch
          %1250 = sbr.rel (%p1248) target = $region624
        $region623: #{tpu_custom_call.1} parent=35 // pred_region
          %s1251 = smul.addr %s1194, 16
          %s1252 = scalar_lea.hbm %s7, %s1251
          %s1253 = scalar_lea.vmem [#allocation2], 13
          %s1254 = scalar_lea.sflag [#allocation3], 13
          // Predicated region
          $region625: #{tpu_custom_call.1} parent=623 // pred_check
            _
          $region626: #{tpu_custom_call.1} parent=623 // pred_check_branch
            %1256 = sbr.rel target = $region628
          $region627: #{tpu_custom_call.1} parent=623 // pred_region
            %1257 = sst [smem:[#allocation15]] [#allocation55]
            %1258 = sst [smem:[#allocation16]] [#allocation54]
          $region628: #{tpu_custom_call.1} parent=623 // pred_fallthru
            _
          %1260 = shalt.err (0)
          %s1262 = sshll.u32 %s1253, 4
          %s1263 = int_to_ptr.vmem [resolvable:$true] %s1262
          %1265 = dma.hbm_to_vmem [thread:$0]  %s1252, 16, %s1263, %s1254
        $region624: #{tpu_custom_call.1} parent=35 // pred_fallthru
          _
        %s1266 = sadd.s32 %s234, 14
        %s1267 = sld [smem:[#allocation7 + %s1266]]
        %s1268 = sld [smem:[#allocation5 + %s1266]]
        %s1269 = sld [smem:[#allocation6 + %s1266]]
        %p1270 = scmp.ne.s32.totalorder %s1267, 0
        // Predicated region
        $region629: #{tpu_custom_call.1} parent=35 // pred_check
          %p1271 = pneg %p1270
        $region630: #{tpu_custom_call.1} parent=35 // pred_check_branch
          %1273 = sbr.rel (%p1271) target = $region632
        $region631: #{tpu_custom_call.1} parent=35 // pred_region
          %s1274 = scalar_lea.vmem %s8, %s1269
          %s1275 = scalar_lea.vmem [#allocation2], 14
          %s1276 = scalar_lea.sflag [#allocation3], 14
          %p1278 = scmp.lt.u32.totalorder 1, 8
          %p1279 = pneg %p1278
          // Predicated region
          $region633: #{tpu_custom_call.1} parent=631 // pred_check
            _
          $region634: #{tpu_custom_call.1} parent=631 // pred_check_branch
            %1281 = sbr.rel (%p1278) target = $region636
          $region635: #{tpu_custom_call.1} parent=631 // pred_region
            %s1296 = sand.u32 1, 7
            %p1297 = scmp.eq.s32.totalorder %s1296, 0
            %p1298 = pneg %p1297
            // Predicated region
            $region648: #{tpu_custom_call.1} parent=635 // pred_check
              _
            $region649: #{tpu_custom_call.1} parent=635 // pred_check_branch
              %1300 = sbr.rel (%p1297) target = $region651
            $region650: #{tpu_custom_call.1} parent=635 // pred_region
              %s1301 = sand.u32 1, 7
              %s1302 = ssub.s32 1, %s1301
              %s1303 = scalar_lea.vmem %s1274, %s1302
              %s1304 = ssub.s32 1, %s1301
              %s1305 = scalar_lea.vmem %s1275, %s1304 [#allocation2]
              %s1306 = sshllo.u32 0, %s1301
              loop: start=0, step=1, limit=1
              $region652: #{tpu_custom_call.1} parent=650 // loop_pre_header
                _
              $region653: #{tpu_custom_call.1} parent=650 // loop_header
                %s1308 = sphi 0, %s1312
                %p1309 = scmp.ge.s32.totalorder %s1308, 1
                %s1313 = sphi %s1303, %s1303
                %s1314 = sphi %s1305, %s1305
              $region654: #{tpu_custom_call.1} parent=650 // loop_header_branch
                %1311 = sbr.rel (%p1309) target = $region658
              $region655: #{tpu_custom_call.1} parent=650 // loop_body
                %v1315 = vld [vmem:[%s1313] sm:%s1306]
                %1316 = vst [vmem:[%s1314] sm:%s1306] %v1315
              $region656: #{tpu_custom_call.1} parent=650 // loop_footer
                %s1312 = sadd.s32 1, %s1308
              $region657: #{tpu_custom_call.1} parent=650 // loop_footer_branch
                %1307 = sbr.rel target = $region653
              $region658: #{tpu_custom_call.1} parent=650 // loop_exit
                _
            $region651: #{tpu_custom_call.1} parent=635 // pred_fallthru
              _
          $region636: #{tpu_custom_call.1} parent=631 // pred_fallthru
            _
          // Predicated region
          $region637: #{tpu_custom_call.1} parent=631 // pred_check
            %p1282 = pneg %p1278
          $region638: #{tpu_custom_call.1} parent=631 // pred_check_branch
            %1284 = sbr.rel (%p1282) target = $region640
          $region639: #{tpu_custom_call.1} parent=631 // pred_region
            %s1285 = sshllo.u32 0, 1
            loop: start=0, step=1, limit=1
            $region641: #{tpu_custom_call.1} parent=639 // loop_pre_header
              _
            $region642: #{tpu_custom_call.1} parent=639 // loop_header
              %s1287 = sphi 0, %s1291
              %p1288 = scmp.ge.s32.totalorder %s1287, 1
              %s1292 = sphi %s1274, %s1274
              %s1293 = sphi %s1275, %s1275
            $region643: #{tpu_custom_call.1} parent=639 // loop_header_branch
              %1290 = sbr.rel (%p1288) target = $region647
            $region644: #{tpu_custom_call.1} parent=639 // loop_body
              %v1294 = vld [vmem:[%s1292] sm:%s1285]
              %1295 = vst [vmem:[%s1293] sm:%s1285] %v1294
            $region645: #{tpu_custom_call.1} parent=639 // loop_footer
              %s1291 = sadd.s32 1, %s1287
            $region646: #{tpu_custom_call.1} parent=639 // loop_footer_branch
              %1286 = sbr.rel target = $region642
            $region647: #{tpu_custom_call.1} parent=639 // loop_exit
              _
          $region640: #{tpu_custom_call.1} parent=631 // pred_fallthru
            _
          // Predicated region
          $region659: #{tpu_custom_call.1} parent=631 // pred_check
            _
          $region660: #{tpu_custom_call.1} parent=631 // pred_check_branch
            %1319 = sbr.rel (0) target = $region662
          $region661: #{tpu_custom_call.1} parent=631 // pred_region
            %1320 = vsyncadd %s1276, 16
          $region662: #{tpu_custom_call.1} parent=631 // pred_fallthru
            _
        $region632: #{tpu_custom_call.1} parent=35 // pred_fallthru
          _
        %p1321 = scmp.eq.s32.totalorder %s1267, 0
        // Predicated region
        $region663: #{tpu_custom_call.1} parent=35 // pred_check
          %p1322 = pneg %p1321
        $region664: #{tpu_custom_call.1} parent=35 // pred_check_branch
          %1324 = sbr.rel (%p1322) target = $region666
        $region665: #{tpu_custom_call.1} parent=35 // pred_region
          %s1325 = smul.addr %s1268, 16
          %s1326 = scalar_lea.hbm %s7, %s1325
          %s1327 = scalar_lea.vmem [#allocation2], 14
          %s1328 = scalar_lea.sflag [#allocation3], 14
          // Predicated region
          $region667: #{tpu_custom_call.1} parent=665 // pred_check
            _
          $region668: #{tpu_custom_call.1} parent=665 // pred_check_branch
            %1330 = sbr.rel target = $region670
          $region669: #{tpu_custom_call.1} parent=665 // pred_region
            %1331 = sst [smem:[#allocation15]] [#allocation58]
            %1332 = sst [smem:[#allocation16]] [#allocation57]
          $region670: #{tpu_custom_call.1} parent=665 // pred_fallthru
            _
          %1334 = shalt.err (0)
          %s1336 = sshll.u32 %s1327, 4
          %s1337 = int_to_ptr.vmem [resolvable:$true] %s1336
          %1339 = dma.hbm_to_vmem [thread:$0]  %s1326, 16, %s1337, %s1328
        $region666: #{tpu_custom_call.1} parent=35 // pred_fallthru
          _
        %s1340 = sadd.s32 %s234, 15
        %s1341 = sld [smem:[#allocation7 + %s1340]]
        %s1342 = sld [smem:[#allocation5 + %s1340]]
        %s1343 = sld [smem:[#allocation6 + %s1340]]
        %p1344 = scmp.ne.s32.totalorder %s1341, 0
        // Predicated region
        $region671: #{tpu_custom_call.1} parent=35 // pred_check
          %p1345 = pneg %p1344
        $region672: #{tpu_custom_call.1} parent=35 // pred_check_branch
          %1347 = sbr.rel (%p1345) target = $region674
        $region673: #{tpu_custom_call.1} parent=35 // pred_region
          %s1348 = scalar_lea.vmem %s8, %s1343
          %s1349 = scalar_lea.vmem [#allocation2], 15
          %s1350 = scalar_lea.sflag [#allocation3], 15
          %p1352 = scmp.lt.u32.totalorder 1, 8
          %p1353 = pneg %p1352
          // Predicated region
          $region675: #{tpu_custom_call.1} parent=673 // pred_check
            _
          $region676: #{tpu_custom_call.1} parent=673 // pred_check_branch
            %1355 = sbr.rel (%p1352) target = $region678
          $region677: #{tpu_custom_call.1} parent=673 // pred_region
            %s1370 = sand.u32 1, 7
            %p1371 = scmp.eq.s32.totalorder %s1370, 0
            %p1372 = pneg %p1371
            // Predicated region
            $region690: #{tpu_custom_call.1} parent=677 // pred_check
              _
            $region691: #{tpu_custom_call.1} parent=677 // pred_check_branch
              %1374 = sbr.rel (%p1371) target = $region693
            $region692: #{tpu_custom_call.1} parent=677 // pred_region
              %s1375 = sand.u32 1, 7
              %s1376 = ssub.s32 1, %s1375
              %s1377 = scalar_lea.vmem %s1348, %s1376
              %s1378 = ssub.s32 1, %s1375
              %s1379 = scalar_lea.vmem %s1349, %s1378 [#allocation2]
              %s1380 = sshllo.u32 0, %s1375
              loop: start=0, step=1, limit=1
              $region694: #{tpu_custom_call.1} parent=692 // loop_pre_header
                _
              $region695: #{tpu_custom_call.1} parent=692 // loop_header
                %s1382 = sphi 0, %s1386
                %p1383 = scmp.ge.s32.totalorder %s1382, 1
                %s1387 = sphi %s1377, %s1377
                %s1388 = sphi %s1379, %s1379
              $region696: #{tpu_custom_call.1} parent=692 // loop_header_branch
                %1385 = sbr.rel (%p1383) target = $region700
              $region697: #{tpu_custom_call.1} parent=692 // loop_body
                %v1389 = vld [vmem:[%s1387] sm:%s1380]
                %1390 = vst [vmem:[%s1388] sm:%s1380] %v1389
              $region698: #{tpu_custom_call.1} parent=692 // loop_footer
                %s1386 = sadd.s32 1, %s1382
              $region699: #{tpu_custom_call.1} parent=692 // loop_footer_branch
                %1381 = sbr.rel target = $region695
              $region700: #{tpu_custom_call.1} parent=692 // loop_exit
                _
            $region693: #{tpu_custom_call.1} parent=677 // pred_fallthru
              _
          $region678: #{tpu_custom_call.1} parent=673 // pred_fallthru
            _
          // Predicated region
          $region679: #{tpu_custom_call.1} parent=673 // pred_check
            %p1356 = pneg %p1352
          $region680: #{tpu_custom_call.1} parent=673 // pred_check_branch
            %1358 = sbr.rel (%p1356) target = $region682
          $region681: #{tpu_custom_call.1} parent=673 // pred_region
            %s1359 = sshllo.u32 0, 1
            loop: start=0, step=1, limit=1
            $region683: #{tpu_custom_call.1} parent=681 // loop_pre_header
              _
            $region684: #{tpu_custom_call.1} parent=681 // loop_header
              %s1361 = sphi 0, %s1365
              %p1362 = scmp.ge.s32.totalorder %s1361, 1
              %s1366 = sphi %s1348, %s1348
              %s1367 = sphi %s1349, %s1349
            $region685: #{tpu_custom_call.1} parent=681 // loop_header_branch
              %1364 = sbr.rel (%p1362) target = $region689
            $region686: #{tpu_custom_call.1} parent=681 // loop_body
              %v1368 = vld [vmem:[%s1366] sm:%s1359]
              %1369 = vst [vmem:[%s1367] sm:%s1359] %v1368
            $region687: #{tpu_custom_call.1} parent=681 // loop_footer
              %s1365 = sadd.s32 1, %s1361
            $region688: #{tpu_custom_call.1} parent=681 // loop_footer_branch
              %1360 = sbr.rel target = $region684
            $region689: #{tpu_custom_call.1} parent=681 // loop_exit
              _
          $region682: #{tpu_custom_call.1} parent=673 // pred_fallthru
            _
          // Predicated region
          $region701: #{tpu_custom_call.1} parent=673 // pred_check
            _
          $region702: #{tpu_custom_call.1} parent=673 // pred_check_branch
            %1393 = sbr.rel (0) target = $region704
          $region703: #{tpu_custom_call.1} parent=673 // pred_region
            %1394 = vsyncadd %s1350, 16
          $region704: #{tpu_custom_call.1} parent=673 // pred_fallthru
            _
        $region674: #{tpu_custom_call.1} parent=35 // pred_fallthru
          _
        %p1395 = scmp.eq.s32.totalorder %s1341, 0
        // Predicated region
        $region705: #{tpu_custom_call.1} parent=35 // pred_check
          %p1396 = pneg %p1395
        $region706: #{tpu_custom_call.1} parent=35 // pred_check_branch
          %1398 = sbr.rel (%p1396) target = $region708
        $region707: #{tpu_custom_call.1} parent=35 // pred_region
          %s1399 = smul.addr %s1342, 16
          %s1400 = scalar_lea.hbm %s7, %s1399
          %s1401 = scalar_lea.vmem [#allocation2], 15
          %s1402 = scalar_lea.sflag [#allocation3], 15
          // Predicated region
          $region709: #{tpu_custom_call.1} parent=707 // pred_check
            _
          $region710: #{tpu_custom_call.1} parent=707 // pred_check_branch
            %1404 = sbr.rel target = $region712
          $region711: #{tpu_custom_call.1} parent=707 // pred_region
            %1405 = sst [smem:[#allocation15]] [#allocation61]
            %1406 = sst [smem:[#allocation16]] [#allocation60]
          $region712: #{tpu_custom_call.1} parent=707 // pred_fallthru
            _
          %1408 = shalt.err (0)
          %s1410 = sshll.u32 %s1401, 4
          %s1411 = int_to_ptr.vmem [resolvable:$true] %s1410
          %1413 = dma.hbm_to_vmem [thread:$0]  %s1400, 16, %s1411, %s1402
        $region708: #{tpu_custom_call.1} parent=35 // pred_fallthru
          _
        %v1414 = vlaneseq
        %v1415 = vshrl.u32 %v1414, 7
        %v1416 = vadd.s32 %v1415, 8
        %v1417 = vstv %s233
        %v1418 = vadd.s32 %v1417, %v1415
        %v1419 = vadd.s32 %v1417, %v1416
        %vm1420 = vcmp.ge.s32.totalorder %v1418, 5
        %vm1421 = vcmp.ge.s32.totalorder %v1419, 5
        %v1422 = vsel %vm1420, 1, 0
        %v1423 = vsel %vm1421, 1, 0
        %v1424 = vcvt.s32.f32 %v1422
        %v1425 = vcvt.s32.f32 %v1423
        %v1426 = vld [vmem:[%s4] sm:$0x1]
        %v1427 = vld [vmem:[%s4 + $0x1] sm:$0x1]
        %v1428 = vsub.f32 %v1427, %v1426
        %v1429 = vlaneseq
        %v1430 = vshrl.u32 %v1429, 7
        %v1431 = vsub.s32 0, %v1430
        %v1432 = vrot.slane %v1428, %v1431
        %v1433 = vmul.f32 %v1424, %v1432
        %v1434 = vmul.f32 %v1425, %v1432
        %v1435 = vlaneseq
        %v1436 = vshrl.u32 %v1435, 7
        %v1437 = vsub.s32 0, %v1436
        %v1438 = vrot.slane %v1426, %v1437
        %v1439 = vadd.f32 %v1438, %v1433
        %v1440 = vadd.f32 %v1438, %v1434
        %v1441 = vld [vmem:[#allocation8] sm:$0xff]
        %v1442 = vld [vmem:[#allocation8 + $0x8] sm:$0xff]
        %v1443 = vadd.f32 %v1441, %v1439
        %v1444 = vadd.f32 %v1442, %v1440
        %s1445 = smul.u32 1, 1
        %s1446 = sshll.u32 %s1445, 4
        %1447 = dma.done [#allocation3], %s1446
        %s1448 = scalar_lea.sflag [#allocation3], 1
        %s1449 = sshll.u32 %s1445, 4
        %1450 = dma.done %s1448, %s1449
        %s1451 = scalar_lea.sflag [#allocation3], 2
        %s1452 = sshll.u32 %s1445, 4
        %1453 = dma.done %s1451, %s1452
        %s1454 = scalar_lea.sflag [#allocation3], 3
        %s1455 = sshll.u32 %s1445, 4
        %1456 = dma.done %s1454, %s1455
        %s1457 = scalar_lea.sflag [#allocation3], 4
        %s1458 = sshll.u32 %s1445, 4
        %1459 = dma.done %s1457, %s1458
        %s1460 = scalar_lea.sflag [#allocation3], 5
        %s1461 = sshll.u32 %s1445, 4
        %1462 = dma.done %s1460, %s1461
        %s1463 = scalar_lea.sflag [#allocation3], 6
        %s1464 = sshll.u32 %s1445, 4
        %1465 = dma.done %s1463, %s1464
        %s1466 = scalar_lea.sflag [#allocation3], 7
        %s1467 = sshll.u32 %s1445, 4
        %1468 = dma.done %s1466, %s1467
        %s1469 = scalar_lea.sflag [#allocation3], 8
        %s1470 = sshll.u32 %s1445, 4
        %1471 = dma.done %s1469, %s1470
        %s1472 = scalar_lea.sflag [#allocation3], 9
        %s1473 = sshll.u32 %s1445, 4
        %1474 = dma.done %s1472, %s1473
        %s1475 = scalar_lea.sflag [#allocation3], 10
        %s1476 = sshll.u32 %s1445, 4
        %1477 = dma.done %s1475, %s1476
        %s1478 = scalar_lea.sflag [#allocation3], 11
        %s1479 = sshll.u32 %s1445, 4
        %1480 = dma.done %s1478, %s1479
        %s1481 = scalar_lea.sflag [#allocation3], 12
        %s1482 = sshll.u32 %s1445, 4
        %1483 = dma.done %s1481, %s1482
        %s1484 = scalar_lea.sflag [#allocation3], 13
        %s1485 = sshll.u32 %s1445, 4
        %1486 = dma.done %s1484, %s1485
        %s1487 = scalar_lea.sflag [#allocation3], 14
        %s1488 = sshll.u32 %s1445, 4
        %1489 = dma.done %s1487, %s1488
        %s1490 = scalar_lea.sflag [#allocation3], 15
        %s1491 = sshll.u32 %s1445, 4
        %1492 = dma.done %s1490, %s1491
        %v1493 = vld [vmem:[#allocation2] sm:$0xff]
        %v1494 = vld [vmem:[#allocation2 + $0x8] sm:$0xff]
        %v1495 = vadd.f32 %v1493, %v1443
        %v1496 = vadd.f32 %v1494, %v1444
        %1497 = vadd.xlane.f32.xlu0 %v1495
        %v1498 = vpop.xlane.xlu0 %1497
        %1499 = vadd.xlane.f32.xlu0 %v1496
        %v1500 = vpop.xlane.xlu0 %1499
        %v1501 = vmul.f32 %v1495, %v1495
        %v1502 = vmul.f32 %v1496, %v1496
        %1503 = vadd.xlane.f32.xlu0 %v1501
        %v1504 = vpop.xlane.xlu0 %1503
        %1505 = vadd.xlane.f32.xlu0 %v1502
        %v1506 = vpop.xlane.xlu0 %1505
        %v1507 = vmul.f32 %v1498, 0.0078125
        %v1508 = vmul.f32 %v1500, 0.0078125
        %v1509 = vmul.f32 %v1504, 0.0078125
        %v1510 = vmul.f32 %v1506, 0.0078125
        %v1511 = vmul.f32 %v1507, %v1507
        %v1512 = vmul.f32 %v1508, %v1508
        %v1513 = vsub.f32 %v1509, %v1511
        %v1514 = vsub.f32 %v1510, %v1512
        %v1515 = vmax.f32 %v1513, 0.0
        %v1516 = vmax.f32 %v1514, 0.0
        %v1517 = vsub.f32 %v1495, %v1507
        %v1518 = vsub.f32 %v1496, %v1508
        %v1519 = vadd.f32 %v1515, 1e-12
        %v1520 = vadd.f32 %v1516, 1e-12
        %v1521 = vrsqrt.pop %v1519
        %v1522 = vrsqrt.pop %v1520
        %v1523 = vmul.f32 %v1517, %v1521
        %v1524 = vmul.f32 %v1518, %v1522
        %v1525 = vld [vmem:[%s5] sm:$0x1]
        %v1527 = vlaneseq
        %v1528 = vshrl.u32 %v1527, 7
        %v1529 = vsub.s32 0, %v1528
        %v1530 = vrot.slane %v1525, %v1529
        %v1532 = vmul.f32 %v1523, %v1530
        %v1533 = vmul.f32 %v1524, %v1530
        %v1534 = vld [vmem:[%s6] sm:$0x1]
        %v1536 = vlaneseq
        %v1537 = vshrl.u32 %v1536, 7
        %v1538 = vsub.s32 0, %v1537
        %v1539 = vrot.slane %v1534, %v1538
        %v1541 = vadd.f32 %v1532, %v1539
        %v1542 = vadd.f32 %v1533, %v1539
        %1543 = vst [vmem:[%s229] sm:$0xff] %v1541
        %1544 = vst [vmem:[%s229 + $0x8] sm:$0xff] %v1542
        %s1545 = sand.u32 %s147, 1
        %s1546 = scalar_lea.sflag [#allocation10], %s1545
        %s1547 = sand.u32 %s147, 1
        %s1548 = smul.addr %s1547, 16
        %s1549 = scalar_lea.vmem [#allocation11], %s1548
        // Predicated region
        $region713: #{tpu_custom_call.1} parent=35 // pred_check
          %p1550 = pneg %p157
        $region714: #{tpu_custom_call.1} parent=35 // pred_check_branch
          %1552 = sbr.rel (%p1550) target = $region716
        $region715: #{tpu_custom_call.1} parent=35 // pred_region
          %s1553 = smul.u32 2, %s41
          %s1555 = ssub.s32 256, 256
          %1556 = vsyncadd %s1546, %s1555
          %s1557 = smul.addr %s40, 2
          %s1558 = sadd.s32 %s1553, %s1557
          %s1559 = smul.addr %s1558, 128
          %s1560 = scalar_lea.hbm %s9, %s1559
          %s1561 = sshll.u32 %s1549, 4
          %s1562 = int_to_ptr.vmem [resolvable:$true] %s1561
          %1567 = dma.vmem_to_hbm [thread:$0]  %s1562, 256, %s1560, %s1546, 128, 128, 8
        $region716: #{tpu_custom_call.1} parent=35 // pred_fallthru
          _
      $region36: #{tpu_custom_call.1} parent=5 // pred_fallthru
        _
      %p1568 = scmp.le.s32.totalorder 2, %s31
      // Predicated region
      $region717: #{tpu_custom_call.1} parent=5 // pred_check
        %p1569 = pneg %p1568
      $region718: #{tpu_custom_call.1} parent=5 // pred_check_branch
        %1571 = sbr.rel (%p1569) target = $region720
      $region719: #{tpu_custom_call.1} parent=5 // pred_region
        %s1572 = ssub.s32 %s31, 2
        // Predicated region
        $region721: #{tpu_custom_call.1} parent=719 // pred_check
          %p1573 = pneg %p163
        $region722: #{tpu_custom_call.1} parent=719 // pred_check_branch
          %1575 = sbr.rel (%p1573) target = $region724
        $region723: #{tpu_custom_call.1} parent=719 // pred_region
          %s1576 = sand.u32 %s148, 1
          %s1577 = scalar_lea.sflag [#allocation10], %s1576
          %s1578 = sand.u32 %s148, 1
          %s1579 = smul.addr %s1578, 16
          %s1580 = scalar_lea.vmem [#allocation11], %s1579
          %1581 = dma.done %s1577, 256
        $region724: #{tpu_custom_call.1} parent=719 // pred_fallthru
          _
      $region720: #{tpu_custom_call.1} parent=5 // pred_fallthru
        _
    $region6: #{tpu_custom_call.1} parent=1 // loop_footer
      %s35 = sadd.s32 1, %s31
    $region7: #{tpu_custom_call.1} parent=1 // loop_footer_branch
      %30 = sbr.rel target = $region3
    $region8: #{tpu_custom_call.1} parent=1 // loop_exit
      _
    %1582 = vsyncpa [#allocation9], 1
    %s1583 = scalar_lea.sflag [#allocation9], 1
    %1584 = vsyncpa %s1583, 1
    %1585 = vsyncpa [#allocation10], 1
    %s1586 = scalar_lea.sflag [#allocation10], 1
    %1587 = vsyncpa %s1586, 1
  %1588 = vsyncmov [#allocation3]
  %s1589 = vpop.sfrf %1588
  %p1590 = scmp.eq.s32.totalorder %s1589, 0
  %p1591 = pneg %p1590
  %1593 = shalt.err (%p1591)
  %s1594 = scalar_lea.sflag [#allocation3], 1
  %1595 = vsyncmov %s1594
  %s1596 = vpop.sfrf %1595
  %p1597 = scmp.eq.s32.totalorder %s1596, 0
  %p1598 = pneg %p1597
  %1600 = shalt.err (%p1598)
  %s1601 = scalar_lea.sflag [#allocation3], 2
  %1602 = vsyncmov %s1601
  %s1603 = vpop.sfrf %1602
  %p1604 = scmp.eq.s32.totalorder %s1603, 0
  %p1605 = pneg %p1604
  %1607 = shalt.err (%p1605)
  %s1608 = scalar_lea.sflag [#allocation3], 3
  %1609 = vsyncmov %s1608
  %s1610 = vpop.sfrf %1609
  %p1611 = scmp.eq.s32.totalorder %s1610, 0
  %p1612 = pneg %p1611
  %1614 = shalt.err (%p1612)
  %s1615 = scalar_lea.sflag [#allocation3], 4
  %1616 = vsyncmov %s1615
  %s1617 = vpop.sfrf %1616
  %p1618 = scmp.eq.s32.totalorder %s1617, 0
  %p1619 = pneg %p1618
  %1621 = shalt.err (%p1619)
  %s1622 = scalar_lea.sflag [#allocation3], 5
  %1623 = vsyncmov %s1622
  %s1624 = vpop.sfrf %1623
  %p1625 = scmp.eq.s32.totalorder %s1624, 0
  %p1626 = pneg %p1625
  %1628 = shalt.err (%p1626)
  %s1629 = scalar_lea.sflag [#allocation3], 6
  %1630 = vsyncmov %s1629
  %s1631 = vpop.sfrf %1630
  %p1632 = scmp.eq.s32.totalorder %s1631, 0
  %p1633 = pneg %p1632
  %1635 = shalt.err (%p1633)
  %s1636 = scalar_lea.sflag [#allocation3], 7
  %1637 = vsyncmov %s1636
  %s1638 = vpop.sfrf %1637
  %p1639 = scmp.eq.s32.totalorder %s1638, 0
  %p1640 = pneg %p1639
  %1642 = shalt.err (%p1640)
  %s1643 = scalar_lea.sflag [#allocation3], 8
  %1644 = vsyncmov %s1643
  %s1645 = vpop.sfrf %1644
  %p1646 = scmp.eq.s32.totalorder %s1645, 0
  %p1647 = pneg %p1646
  %1649 = shalt.err (%p1647)
  %s1650 = scalar_lea.sflag [#allocation3], 9
  %1651 = vsyncmov %s1650
  %s1652 = vpop.sfrf %1651
  %p1653 = scmp.eq.s32.totalorder %s1652, 0
  %p1654 = pneg %p1653
  %1656 = shalt.err (%p1654)
  %s1657 = scalar_lea.sflag [#allocation3], 10
  %1658 = vsyncmov %s1657
  %s1659 = vpop.sfrf %1658
  %p1660 = scmp.eq.s32.totalorder %s1659, 0
  %p1661 = pneg %p1660
  %1663 = shalt.err (%p1661)
  %s1664 = scalar_lea.sflag [#allocation3], 11
  %1665 = vsyncmov %s1664
  %s1666 = vpop.sfrf %1665
  %p1667 = scmp.eq.s32.totalorder %s1666, 0
  %p1668 = pneg %p1667
  %1670 = shalt.err (%p1668)
  %s1671 = scalar_lea.sflag [#allocation3], 12
  %1672 = vsyncmov %s1671
  %s1673 = vpop.sfrf %1672
  %p1674 = scmp.eq.s32.totalorder %s1673, 0
  %p1675 = pneg %p1674
  %1677 = shalt.err (%p1675)
  %s1678 = scalar_lea.sflag [#allocation3], 13
  %1679 = vsyncmov %s1678
  %s1680 = vpop.sfrf %1679
  %p1681 = scmp.eq.s32.totalorder %s1680, 0
  %p1682 = pneg %p1681
  %1684 = shalt.err (%p1682)
  %s1685 = scalar_lea.sflag [#allocation3], 14
  %1686 = vsyncmov %s1685
  %s1687 = vpop.sfrf %1686
  %p1688 = scmp.eq.s32.totalorder %s1687, 0
  %p1689 = pneg %p1688
  %1691 = shalt.err (%p1689)
  %s1692 = scalar_lea.sflag [#allocation3], 15
  %1693 = vsyncmov %s1692
  %s1694 = vpop.sfrf %1693
  %p1695 = scmp.eq.s32.totalorder %s1694, 0
  %p1696 = pneg %p1695
  %1698 = shalt.err (%p1696)

</llo_original>
